<compile_context>
chip_gen: v6e
topology: v6e:2x2x1
jax: 0.10.0
libtpu: 0.0.40
codegen_flags: <defaults>
</compile_context>

<pallas_src>
import functools

import jax
import jax.numpy as jnp
from jax.experimental import pallas as pl
from jax.experimental.pallas import tpu as pltpu


def _layernorm_f32(v, g, b, eps=1e-5):
    mu = jnp.mean(v, axis=-1, keepdims=True)
    var = jnp.mean(jnp.square(v - mu), axis=-1, keepdims=True)
    return (v - mu) * jax.lax.rsqrt(var + eps) * g + b


def temporal_stack_kernel(
        x_ref,                       # (TB, L, D)  input block, fetched once per batch step
        inw_ref, inb_ref,            # in_proj  (D, 3D) bf16, (1, 3D) f32  [q-scale folded in]
        ow_ref, ob_ref,              # out_proj (D, D)  bf16, (1, D)  f32
        g1_ref, b1_ref,              # ln_1     (1, D), (1, D) f32
        g2_ref, b2_ref,              # ln_2     (1, D), (1, D) f32
        fcw_ref, fcb_ref,            # c_fc     (D, Hp) bf16, (1, Hp) f32  [hidden padded]
        pw_ref, pb_ref,              # c_proj   (Hp, D) bf16, (1, D)  f32
        o_ref,                       # (TB, L, D)  output block (resident across layer axis)
        acc_ref,                     # (TB*L, D) f32 scratch: activation resident across layers
        *, n_head):
    TB, L, D = x_ref.shape
    dh = D // n_head
    M = TB * L
    layer = pl.program_id(1)

    # Load the input activation into the resident f32 accumulator at layer 0.
    @pl.when(layer == 0)
    def _():
        acc_ref[...] = x_ref[...].reshape(M, D).astype(jnp.float32)

    x = acc_ref[...]                                     # (M, D) f32

    # ---------------- attention branch: x + MHA(ln_1(x)) ----------------
    ln1 = _layernorm_f32(x, g1_ref[...], b1_ref[...])
    qkv = jnp.dot(ln1.astype(jnp.bfloat16), inw_ref[...],
                  preferred_element_type=jnp.float32) + inb_ref[...]   # (M, 3D) f32
    qkv_bf = qkv.astype(jnp.bfloat16)                    # cast BEFORE any relayout

    def to_heads(t):                                     # (M, D) bf16 -> (TB*H, L, dh) bf16
        return (t.reshape(TB, L, n_head, dh)
                 .transpose(0, 2, 1, 3)
                 .reshape(TB * n_head, L, dh))

    qh = to_heads(qkv_bf[:, :D])                         # 1/sqrt(dh) already folded in
    kh = to_heads(qkv_bf[:, D:2 * D])
    vh = to_heads(qkv_bf[:, 2 * D:])

    # head-batched attention (single leading batch dim = TB*n_head), softmax in f32
    s = jnp.einsum("bqd,bkd->bqk", qh, kh,
                   preferred_element_type=jnp.float32)   # (TB*H, L, L)
    s = s - jnp.max(s, axis=-1, keepdims=True)
    p = jnp.exp(s)
    p = p * pl.reciprocal(jnp.sum(p, axis=-1, keepdims=True), approx=False)
    ctx = jnp.einsum("bqk,bkd->bqd", p.astype(jnp.bfloat16), vh,
                     preferred_element_type=jnp.float32)  # (TB*H, L, dh) f32
    ctx = (ctx.astype(jnp.bfloat16)                      # bf16 before the back-relayout
              .reshape(TB, n_head, L, dh)
              .transpose(0, 2, 1, 3)
              .reshape(M, D))

    attn_out = jnp.dot(ctx, ow_ref[...],
                       preferred_element_type=jnp.float32) + ob_ref[...]
    x = x + attn_out

    # ---------------- MLP branch: x + c_proj(QuickGELU(c_fc(ln_2(x)))) ----
    ln2 = _layernorm_f32(x, g2_ref[...], b2_ref[...])
    hdn = jnp.dot(ln2.astype(jnp.bfloat16), fcw_ref[...],
                  preferred_element_type=jnp.float32) + fcb_ref[...]    # (M, Hp) f32
    hdn = hdn * jax.nn.sigmoid(1.702 * hdn)              # QuickGELU (f32); 0 stays 0 on pad
    mlp_out = jnp.dot(hdn.astype(jnp.bfloat16), pw_ref[...],
                      preferred_element_type=jnp.float32) + pb_ref[...]
    x = x + mlp_out

    acc_ref[...] = x

    # Write the HBM output only after the last layer (output block is resident
    # across the layer axis, so this is the only write that lands in HBM).
    @pl.when(layer == pl.num_programs(1) - 1)
    def _():
        o_ref[...] = x.reshape(TB, L, D).astype(o_ref.dtype)


def _tpu_defaults():
    """Generation-aware VMEM limit and row target (best effort, safe fallbacks)."""
    vmem_cap = 64 * 1024 * 1024          # conservative fallback (v7x physical size)
    try:
        vmem_cap = int(pltpu.get_tpu_info().vmem_capacity_bytes)
    except Exception:
        pass
    kind = ""
    try:
        kind = jax.devices()[0].device_kind.lower()
    except Exception:
        pass
    is_v5e = ("v5" in kind) and (("lite" in kind) or ("5e" in kind))
    target_rows = 256 if is_v5e else 512
    # Leave headroom under physical VMEM (56 MiB on a 64 MiB part, 112 MiB on 128 MiB).
    vmem_limit = max(32 * 1024 * 1024, min((vmem_cap // 8) * 7, 112 * 1024 * 1024))
    return vmem_limit, target_rows


def _choose_batch_block(n, seq_len, d_model, hidden_p, target_rows, vmem_limit):
    """Largest TB dividing n with TB*seq_len near target_rows, >=2 grid steps,
    and a working set that fits comfortably in the scoped VMEM limit."""
    cap = n if n < 2 else max(1, n // 2)        # >=2 batch steps -> v7x 2 TCs can split
    want = max(1, min(cap, -(-target_rows // seq_len)))

    def act_bytes(tb):                           # rough f32 working set per grid step
        m = tb * seq_len
        return 4 * m * (3 * d_model) * 3 + 4 * m * hidden_p + 4 * m * d_model * 2

    while want > 1 and act_bytes(want) > vmem_limit // 3:
        want -= 1
    tb = want
    while n % tb != 0:
        tb -= 1
    return tb


def _prep_block_params(params, n_head, compute_dtype=jnp.bfloat16):
    """Transpose weights, cast matmul weights to bf16, fold q scale into in_proj,
    zero-pad the MLP hidden dim to a multiple of 128 lanes."""
    D = params["ln1_g"].shape[0]
    hidden = params["fc_w"].shape[0]
    hp = max(128, -(-hidden // 128) * 128)
    dh = D // n_head
    scale = 1.0 / float(dh) ** 0.5
    scale_vec = jnp.concatenate(
        [jnp.full((D,), scale, jnp.float32), jnp.ones((2 * D,), jnp.float32)])

    inw = ((params["in_proj_w"].astype(jnp.float32) * scale_vec[:, None]).T
           .astype(compute_dtype))                               # (D, 3D)
    inb = (params["in_proj_b"].astype(jnp.float32) * scale_vec).reshape(1, 3 * D)
    ow = params["out_proj_w"].T.astype(compute_dtype)            # (D, D)
    ob = params["out_proj_b"].astype(jnp.float32).reshape(1, D)
    g1 = params["ln1_g"].astype(jnp.float32).reshape(1, D)
    b1 = params["ln1_b"].astype(jnp.float32).reshape(1, D)
    g2 = params["ln2_g"].astype(jnp.float32).reshape(1, D)
    b2 = params["ln2_b"].astype(jnp.float32).reshape(1, D)
    fcw = (jnp.zeros((D, hp), jnp.float32)
           .at[:, :hidden].set(params["fc_w"].T.astype(jnp.float32))
           .astype(compute_dtype))                               # (D, Hp)
    fcb = (jnp.zeros((1, hp), jnp.float32)
           .at[:, :hidden].set(params["fc_b"].astype(jnp.float32).reshape(1, hidden)))
    pw = (jnp.zeros((hp, D), jnp.float32)
          .at[:hidden, :].set(params["proj_w"].T.astype(jnp.float32))
          .astype(compute_dtype))                                # (Hp, D)
    pb = params["proj_b"].astype(jnp.float32).reshape(1, D)
    return inw, inb, ow, ob, g1, b1, g2, b2, fcw, fcb, pw, pb


def temporal_modelling(x_lnd, layer_params, n_head, batch_block=None):
    """TemporalModelling forward. x_lnd: (seq, batch, d_model), like PyTorch."""
    L, N, D = x_lnd.shape
    layers = len(layer_params)
    x = jnp.transpose(x_lnd, (1, 0, 2))                   # (N, L, D), once

    # Stack prepped per-layer weights along a leading LAYERS axis.
    preps = [_prep_block_params(p, n_head) for p in layer_params]
    stacked = [jnp.stack(t, axis=0) for t in zip(*preps)]
    hp = stacked[9].shape[-1]                              # padded MLP hidden

    vmem_limit, target_rows = _tpu_defaults()
    TB = (_choose_batch_block(N, L, D, hp, target_rows, vmem_limit)
          if batch_block is None else batch_block)
    assert N % TB == 0

    kernel = functools.partial(temporal_stack_kernel, n_head=n_head)

    def wspec(shape):                                     # per-layer weight block
        return pl.BlockSpec((None,) + shape, lambda b, l: (l, 0, 0))

    weight_bytes = 2 * (4 * D * D + 2 * D * hp) + 4 * (8 * D + hp)   # per layer
    cost = pl.CostEstimate(
        flops=int(layers * (2 * N * L * (4 * D * D + 2 * D * hp) + 4 * N * L * L * D)),
        transcendentals=int(layers * (N * n_head * L * L + N * L * hp)),
        bytes_accessed=int((N // TB) * layers * weight_bytes
                           + 2 * N * L * D * x.dtype.itemsize),
    )

    out = pl.pallas_call(
        kernel,
        out_shape=jax.ShapeDtypeStruct((N, L, D), x.dtype),
        grid=(N // TB, layers),                           # layers innermost
        in_specs=[
            pl.BlockSpec((TB, L, D), lambda b, l: (b, 0, 0)),   # fetched once per b
            wspec((D, 3 * D)), wspec((1, 3 * D)),
            wspec((D, D)), wspec((1, D)),
            wspec((1, D)), wspec((1, D)),
            wspec((1, D)), wspec((1, D)),
            wspec((D, hp)), wspec((1, hp)),
            wspec((hp, D)), wspec((1, D)),
        ],
        out_specs=pl.BlockSpec((TB, L, D), lambda b, l: (b, 0, 0)),
        scratch_shapes=[pltpu.VMEM((TB * L, D), jnp.float32)],
        compiler_params=pltpu.CompilerParams(
            dimension_semantics=("parallel", "arbitrary"),
            vmem_limit_bytes=int(vmem_limit)),
        cost_estimate=cost,
    )(x, *stacked)
    return jnp.transpose(out, (1, 0, 2))                  # back to (L, N, D)


def reference_jax(x_lnd, layer_params, n_head):
    """Plain-JAX (f32) replica of the PyTorch forward, for correctness checks."""
    L, N, D = x_lnd.shape
    dh = D // n_head
    x = jnp.transpose(x_lnd, (1, 0, 2)).astype(jnp.float32)

    def ln(v, g, b):
        mu = jnp.mean(v, -1, keepdims=True)
        var = jnp.mean(jnp.square(v - mu), -1, keepdims=True)
        return (v - mu) * jax.lax.rsqrt(var + 1e-5) * g + b

    for params in layer_params:
        ln1 = ln(x, params["ln1_g"], params["ln1_b"])
        qkv = ln1 @ params["in_proj_w"].T + params["in_proj_b"]
        q, k, v = jnp.split(qkv, 3, axis=-1)
        q = q.reshape(N, L, n_head, dh) / dh ** 0.5
        k = k.reshape(N, L, n_head, dh)
        v = v.reshape(N, L, n_head, dh)
        s = jnp.einsum("nqhd,nkhd->nhqk", q, k)
        p = jax.nn.softmax(s, axis=-1)
        ctx = jnp.einsum("nhqk,nkhd->nqhd", p, v).reshape(N, L, D)
        attn = ctx @ params["out_proj_w"].T + params["out_proj_b"]
        x = x + attn
        ln2 = ln(x, params["ln2_g"], params["ln2_b"])
        h = ln2 @ params["fc_w"].T + params["fc_b"]
        h = h * jax.nn.sigmoid(1.702 * h)
        x = x + (h @ params["proj_w"].T + params["proj_b"])
    return jnp.transpose(x, (1, 0, 2)).astype(x_lnd.dtype)


def make_params(key, d_model, bottle_neck=4):
    hidden = int(d_model / bottle_neck)
    ks = jax.random.split(key, 8)
    s = 0.02
    return {
        "in_proj_w": s * jax.random.normal(ks[0], (3 * d_model, d_model), jnp.float32),
        "in_proj_b": s * jax.random.normal(ks[1], (3 * d_model,), jnp.float32),
        "out_proj_w": s * jax.random.normal(ks[2], (d_model, d_model), jnp.float32),
        "out_proj_b": s * jax.random.normal(ks[3], (d_model,), jnp.float32),
        "ln1_g": jnp.ones((d_model,), jnp.float32),
        "ln1_b": jnp.zeros((d_model,), jnp.float32),
        "ln2_g": jnp.ones((d_model,), jnp.float32),
        "ln2_b": jnp.zeros((d_model,), jnp.float32),
        "fc_w": s * jax.random.normal(ks[4], (hidden, d_model), jnp.float32),
        "fc_b": s * jax.random.normal(ks[5], (hidden,), jnp.float32),
        "proj_w": s * jax.random.normal(ks[6], (d_model, hidden), jnp.float32),
        "proj_b": s * jax.random.normal(ks[7], (d_model,), jnp.float32),
    }


if __name__ == "__main__":
    # seq (frames), batch, width (d_model), heads, layers, bottle_neck
    L, N, D, HEADS, LAYERS, BOTTLE = 8, 4, 128, 4, 2, 4
    key = jax.random.PRNGKey(0)
    kx, kp = jax.random.split(key)
    x = jax.random.normal(kx, (L, N, D), jnp.float32)     # (seq, batch, d_model)
    layer_params = [make_params(k, D, bottle_neck=BOTTLE)
                    for k in jax.random.split(kp, LAYERS)]

    fwd = jax.jit(functools.partial(temporal_modelling, n_head=HEADS))
    out = jax.block_until_ready(fwd(x, layer_params))

    ref = reference_jax(x, layer_params, HEADS)
    assert out.shape == (L, N, D)
    # bf16 matmuls vs. f32 reference -> relaxed tolerance
    assert jnp.allclose(out, ref, atol=2e-2, rtol=2e-2), "mismatch vs JAX reference"

    print("KERNEL_OK")
</pallas_src>

<mosaic_0001>
module attributes {stable_mosaic.version = 11 : i64} {
  func.func @temporal_stack_kernel(%arg0: i32, %arg1: i32, %arg2: memref<2x8x128xf32, #tpu.memory_space<vmem>>, %arg3: memref<1x128x384xbf16, #tpu.memory_space<vmem>>, %arg4: memref<1x1x384xf32, #tpu.memory_space<vmem>>, %arg5: memref<1x128x128xbf16, #tpu.memory_space<vmem>>, %arg6: memref<1x1x128xf32, #tpu.memory_space<vmem>>, %arg7: memref<1x1x128xf32, #tpu.memory_space<vmem>>, %arg8: memref<1x1x128xf32, #tpu.memory_space<vmem>>, %arg9: memref<1x1x128xf32, #tpu.memory_space<vmem>>, %arg10: memref<1x1x128xf32, #tpu.memory_space<vmem>>, %arg11: memref<1x128x128xbf16, #tpu.memory_space<vmem>>, %arg12: memref<1x1x128xf32, #tpu.memory_space<vmem>>, %arg13: memref<1x128x128xbf16, #tpu.memory_space<vmem>>, %arg14: memref<1x1x128xf32, #tpu.memory_space<vmem>>, %arg15: memref<2x8x128xf32, #tpu.memory_space<vmem>>, %arg16: memref<16x128xf32, #tpu.memory_space<vmem>>) attributes {dimension_semantics = [#tpu.dimension_semantics<parallel>, #tpu.dimension_semantics<arbitrary>], iteration_bounds = array<i64: 2, 2>, scalar_prefetch = 0 : i64, scratch_operands = 1 : i64, tpu.core_type = #tpu.core_type<tc>, window_params = [{transform_indices = @transform_0, window_bounds = array<i64: 2, 8, 128>}, {transform_indices = @transform_1, window_bounds = array<i64: 1, 128, 384>}, {transform_indices = @transform_2, window_bounds = array<i64: 1, 1, 384>}, {transform_indices = @transform_3, window_bounds = array<i64: 1, 128, 128>}, {transform_indices = @transform_4, window_bounds = array<i64: 1, 1, 128>}, {transform_indices = @transform_5, window_bounds = array<i64: 1, 1, 128>}, {transform_indices = @transform_6, window_bounds = array<i64: 1, 1, 128>}, {transform_indices = @transform_7, window_bounds = array<i64: 1, 1, 128>}, {transform_indices = @transform_8, window_bounds = array<i64: 1, 1, 128>}, {transform_indices = @transform_9, window_bounds = array<i64: 1, 128, 128>}, {transform_indices = @transform_10, window_bounds = array<i64: 1, 1, 128>}, {transform_indices = @transform_11, window_bounds = array<i64: 1, 128, 128>}, {transform_indices = @transform_12, window_bounds = array<i64: 1, 1, 128>}, {transform_indices = @transform_13, window_bounds = array<i64: 2, 8, 128>}]} {
    %c0_i32 = arith.constant 0 : i32
    %0 = arith.cmpi eq, %arg1, %c0_i32 : i32
    %1 = arith.extui %0 : i1 to i32
    %c0_i32_0 = arith.constant 0 : i32
    %2 = arith.cmpi ne, %1, %c0_i32_0 : i32
    scf.if %2 {
      %c0_60 = arith.constant 0 : index
      %c0_61 = arith.constant 0 : index
      %c0_62 = arith.constant 0 : index
      %131 = vector.load %arg2[%c0_60, %c0_61, %c0_62] : memref<2x8x128xf32, #tpu.memory_space<vmem>>, vector<2x8x128xf32>
      %132 = vector.shape_cast %131 : vector<2x8x128xf32> to vector<16x128xf32>
      %c0_63 = arith.constant 0 : index
      %c0_64 = arith.constant 0 : index
      %133 = vector.load %arg16[%c0_63, %c0_64] : memref<16x128xf32, #tpu.memory_space<vmem>>, vector<16x128xf32>
      tpu.vector_store %arg16[%c0_63, %c0_64], %132 {strides = array<i32>} : memref<16x128xf32, #tpu.memory_space<vmem>>, vector<16x128xf32>,
    } else {
    }
    %c0 = arith.constant 0 : index
    %c0_1 = arith.constant 0 : index
    %3 = vector.load %arg16[%c0, %c0_1] : memref<16x128xf32, #tpu.memory_space<vmem>>, vector<16x128xf32>
    %c0_2 = arith.constant 0 : index
    %c0_3 = arith.constant 0 : index
    %c0_4 = arith.constant 0 : index
    %4 = vector.load %arg7[%c0_2, %c0_3, %c0_4] : memref<1x1x128xf32, #tpu.memory_space<vmem>>, vector<1x1x128xf32>
    %5 = vector.shape_cast %4 : vector<1x1x128xf32> to vector<1x128xf32>
    %c0_5 = arith.constant 0 : index
    %c0_6 = arith.constant 0 : index
    %c0_7 = arith.constant 0 : index
    %6 = vector.load %arg8[%c0_5, %c0_6, %c0_7] : memref<1x1x128xf32, #tpu.memory_space<vmem>>, vector<1x1x128xf32>
    %7 = vector.shape_cast %6 : vector<1x1x128xf32> to vector<1x128xf32>
    %cst = arith.constant dense<0.000000e+00> : vector<16xf32>
    %8 = vector.multi_reduction <add>, %3, %cst [1] : vector<16x128xf32> to vector<16xf32>
    %9 = vector.shape_cast %8 : vector<16xf32> to vector<16x1xf32>
    %cst_8 = arith.constant 1.280000e+02 : f32
    %10 = vector.broadcast %cst_8 : f32 to vector<16x1xf32>
    %11 = arith.divf %9, %10 : vector<16x1xf32>
    %12 = vector.broadcast %11 : vector<16x1xf32> to vector<16x128xf32>
    %13 = arith.subf %3, %12 : vector<16x128xf32>
    %14 = arith.mulf %13, %13 : vector<16x128xf32>
    %cst_9 = arith.constant dense<0.000000e+00> : vector<16xf32>
    %15 = vector.multi_reduction <add>, %14, %cst_9 [1] : vector<16x128xf32> to vector<16xf32>
    %16 = vector.shape_cast %15 : vector<16xf32> to vector<16x1xf32>
    %cst_10 = arith.constant 1.280000e+02 : f32
    %17 = vector.broadcast %cst_10 : f32 to vector<16x1xf32>
    %18 = arith.divf %16, %17 : vector<16x1xf32>
    %19 = vector.broadcast %11 : vector<16x1xf32> to vector<16x128xf32>
    %20 = arith.subf %3, %19 : vector<16x128xf32>
    %cst_11 = arith.constant 9.99999974E-6 : f32
    %21 = vector.broadcast %cst_11 : f32 to vector<16x1xf32>
    %22 = arith.addf %18, %21 : vector<16x1xf32>
    %23 = math.rsqrt %22 : vector<16x1xf32>
    %24 = vector.broadcast %23 : vector<16x1xf32> to vector<16x128xf32>
    %25 = arith.mulf %20, %24 : vector<16x128xf32>
    %26 = vector.broadcast %5 : vector<1x128xf32> to vector<16x128xf32>
    %27 = arith.mulf %25, %26 : vector<16x128xf32>
    %28 = vector.broadcast %7 : vector<1x128xf32> to vector<16x128xf32>
    %29 = arith.addf %27, %28 : vector<16x128xf32>
    %30 = arith.truncf %29 : vector<16x128xf32> to vector<16x128xbf16>
    %c0_12 = arith.constant 0 : index
    %c0_13 = arith.constant 0 : index
    %c0_14 = arith.constant 0 : index
    %31 = vector.load %arg3[%c0_12, %c0_13, %c0_14] : memref<1x128x384xbf16, #tpu.memory_space<vmem>>, vector<1x128x384xbf16>
    %32 = vector.shape_cast %31 : vector<1x128x384xbf16> to vector<128x384xbf16>
    %cst_15 = arith.constant dense<0.000000e+00> : vector<16x384xf32>
    %33 = tpu.matmul %30, %32, %cst_15 {dimension_numbers = #tpu.dot_dimension_numbers<[1], [0], [0], [1], [0, 0, 1, 1], [], []>} : vector<16x128xbf16>, vector<128x384xbf16>, vector<16x384xf32> -> vector<16x384xf32>
    %c0_16 = arith.constant 0 : index
    %c0_17 = arith.constant 0 : index
    %c0_18 = arith.constant 0 : index
    %34 = vector.load %arg4[%c0_16, %c0_17, %c0_18] : memref<1x1x384xf32, #tpu.memory_space<vmem>>, vector<1x1x384xf32>
    %35 = vector.shape_cast %34 : vector<1x1x384xf32> to vector<1x384xf32>
    %36 = vector.broadcast %35 : vector<1x384xf32> to vector<16x384xf32>
    %37 = arith.addf %33, %36 : vector<16x384xf32>
    %38 = arith.truncf %37 : vector<16x384xf32> to vector<16x384xbf16>
    %39 = vector.extract_strided_slice %38 {offsets = [0, 0], sizes = [16, 128], strides = [1, 1]} : vector<16x384xbf16> to vector<16x128xbf16>
    %40 = vector.shape_cast %39 : vector<16x128xbf16> to vector<2x8x4x32xbf16>
    %41 = tpu.transpose %40, [0, 2, 1, 3] : vector<2x8x4x32xbf16> -> vector<2x4x8x32xbf16>
    %42 = vector.shape_cast %41 : vector<2x4x8x32xbf16> to vector<8x8x32xbf16>
    %43 = vector.extract_strided_slice %38 {offsets = [0, 128], sizes = [16, 128], strides = [1, 1]} : vector<16x384xbf16> to vector<16x128xbf16>
    %44 = vector.shape_cast %43 : vector<16x128xbf16> to vector<2x8x4x32xbf16>
    %45 = tpu.transpose %44, [0, 2, 1, 3] : vector<2x8x4x32xbf16> -> vector<2x4x8x32xbf16>
    %46 = vector.shape_cast %45 : vector<2x4x8x32xbf16> to vector<8x8x32xbf16>
    %47 = vector.extract_strided_slice %38 {offsets = [0, 256], sizes = [16, 128], strides = [1, 1]} : vector<16x384xbf16> to vector<16x128xbf16>
    %48 = vector.shape_cast %47 : vector<16x128xbf16> to vector<2x8x4x32xbf16>
    %49 = tpu.transpose %48, [0, 2, 1, 3] : vector<2x8x4x32xbf16> -> vector<2x4x8x32xbf16>
    %50 = vector.shape_cast %49 : vector<2x4x8x32xbf16> to vector<8x8x32xbf16>
    "tpu.trace_start"() <{level = 10 : i32, message = "bqd,bkd->bqk"}> : () -> ()
    %cst_19 = arith.constant dense<0.000000e+00> : vector<8x8x8xf32>
    %51 = tpu.matmul %42, %46, %cst_19 {dimension_numbers = #tpu.dot_dimension_numbers<[2], [2], [1], [1], [0, 0, 0, 1, 1, 1], [0], [0]>} : vector<8x8x32xbf16>, vector<8x8x32xbf16>, vector<8x8x8xf32> -> vector<8x8x8xf32>
    "tpu.trace_stop"() : () -> ()
    %cst_20 = arith.constant dense<0xFF800000> : vector<8x8xf32>
    %52 = vector.multi_reduction <maximumf>, %51, %cst_20 [2] : vector<8x8x8xf32> to vector<8x8xf32>
    %53 = vector.shape_cast %52 : vector<8x8xf32> to vector<8x8x1xf32>
    %54 = vector.broadcast %53 : vector<8x8x1xf32> to vector<8x8x8xf32>
    %55 = arith.subf %51, %54 : vector<8x8x8xf32>
    %56 = math.exp %55 : vector<8x8x8xf32>
    %cst_21 = arith.constant dense<0.000000e+00> : vector<8x8xf32>
    %57 = vector.multi_reduction <add>, %56, %cst_21 [2] : vector<8x8x8xf32> to vector<8x8xf32>
    %58 = vector.shape_cast %57 : vector<8x8xf32> to vector<8x8x1xf32>
    %59 = tpu.reciprocal %58 : vector<8x8x1xf32> -> vector<8x8x1xf32>
    %60 = vector.broadcast %59 : vector<8x8x1xf32> to vector<8x8x8xf32>
    %61 = arith.mulf %56, %60 : vector<8x8x8xf32>
    %62 = arith.truncf %61 : vector<8x8x8xf32> to vector<8x8x8xbf16>
    "tpu.trace_start"() <{level = 10 : i32, message = "bqk,bkd->bqd"}> : () -> ()
    %cst_22 = arith.constant dense<0.000000e+00> : vector<8x8x32xf32>
    %63 = tpu.matmul %62, %50, %cst_22 {dimension_numbers = #tpu.dot_dimension_numbers<[2], [1], [1], [2], [0, 0, 0, 1, 1, 2], [0], [0]>} : vector<8x8x8xbf16>, vector<8x8x32xbf16>, vector<8x8x32xf32> -> vector<8x8x32xf32>
    "tpu.trace_stop"() : () -> ()
    %64 = arith.truncf %63 : vector<8x8x32xf32> to vector<8x8x32xbf16>
    %65 = vector.shape_cast %64 : vector<8x8x32xbf16> to vector<2x4x8x32xbf16>
    %66 = tpu.transpose %65, [0, 2, 1, 3] : vector<2x4x8x32xbf16> -> vector<2x8x4x32xbf16>
    %67 = vector.shape_cast %66 : vector<2x8x4x32xbf16> to vector<16x128xbf16>
    %c0_23 = arith.constant 0 : index
    %c0_24 = arith.constant 0 : index
    %c0_25 = arith.constant 0 : index
    %68 = vector.load %arg5[%c0_23, %c0_24, %c0_25] : memref<1x128x128xbf16, #tpu.memory_space<vmem>>, vector<1x128x128xbf16>
    %69 = vector.shape_cast %68 : vector<1x128x128xbf16> to vector<128x128xbf16>
    %cst_26 = arith.constant dense<0.000000e+00> : vector<16x128xf32>
    %70 = tpu.matmul %67, %69, %cst_26 {dimension_numbers = #tpu.dot_dimension_numbers<[1], [0], [0], [1], [0, 0, 1, 1], [], []>} : vector<16x128xbf16>, vector<128x128xbf16>, vector<16x128xf32> -> vector<16x128xf32>
    %c0_27 = arith.constant 0 : index
    %c0_28 = arith.constant 0 : index
    %c0_29 = arith.constant 0 : index
    %71 = vector.load %arg6[%c0_27, %c0_28, %c0_29] : memref<1x1x128xf32, #tpu.memory_space<vmem>>, vector<1x1x128xf32>
    %72 = vector.shape_cast %71 : vector<1x1x128xf32> to vector<1x128xf32>
    %73 = vector.broadcast %72 : vector<1x128xf32> to vector<16x128xf32>
    %74 = arith.addf %70, %73 : vector<16x128xf32>
    %75 = arith.addf %3, %74 : vector<16x128xf32>
    %c0_30 = arith.constant 0 : index
    %c0_31 = arith.constant 0 : index
    %c0_32 = arith.constant 0 : index
    %76 = vector.load %arg9[%c0_30, %c0_31, %c0_32] : memref<1x1x128xf32, #tpu.memory_space<vmem>>, vector<1x1x128xf32>
    %77 = vector.shape_cast %76 : vector<1x1x128xf32> to vector<1x128xf32>
    %c0_33 = arith.constant 0 : index
    %c0_34 = arith.constant 0 : index
    %c0_35 = arith.constant 0 : index
    %78 = vector.load %arg10[%c0_33, %c0_34, %c0_35] : memref<1x1x128xf32, #tpu.memory_space<vmem>>, vector<1x1x128xf32>
    %79 = vector.shape_cast %78 : vector<1x1x128xf32> to vector<1x128xf32>
    %cst_36 = arith.constant dense<0.000000e+00> : vector<16xf32>
    %80 = vector.multi_reduction <add>, %75, %cst_36 [1] : vector<16x128xf32> to vector<16xf32>
    %81 = vector.shape_cast %80 : vector<16xf32> to vector<16x1xf32>
    %cst_37 = arith.constant 1.280000e+02 : f32
    %82 = vector.broadcast %cst_37 : f32 to vector<16x1xf32>
    %83 = arith.divf %81, %82 : vector<16x1xf32>
    %84 = vector.broadcast %83 : vector<16x1xf32> to vector<16x128xf32>
    %85 = arith.subf %75, %84 : vector<16x128xf32>
    %86 = arith.mulf %85, %85 : vector<16x128xf32>
    %cst_38 = arith.constant dense<0.000000e+00> : vector<16xf32>
    %87 = vector.multi_reduction <add>, %86, %cst_38 [1] : vector<16x128xf32> to vector<16xf32>
    %88 = vector.shape_cast %87 : vector<16xf32> to vector<16x1xf32>
    %cst_39 = arith.constant 1.280000e+02 : f32
    %89 = vector.broadcast %cst_39 : f32 to vector<16x1xf32>
    %90 = arith.divf %88, %89 : vector<16x1xf32>
    %91 = vector.broadcast %83 : vector<16x1xf32> to vector<16x128xf32>
    %92 = arith.subf %75, %91 : vector<16x128xf32>
    %cst_40 = arith.constant 9.99999974E-6 : f32
    %93 = vector.broadcast %cst_40 : f32 to vector<16x1xf32>
    %94 = arith.addf %90, %93 : vector<16x1xf32>
    %95 = math.rsqrt %94 : vector<16x1xf32>
    %96 = vector.broadcast %95 : vector<16x1xf32> to vector<16x128xf32>
    %97 = arith.mulf %92, %96 : vector<16x128xf32>
    %98 = vector.broadcast %77 : vector<1x128xf32> to vector<16x128xf32>
    %99 = arith.mulf %97, %98 : vector<16x128xf32>
    %100 = vector.broadcast %79 : vector<1x128xf32> to vector<16x128xf32>
    %101 = arith.addf %99, %100 : vector<16x128xf32>
    %102 = arith.truncf %101 : vector<16x128xf32> to vector<16x128xbf16>
    %c0_41 = arith.constant 0 : index
    %c0_42 = arith.constant 0 : index
    %c0_43 = arith.constant 0 : index
    %103 = vector.load %arg11[%c0_41, %c0_42, %c0_43] : memref<1x128x128xbf16, #tpu.memory_space<vmem>>, vector<1x128x128xbf16>
    %104 = vector.shape_cast %103 : vector<1x128x128xbf16> to vector<128x128xbf16>
    %cst_44 = arith.constant dense<0.000000e+00> : vector<16x128xf32>
    %105 = tpu.matmul %102, %104, %cst_44 {dimension_numbers = #tpu.dot_dimension_numbers<[1], [0], [0], [1], [0, 0, 1, 1], [], []>} : vector<16x128xbf16>, vector<128x128xbf16>, vector<16x128xf32> -> vector<16x128xf32>
    %c0_45 = arith.constant 0 : index
    %c0_46 = arith.constant 0 : index
    %c0_47 = arith.constant 0 : index
    %106 = vector.load %arg12[%c0_45, %c0_46, %c0_47] : memref<1x1x128xf32, #tpu.memory_space<vmem>>, vector<1x1x128xf32>
    %107 = vector.shape_cast %106 : vector<1x1x128xf32> to vector<1x128xf32>
    %108 = vector.broadcast %107 : vector<1x128xf32> to vector<16x128xf32>
    %109 = arith.addf %105, %108 : vector<16x128xf32>
    %cst_48 = arith.constant 1.702000e+00 : f32
    %110 = vector.broadcast %cst_48 : f32 to vector<16x128xf32>
    %111 = arith.mulf %110, %109 : vector<16x128xf32>
    %112 = arith.negf %111 : vector<16x128xf32>
    %113 = math.exp %112 : vector<16x128xf32>
    %cst_49 = arith.constant 1.000000e+00 : f32
    %114 = vector.broadcast %cst_49 : f32 to vector<16x128xf32>
    %115 = arith.addf %114, %113 : vector<16x128xf32>
    %116 = arith.divf %114, %115 : vector<16x128xf32>
    %117 = arith.mulf %109, %116 : vector<16x128xf32>
    %118 = arith.truncf %117 : vector<16x128xf32> to vector<16x128xbf16>
    %c0_50 = arith.constant 0 : index
    %c0_51 = arith.constant 0 : index
    %c0_52 = arith.constant 0 : index
    %119 = vector.load %arg13[%c0_50, %c0_51, %c0_52] : memref<1x128x128xbf16, #tpu.memory_space<vmem>>, vector<1x128x128xbf16>
    %120 = vector.shape_cast %119 : vector<1x128x128xbf16> to vector<128x128xbf16>
    %cst_53 = arith.constant dense<0.000000e+00> : vector<16x128xf32>
    %121 = tpu.matmul %118, %120, %cst_53 {dimension_numbers = #tpu.dot_dimension_numbers<[1], [0], [0], [1], [0, 0, 1, 1], [], []>} : vector<16x128xbf16>, vector<128x128xbf16>, vector<16x128xf32> -> vector<16x128xf32>
    %c0_54 = arith.constant 0 : index
    %c0_55 = arith.constant 0 : index
    %c0_56 = arith.constant 0 : index
    %122 = vector.load %arg14[%c0_54, %c0_55, %c0_56] : memref<1x1x128xf32, #tpu.memory_space<vmem>>, vector<1x1x128xf32>
    %123 = vector.shape_cast %122 : vector<1x1x128xf32> to vector<1x128xf32>
    %124 = vector.broadcast %123 : vector<1x128xf32> to vector<16x128xf32>
    %125 = arith.addf %121, %124 : vector<16x128xf32>
    %126 = arith.addf %75, %125 : vector<16x128xf32>
    %c0_57 = arith.constant 0 : index
    %c0_58 = arith.constant 0 : index
    %127 = vector.load %arg16[%c0_57, %c0_58] : memref<16x128xf32, #tpu.memory_space<vmem>>, vector<16x128xf32>
    tpu.vector_store %arg16[%c0_57, %c0_58], %126 {strides = array<i32>} : memref<16x128xf32, #tpu.memory_space<vmem>>, vector<16x128xf32>,
    %c1_i32 = arith.constant 1 : i32
    %128 = arith.cmpi eq, %arg1, %c1_i32 : i32
    %129 = arith.extui %128 : i1 to i32
    %c0_i32_59 = arith.constant 0 : i32
    %130 = arith.cmpi ne, %129, %c0_i32_59 : i32
    scf.if %130 {
      %131 = vector.shape_cast %126 : vector<16x128xf32> to vector<2x8x128xf32>
      %c0_60 = arith.constant 0 : index
      %c0_61 = arith.constant 0 : index
      %c0_62 = arith.constant 0 : index
      %132 = vector.load %arg15[%c0_60, %c0_61, %c0_62] : memref<2x8x128xf32, #tpu.memory_space<vmem>>, vector<2x8x128xf32>
      tpu.vector_store %arg15[%c0_60, %c0_61, %c0_62], %131 {strides = array<i32>} : memref<2x8x128xf32, #tpu.memory_space<vmem>>, vector<2x8x128xf32>,
    } else {
    }
    return
  }
  func.func @transform_0(%arg0: i32, %arg1: i32) -> (i32, i32, i32) {
    %c0_i32 = arith.constant 0 : i32
    %c0_i32_0 = arith.constant 0 : i32
    %c0_i32_1 = arith.constant 0 : i32
    return %arg0, %c0_i32, %c0_i32_0 : i32, i32, i32
  }
  func.func @transform_1(%arg0: i32, %arg1: i32) -> (i32, i32, i32) {
    %c0_i32 = arith.constant 0 : i32
    %c0_i32_0 = arith.constant 0 : i32
    %c0_i32_1 = arith.constant 0 : i32
    return %arg1, %c0_i32, %c0_i32_0 : i32, i32, i32
  }
  func.func @transform_2(%arg0: i32, %arg1: i32) -> (i32, i32, i32) {
    %c0_i32 = arith.constant 0 : i32
    %c0_i32_0 = arith.constant 0 : i32
    %c0_i32_1 = arith.constant 0 : i32
    return %arg1, %c0_i32, %c0_i32_0 : i32, i32, i32
  }
  func.func @transform_3(%arg0: i32, %arg1: i32) -> (i32, i32, i32) {
    %c0_i32 = arith.constant 0 : i32
    %c0_i32_0 = arith.constant 0 : i32
    %c0_i32_1 = arith.constant 0 : i32
    return %arg1, %c0_i32, %c0_i32_0 : i32, i32, i32
  }
  func.func @transform_4(%arg0: i32, %arg1: i32) -> (i32, i32, i32) {
    %c0_i32 = arith.constant 0 : i32
    %c0_i32_0 = arith.constant 0 : i32
    %c0_i32_1 = arith.constant 0 : i32
    return %arg1, %c0_i32, %c0_i32_0 : i32, i32, i32
  }
  func.func @transform_5(%arg0: i32, %arg1: i32) -> (i32, i32, i32) {
    %c0_i32 = arith.constant 0 : i32
    %c0_i32_0 = arith.constant 0 : i32
    %c0_i32_1 = arith.constant 0 : i32
    return %arg1, %c0_i32, %c0_i32_0 : i32, i32, i32
  }
  func.func @transform_6(%arg0: i32, %arg1: i32) -> (i32, i32, i32) {
    %c0_i32 = arith.constant 0 : i32
    %c0_i32_0 = arith.constant 0 : i32
    %c0_i32_1 = arith.constant 0 : i32
    return %arg1, %c0_i32, %c0_i32_0 : i32, i32, i32
  }
  func.func @transform_7(%arg0: i32, %arg1: i32) -> (i32, i32, i32) {
    %c0_i32 = arith.constant 0 : i32
    %c0_i32_0 = arith.constant 0 : i32
    %c0_i32_1 = arith.constant 0 : i32
    return %arg1, %c0_i32, %c0_i32_0 : i32, i32, i32
  }
  func.func @transform_8(%arg0: i32, %arg1: i32) -> (i32, i32, i32) {
    %c0_i32 = arith.constant 0 : i32
    %c0_i32_0 = arith.constant 0 : i32
    %c0_i32_1 = arith.constant 0 : i32
    return %arg1, %c0_i32, %c0_i32_0 : i32, i32, i32
  }
  func.func @transform_9(%arg0: i32, %arg1: i32) -> (i32, i32, i32) {
    %c0_i32 = arith.constant 0 : i32
    %c0_i32_0 = arith.constant 0 : i32
    %c0_i32_1 = arith.constant 0 : i32
    return %arg1, %c0_i32, %c0_i32_0 : i32, i32, i32
  }
  func.func @transform_10(%arg0: i32, %arg1: i32) -> (i32, i32, i32) {
    %c0_i32 = arith.constant 0 : i32
    %c0_i32_0 = arith.constant 0 : i32
    %c0_i32_1 = arith.constant 0 : i32
    return %arg1, %c0_i32, %c0_i32_0 : i32, i32, i32
  }
  func.func @transform_11(%arg0: i32, %arg1: i32) -> (i32, i32, i32) {
    %c0_i32 = arith.constant 0 : i32
    %c0_i32_0 = arith.constant 0 : i32
    %c0_i32_1 = arith.constant 0 : i32
    return %arg1, %c0_i32, %c0_i32_0 : i32, i32, i32
  }
  func.func @transform_12(%arg0: i32, %arg1: i32) -> (i32, i32, i32) {
    %c0_i32 = arith.constant 0 : i32
    %c0_i32_0 = arith.constant 0 : i32
    %c0_i32_1 = arith.constant 0 : i32
    return %arg1, %c0_i32, %c0_i32_0 : i32, i32, i32
  }
  func.func @transform_13(%arg0: i32, %arg1: i32) -> (i32, i32, i32) {
    %c0_i32 = arith.constant 0 : i32
    %c0_i32_0 = arith.constant 0 : i32
    %c0_i32_1 = arith.constant 0 : i32
    return %arg0, %c0_i32, %c0_i32_0 : i32, i32, i32
  }
}

</mosaic_0001>

<llo_original>
// kernel: temporal_modelling.1
$region0: #{temporal_modelling.1}
  #allocation0 [shape = 'u32[]', space=smem, size = 0x4, offset = 0x4, fixed_abs, tag = 'smem constant byte address 0x4 - core index']
  #allocation1 [shape = 'u32[144,128]{1,0:T(1,128)}', space=vmem, size = 0x12000, scoped, tag = 'internal scratch']
  #allocation2 [shape = 'f32[16,128]{1,0:T(8,128)}', space=vmem, size = 0x2000, scoped, tag = 'scratch operand']
  %s0 = inlined_call_operand.vmem [shape: f32[4,8,128], index: 0, kind: input, shape index: {}]
  %s1 = inlined_call_operand.vmem [shape: bf16[2,128,384], index: 1, kind: input, shape index: {}]
  %s2 = inlined_call_operand.vmem [shape: f32[2,1,384], index: 2, kind: input, shape index: {}]
  %s3 = inlined_call_operand.vmem [shape: bf16[2,128,128], index: 3, kind: input, shape index: {}]
  %s4 = inlined_call_operand.vmem [shape: f32[2,1,128], index: 4, kind: input, shape index: {}]
  %s5 = inlined_call_operand.vmem [shape: f32[2,1,128], index: 5, kind: input, shape index: {}]
  %s6 = inlined_call_operand.vmem [shape: f32[2,1,128], index: 6, kind: input, shape index: {}]
  %s7 = inlined_call_operand.vmem [shape: f32[2,1,128], index: 7, kind: input, shape index: {}]
  %s8 = inlined_call_operand.vmem [shape: f32[2,1,128], index: 8, kind: input, shape index: {}]
  %s9 = inlined_call_operand.vmem [shape: bf16[2,128,128], index: 9, kind: input, shape index: {}]
  %s10 = inlined_call_operand.vmem [shape: f32[2,1,128], index: 10, kind: input, shape index: {}]
  %s11 = inlined_call_operand.vmem [shape: bf16[2,128,128], index: 11, kind: input, shape index: {}]
  %s12 = inlined_call_operand.vmem [shape: f32[2,1,128], index: 12, kind: input, shape index: {}]
  %s13 = inlined_call_operand.vmem [shape: f32[4,8,128], index: 13, kind: output, shape index: {}]
  %s14 = sld [smem:[#allocation0]]
  $region93: #{temporal_modelling.1} parent=0
    _
  %s16 = ssub.s32 1, %s14
  %s17 = scalar_select 0, %s16, %s14
  loop: start=0, step=1, limit=6
  $region2: #{temporal_modelling.1} parent=0 // loop_pre_header
    _
  $region3: #{temporal_modelling.1} parent=0 // loop_header
    %s19 = sphi 0, %s23
    %p20 = scmp.ge.s32.totalorder %s19, 6
    %s26 = sphi 0, %s38
    %s27 = sphi 0, %s34
    %s28 = sphi 0, %s26
    %s29 = sphi 0, %s27
    %s30 = sphi 0, %s28
    %s31 = sphi 0, %s29
    %s41 = sphi 0, %s43
    %s44 = sphi 0, %s41
    %s45 = sphi 0, %s44
    %s61 = sphi 0, %s45
    %s67 = sphi 0, %s69
    %s70 = sphi 0, %s67
    %s71 = sphi 0, %s70
    %s87 = sphi 0, %s71
    %s93 = sphi 0, %s95
    %s96 = sphi 0, %s93
    %s97 = sphi 0, %s96
    %s113 = sphi 0, %s97
    %s119 = sphi 0, %s121
    %s122 = sphi 0, %s119
    %s123 = sphi 0, %s122
    %s139 = sphi 0, %s123
    %s145 = sphi 0, %s147
    %s148 = sphi 0, %s145
    %s149 = sphi 0, %s148
    %s165 = sphi 0, %s149
    %s171 = sphi 0, %s173
    %s174 = sphi 0, %s171
    %s175 = sphi 0, %s174
    %s191 = sphi 0, %s175
    %s197 = sphi 0, %s199
    %s200 = sphi 0, %s197
    %s201 = sphi 0, %s200
    %s217 = sphi 0, %s201
    %s223 = sphi 0, %s225
    %s226 = sphi 0, %s223
    %s227 = sphi 0, %s226
    %s243 = sphi 0, %s227
    %s249 = sphi 0, %s251
    %s252 = sphi 0, %s249
    %s253 = sphi 0, %s252
    %s269 = sphi 0, %s253
    %s275 = sphi 0, %s277
    %s278 = sphi 0, %s275
    %s279 = sphi 0, %s278
    %s295 = sphi 0, %s279
    %s301 = sphi 0, %s303
    %s304 = sphi 0, %s301
    %s305 = sphi 0, %s304
    %s321 = sphi 0, %s305
    %s327 = sphi 0, %s329
    %s330 = sphi 0, %s327
    %s331 = sphi 0, %s330
    %s347 = sphi 0, %s331
    %s353 = sphi 0, %s355
    %s356 = sphi 0, %s353
    %s357 = sphi 0, %s356
    %s373 = sphi 0, %s357
    %s379 = sphi 0, %s381
    %s382 = sphi 0, %s379
    %s383 = sphi 0, %s382
    %s399 = sphi 0, %s383
  $region4: #{temporal_modelling.1} parent=0 // loop_header_branch
    %22 = sbr.rel (%p20) target = $region8
  $region5: #{temporal_modelling.1} parent=0 // loop_body
    %s24 = ssub.s32 %s19, 1
    %s25 = ssub.s32 %s19, 2
    %s32 = sadd.s32 1, %s27
    %p33 = scmp.ge.s32.totalorder %s32, 2
    %s34 = scalar_select %p33, 0, %s32
    %s35 = sadd.s32 1, %s26
    %s36 = scalar_select %p33, %s35, %s26
    %p37 = scmp.ge.s32.totalorder %s36, 2
    %s38 = scalar_select %p37, 0, %s36
    %s39 = ssub.s32 %s26, %s38
    %p40 = scmp.eq.s32.totalorder %s39, 0
    %s42 = sadd.s32 %s41, 1
    %s43 = scalar_select %p40, %s41, %s42
    %p46 = pneg %p40
    %p47 = scmp.eq.s32.totalorder %s19, 3
    %p48 = por %p46, %p47
    %p49 = scmp.ne.s32.totalorder %s41, %s44
    %p50 = scmp.eq.s32.totalorder %s19, 0
    %p51 = por %p49, %p50
    %p52 = scmp.ne.s32.totalorder %s41, %s44
    %p53 = scmp.eq.s32.totalorder %s24, 3
    %p54 = por %p52, %p53
    %p55 = scmp.ne.s32.totalorder %s44, %s45
    %p56 = scmp.eq.s32.totalorder %s24, 0
    %p57 = por %p55, %p56
    %p58 = scmp.ne.s32.totalorder %s44, %s45
    %p59 = scmp.eq.s32.totalorder %s25, 3
    %p60 = por %p58, %p59
    %p62 = scmp.ne.s32.totalorder %s45, %s61
    %p63 = scmp.eq.s32.totalorder %s25, 0
    %p64 = por %p62, %p63
    %s65 = ssub.s32 %s27, %s34
    %p66 = scmp.eq.s32.totalorder %s65, 0
    %s68 = sadd.s32 %s67, 1
    %s69 = scalar_select %p66, %s67, %s68
    %p72 = pneg %p66
    %p73 = scmp.eq.s32.totalorder %s19, 3
    %p74 = por %p72, %p73
    %p75 = scmp.ne.s32.totalorder %s67, %s70
    %p76 = scmp.eq.s32.totalorder %s19, 0
    %p77 = por %p75, %p76
    %p78 = scmp.ne.s32.totalorder %s67, %s70
    %p79 = scmp.eq.s32.totalorder %s24, 3
    %p80 = por %p78, %p79
    %p81 = scmp.ne.s32.totalorder %s70, %s71
    %p82 = scmp.eq.s32.totalorder %s24, 0
    %p83 = por %p81, %p82
    %p84 = scmp.ne.s32.totalorder %s70, %s71
    %p85 = scmp.eq.s32.totalorder %s25, 3
    %p86 = por %p84, %p85
    %p88 = scmp.ne.s32.totalorder %s71, %s87
    %p89 = scmp.eq.s32.totalorder %s25, 0
    %p90 = por %p88, %p89
    %s91 = ssub.s32 %s27, %s34
    %p92 = scmp.eq.s32.totalorder %s91, 0
    %s94 = sadd.s32 %s93, 1
    %s95 = scalar_select %p92, %s93, %s94
    %p98 = pneg %p92
    %p99 = scmp.eq.s32.totalorder %s19, 3
    %p100 = por %p98, %p99
    %p101 = scmp.ne.s32.totalorder %s93, %s96
    %p102 = scmp.eq.s32.totalorder %s19, 0
    %p103 = por %p101, %p102
    %p104 = scmp.ne.s32.totalorder %s93, %s96
    %p105 = scmp.eq.s32.totalorder %s24, 3
    %p106 = por %p104, %p105
    %p107 = scmp.ne.s32.totalorder %s96, %s97
    %p108 = scmp.eq.s32.totalorder %s24, 0
    %p109 = por %p107, %p108
    %p110 = scmp.ne.s32.totalorder %s96, %s97
    %p111 = scmp.eq.s32.totalorder %s25, 3
    %p112 = por %p110, %p111
    %p114 = scmp.ne.s32.totalorder %s97, %s113
    %p115 = scmp.eq.s32.totalorder %s25, 0
    %p116 = por %p114, %p115
    %s117 = ssub.s32 %s27, %s34
    %p118 = scmp.eq.s32.totalorder %s117, 0
    %s120 = sadd.s32 %s119, 1
    %s121 = scalar_select %p118, %s119, %s120
    %p124 = pneg %p118
    %p125 = scmp.eq.s32.totalorder %s19, 3
    %p126 = por %p124, %p125
    %p127 = scmp.ne.s32.totalorder %s119, %s122
    %p128 = scmp.eq.s32.totalorder %s19, 0
    %p129 = por %p127, %p128
    %p130 = scmp.ne.s32.totalorder %s119, %s122
    %p131 = scmp.eq.s32.totalorder %s24, 3
    %p132 = por %p130, %p131
    %p133 = scmp.ne.s32.totalorder %s122, %s123
    %p134 = scmp.eq.s32.totalorder %s24, 0
    %p135 = por %p133, %p134
    %p136 = scmp.ne.s32.totalorder %s122, %s123
    %p137 = scmp.eq.s32.totalorder %s25, 3
    %p138 = por %p136, %p137
    %p140 = scmp.ne.s32.totalorder %s123, %s139
    %p141 = scmp.eq.s32.totalorder %s25, 0
    %p142 = por %p140, %p141
    %s143 = ssub.s32 %s27, %s34
    %p144 = scmp.eq.s32.totalorder %s143, 0
    %s146 = sadd.s32 %s145, 1
    %s147 = scalar_select %p144, %s145, %s146
    %p150 = pneg %p144
    %p151 = scmp.eq.s32.totalorder %s19, 3
    %p152 = por %p150, %p151
    %p153 = scmp.ne.s32.totalorder %s145, %s148
    %p154 = scmp.eq.s32.totalorder %s19, 0
    %p155 = por %p153, %p154
    %p156 = scmp.ne.s32.totalorder %s145, %s148
    %p157 = scmp.eq.s32.totalorder %s24, 3
    %p158 = por %p156, %p157
    %p159 = scmp.ne.s32.totalorder %s148, %s149
    %p160 = scmp.eq.s32.totalorder %s24, 0
    %p161 = por %p159, %p160
    %p162 = scmp.ne.s32.totalorder %s148, %s149
    %p163 = scmp.eq.s32.totalorder %s25, 3
    %p164 = por %p162, %p163
    %p166 = scmp.ne.s32.totalorder %s149, %s165
    %p167 = scmp.eq.s32.totalorder %s25, 0
    %p168 = por %p166, %p167
    %s169 = ssub.s32 %s27, %s34
    %p170 = scmp.eq.s32.totalorder %s169, 0
    %s172 = sadd.s32 %s171, 1
    %s173 = scalar_select %p170, %s171, %s172
    %p176 = pneg %p170
    %p177 = scmp.eq.s32.totalorder %s19, 3
    %p178 = por %p176, %p177
    %p179 = scmp.ne.s32.totalorder %s171, %s174
    %p180 = scmp.eq.s32.totalorder %s19, 0
    %p181 = por %p179, %p180
    %p182 = scmp.ne.s32.totalorder %s171, %s174
    %p183 = scmp.eq.s32.totalorder %s24, 3
    %p184 = por %p182, %p183
    %p185 = scmp.ne.s32.totalorder %s174, %s175
    %p186 = scmp.eq.s32.totalorder %s24, 0
    %p187 = por %p185, %p186
    %p188 = scmp.ne.s32.totalorder %s174, %s175
    %p189 = scmp.eq.s32.totalorder %s25, 3
    %p190 = por %p188, %p189
    %p192 = scmp.ne.s32.totalorder %s175, %s191
    %p193 = scmp.eq.s32.totalorder %s25, 0
    %p194 = por %p192, %p193
    %s195 = ssub.s32 %s27, %s34
    %p196 = scmp.eq.s32.totalorder %s195, 0
    %s198 = sadd.s32 %s197, 1
    %s199 = scalar_select %p196, %s197, %s198
    %p202 = pneg %p196
    %p203 = scmp.eq.s32.totalorder %s19, 3
    %p204 = por %p202, %p203
    %p205 = scmp.ne.s32.totalorder %s197, %s200
    %p206 = scmp.eq.s32.totalorder %s19, 0
    %p207 = por %p205, %p206
    %p208 = scmp.ne.s32.totalorder %s197, %s200
    %p209 = scmp.eq.s32.totalorder %s24, 3
    %p210 = por %p208, %p209
    %p211 = scmp.ne.s32.totalorder %s200, %s201
    %p212 = scmp.eq.s32.totalorder %s24, 0
    %p213 = por %p211, %p212
    %p214 = scmp.ne.s32.totalorder %s200, %s201
    %p215 = scmp.eq.s32.totalorder %s25, 3
    %p216 = por %p214, %p215
    %p218 = scmp.ne.s32.totalorder %s201, %s217
    %p219 = scmp.eq.s32.totalorder %s25, 0
    %p220 = por %p218, %p219
    %s221 = ssub.s32 %s27, %s34
    %p222 = scmp.eq.s32.totalorder %s221, 0
    %s224 = sadd.s32 %s223, 1
    %s225 = scalar_select %p222, %s223, %s224
    %p228 = pneg %p222
    %p229 = scmp.eq.s32.totalorder %s19, 3
    %p230 = por %p228, %p229
    %p231 = scmp.ne.s32.totalorder %s223, %s226
    %p232 = scmp.eq.s32.totalorder %s19, 0
    %p233 = por %p231, %p232
    %p234 = scmp.ne.s32.totalorder %s223, %s226
    %p235 = scmp.eq.s32.totalorder %s24, 3
    %p236 = por %p234, %p235
    %p237 = scmp.ne.s32.totalorder %s226, %s227
    %p238 = scmp.eq.s32.totalorder %s24, 0
    %p239 = por %p237, %p238
    %p240 = scmp.ne.s32.totalorder %s226, %s227
    %p241 = scmp.eq.s32.totalorder %s25, 3
    %p242 = por %p240, %p241
    %p244 = scmp.ne.s32.totalorder %s227, %s243
    %p245 = scmp.eq.s32.totalorder %s25, 0
    %p246 = por %p244, %p245
    %s247 = ssub.s32 %s27, %s34
    %p248 = scmp.eq.s32.totalorder %s247, 0
    %s250 = sadd.s32 %s249, 1
    %s251 = scalar_select %p248, %s249, %s250
    %p254 = pneg %p248
    %p255 = scmp.eq.s32.totalorder %s19, 3
    %p256 = por %p254, %p255
    %p257 = scmp.ne.s32.totalorder %s249, %s252
    %p258 = scmp.eq.s32.totalorder %s19, 0
    %p259 = por %p257, %p258
    %p260 = scmp.ne.s32.totalorder %s249, %s252
    %p261 = scmp.eq.s32.totalorder %s24, 3
    %p262 = por %p260, %p261
    %p263 = scmp.ne.s32.totalorder %s252, %s253
    %p264 = scmp.eq.s32.totalorder %s24, 0
    %p265 = por %p263, %p264
    %p266 = scmp.ne.s32.totalorder %s252, %s253
    %p267 = scmp.eq.s32.totalorder %s25, 3
    %p268 = por %p266, %p267
    %p270 = scmp.ne.s32.totalorder %s253, %s269
    %p271 = scmp.eq.s32.totalorder %s25, 0
    %p272 = por %p270, %p271
    %s273 = ssub.s32 %s27, %s34
    %p274 = scmp.eq.s32.totalorder %s273, 0
    %s276 = sadd.s32 %s275, 1
    %s277 = scalar_select %p274, %s275, %s276
    %p280 = pneg %p274
    %p281 = scmp.eq.s32.totalorder %s19, 3
    %p282 = por %p280, %p281
    %p283 = scmp.ne.s32.totalorder %s275, %s278
    %p284 = scmp.eq.s32.totalorder %s19, 0
    %p285 = por %p283, %p284
    %p286 = scmp.ne.s32.totalorder %s275, %s278
    %p287 = scmp.eq.s32.totalorder %s24, 3
    %p288 = por %p286, %p287
    %p289 = scmp.ne.s32.totalorder %s278, %s279
    %p290 = scmp.eq.s32.totalorder %s24, 0
    %p291 = por %p289, %p290
    %p292 = scmp.ne.s32.totalorder %s278, %s279
    %p293 = scmp.eq.s32.totalorder %s25, 3
    %p294 = por %p292, %p293
    %p296 = scmp.ne.s32.totalorder %s279, %s295
    %p297 = scmp.eq.s32.totalorder %s25, 0
    %p298 = por %p296, %p297
    %s299 = ssub.s32 %s27, %s34
    %p300 = scmp.eq.s32.totalorder %s299, 0
    %s302 = sadd.s32 %s301, 1
    %s303 = scalar_select %p300, %s301, %s302
    %p306 = pneg %p300
    %p307 = scmp.eq.s32.totalorder %s19, 3
    %p308 = por %p306, %p307
    %p309 = scmp.ne.s32.totalorder %s301, %s304
    %p310 = scmp.eq.s32.totalorder %s19, 0
    %p311 = por %p309, %p310
    %p312 = scmp.ne.s32.totalorder %s301, %s304
    %p313 = scmp.eq.s32.totalorder %s24, 3
    %p314 = por %p312, %p313
    %p315 = scmp.ne.s32.totalorder %s304, %s305
    %p316 = scmp.eq.s32.totalorder %s24, 0
    %p317 = por %p315, %p316
    %p318 = scmp.ne.s32.totalorder %s304, %s305
    %p319 = scmp.eq.s32.totalorder %s25, 3
    %p320 = por %p318, %p319
    %p322 = scmp.ne.s32.totalorder %s305, %s321
    %p323 = scmp.eq.s32.totalorder %s25, 0
    %p324 = por %p322, %p323
    %s325 = ssub.s32 %s27, %s34
    %p326 = scmp.eq.s32.totalorder %s325, 0
    %s328 = sadd.s32 %s327, 1
    %s329 = scalar_select %p326, %s327, %s328
    %p332 = pneg %p326
    %p333 = scmp.eq.s32.totalorder %s19, 3
    %p334 = por %p332, %p333
    %p335 = scmp.ne.s32.totalorder %s327, %s330
    %p336 = scmp.eq.s32.totalorder %s19, 0
    %p337 = por %p335, %p336
    %p338 = scmp.ne.s32.totalorder %s327, %s330
    %p339 = scmp.eq.s32.totalorder %s24, 3
    %p340 = por %p338, %p339
    %p341 = scmp.ne.s32.totalorder %s330, %s331
    %p342 = scmp.eq.s32.totalorder %s24, 0
    %p343 = por %p341, %p342
    %p344 = scmp.ne.s32.totalorder %s330, %s331
    %p345 = scmp.eq.s32.totalorder %s25, 3
    %p346 = por %p344, %p345
    %p348 = scmp.ne.s32.totalorder %s331, %s347
    %p349 = scmp.eq.s32.totalorder %s25, 0
    %p350 = por %p348, %p349
    %s351 = ssub.s32 %s27, %s34
    %p352 = scmp.eq.s32.totalorder %s351, 0
    %s354 = sadd.s32 %s353, 1
    %s355 = scalar_select %p352, %s353, %s354
    %p358 = pneg %p352
    %p359 = scmp.eq.s32.totalorder %s19, 3
    %p360 = por %p358, %p359
    %p361 = scmp.ne.s32.totalorder %s353, %s356
    %p362 = scmp.eq.s32.totalorder %s19, 0
    %p363 = por %p361, %p362
    %p364 = scmp.ne.s32.totalorder %s353, %s356
    %p365 = scmp.eq.s32.totalorder %s24, 3
    %p366 = por %p364, %p365
    %p367 = scmp.ne.s32.totalorder %s356, %s357
    %p368 = scmp.eq.s32.totalorder %s24, 0
    %p369 = por %p367, %p368
    %p370 = scmp.ne.s32.totalorder %s356, %s357
    %p371 = scmp.eq.s32.totalorder %s25, 3
    %p372 = por %p370, %p371
    %p374 = scmp.ne.s32.totalorder %s357, %s373
    %p375 = scmp.eq.s32.totalorder %s25, 0
    %p376 = por %p374, %p375
    %s377 = ssub.s32 %s26, %s38
    %p378 = scmp.eq.s32.totalorder %s377, 0
    %s380 = sadd.s32 %s379, 1
    %s381 = scalar_select %p378, %s379, %s380
    %p384 = pneg %p378
    %p385 = scmp.eq.s32.totalorder %s19, 3
    %p386 = por %p384, %p385
    %p387 = scmp.ne.s32.totalorder %s379, %s382
    %p388 = scmp.eq.s32.totalorder %s19, 0
    %p389 = por %p387, %p388
    %p390 = scmp.ne.s32.totalorder %s379, %s382
    %p391 = scmp.eq.s32.totalorder %s24, 3
    %p392 = por %p390, %p391
    %p393 = scmp.ne.s32.totalorder %s382, %s383
    %p394 = scmp.eq.s32.totalorder %s24, 0
    %p395 = por %p393, %p394
    %p396 = scmp.ne.s32.totalorder %s382, %s383
    %p397 = scmp.eq.s32.totalorder %s25, 3
    %p398 = por %p396, %p397
    %p400 = scmp.ne.s32.totalorder %s383, %s399
    %p401 = scmp.eq.s32.totalorder %s25, 0
    %p402 = por %p400, %p401
    %p403 = scmp.le.s32.totalorder 1, %s19
    %p404 = scmp.lt.s32.totalorder %s19, 5
    %p405 = pnand %p403, %p404
    %p406 = pneg %p405
    // Predicated region
    $region9: #{temporal_modelling.1} parent=5 // pred_check
      _
    $region10: #{temporal_modelling.1} parent=5 // pred_check_branch
      %408 = sbr.rel (%p405) target = $region12
    $region11: #{temporal_modelling.1} parent=5 // pred_region
      %s409 = ssub.s32 %s19, 1
    $region12: #{temporal_modelling.1} parent=5 // pred_fallthru
      _
    %p410 = scmp.lt.s32.totalorder %s19, 4
    // Predicated region
    $region13: #{temporal_modelling.1} parent=5 // pred_check
      %p411 = pneg %p410
    $region14: #{temporal_modelling.1} parent=5 // pred_check_branch
      %413 = sbr.rel (%p411) target = $region16
    $region15: #{temporal_modelling.1} parent=5 // pred_region
      // Predicated region
      $region17: #{temporal_modelling.1} parent=15 // pred_check
        %p414 = pneg %p51
      $region18: #{temporal_modelling.1} parent=15 // pred_check_branch
        %416 = sbr.rel (%p414) target = $region20
      $region19: #{temporal_modelling.1} parent=15 // pred_region
        %s417 = smul.u32 2, %s26
        %p418 = scmp.lt.s32.totalorder %s417, 3
        %s419 = scalar_select %p418, %s417, 3
        %s420 = smul.addr %s419, 8
        %s421 = scalar_lea.vmem %s0, %s420
        %s422 = smul.u32 2, %s26
      $region20: #{temporal_modelling.1} parent=15 // pred_fallthru
        _
      // Predicated region
      $region21: #{temporal_modelling.1} parent=15 // pred_check
        %p423 = pneg %p77
      $region22: #{temporal_modelling.1} parent=15 // pred_check_branch
        %425 = sbr.rel (%p423) target = $region24
      $region23: #{temporal_modelling.1} parent=15 // pred_region
        %p426 = scmp.lt.s32.totalorder %s27, 1
        %s427 = scalar_select %p426, %s27, 1
        %s428 = smul.addr %s427, 48
        %s429 = smul.addr %s428, 4
        %s430 = scalar_lea.vmem %s1, %s429
      $region24: #{temporal_modelling.1} parent=15 // pred_fallthru
        _
      // Predicated region
      $region25: #{temporal_modelling.1} parent=15 // pred_check
        %p431 = pneg %p103
      $region26: #{temporal_modelling.1} parent=15 // pred_check_branch
        %433 = sbr.rel (%p431) target = $region28
      $region27: #{temporal_modelling.1} parent=15 // pred_region
        %p434 = scmp.lt.s32.totalorder %s27, 1
        %s435 = scalar_select %p434, %s27, 1
        %s436 = smul.addr %s435, 3
        %s437 = scalar_lea.vmem %s2, %s436
      $region28: #{temporal_modelling.1} parent=15 // pred_fallthru
        _
      // Predicated region
      $region29: #{temporal_modelling.1} parent=15 // pred_check
        %p438 = pneg %p129
      $region30: #{temporal_modelling.1} parent=15 // pred_check_branch
        %440 = sbr.rel (%p438) target = $region32
      $region31: #{temporal_modelling.1} parent=15 // pred_region
        %p441 = scmp.lt.s32.totalorder %s27, 1
        %s442 = scalar_select %p441, %s27, 1
        %s443 = smul.addr %s442, 16
        %s444 = smul.addr %s443, 4
        %s445 = scalar_lea.vmem %s3, %s444
      $region32: #{temporal_modelling.1} parent=15 // pred_fallthru
        _
      // Predicated region
      $region33: #{temporal_modelling.1} parent=15 // pred_check
        %p446 = pneg %p155
      $region34: #{temporal_modelling.1} parent=15 // pred_check_branch
        %448 = sbr.rel (%p446) target = $region36
      $region35: #{temporal_modelling.1} parent=15 // pred_region
        %p449 = scmp.lt.s32.totalorder %s27, 1
        %s450 = scalar_select %p449, %s27, 1
        %s451 = scalar_lea.vmem %s4, %s450
      $region36: #{temporal_modelling.1} parent=15 // pred_fallthru
        _
      // Predicated region
      $region37: #{temporal_modelling.1} parent=15 // pred_check
        %p452 = pneg %p181
      $region38: #{temporal_modelling.1} parent=15 // pred_check_branch
        %454 = sbr.rel (%p452) target = $region40
      $region39: #{temporal_modelling.1} parent=15 // pred_region
        %p455 = scmp.lt.s32.totalorder %s27, 1
        %s456 = scalar_select %p455, %s27, 1
        %s457 = scalar_lea.vmem %s5, %s456
      $region40: #{temporal_modelling.1} parent=15 // pred_fallthru
        _
      // Predicated region
      $region41: #{temporal_modelling.1} parent=15 // pred_check
        %p458 = pneg %p207
      $region42: #{temporal_modelling.1} parent=15 // pred_check_branch
        %460 = sbr.rel (%p458) target = $region44
      $region43: #{temporal_modelling.1} parent=15 // pred_region
        %p461 = scmp.lt.s32.totalorder %s27, 1
        %s462 = scalar_select %p461, %s27, 1
        %s463 = scalar_lea.vmem %s6, %s462
      $region44: #{temporal_modelling.1} parent=15 // pred_fallthru
        _
      // Predicated region
      $region45: #{temporal_modelling.1} parent=15 // pred_check
        %p464 = pneg %p233
      $region46: #{temporal_modelling.1} parent=15 // pred_check_branch
        %466 = sbr.rel (%p464) target = $region48
      $region47: #{temporal_modelling.1} parent=15 // pred_region
        %p467 = scmp.lt.s32.totalorder %s27, 1
        %s468 = scalar_select %p467, %s27, 1
        %s469 = scalar_lea.vmem %s7, %s468
      $region48: #{temporal_modelling.1} parent=15 // pred_fallthru
        _
      // Predicated region
      $region49: #{temporal_modelling.1} parent=15 // pred_check
        %p470 = pneg %p259
      $region50: #{temporal_modelling.1} parent=15 // pred_check_branch
        %472 = sbr.rel (%p470) target = $region52
      $region51: #{temporal_modelling.1} parent=15 // pred_region
        %p473 = scmp.lt.s32.totalorder %s27, 1
        %s474 = scalar_select %p473, %s27, 1
        %s475 = scalar_lea.vmem %s8, %s474
      $region52: #{temporal_modelling.1} parent=15 // pred_fallthru
        _
      // Predicated region
      $region53: #{temporal_modelling.1} parent=15 // pred_check
        %p476 = pneg %p285
      $region54: #{temporal_modelling.1} parent=15 // pred_check_branch
        %478 = sbr.rel (%p476) target = $region56
      $region55: #{temporal_modelling.1} parent=15 // pred_region
        %p479 = scmp.lt.s32.totalorder %s27, 1
        %s480 = scalar_select %p479, %s27, 1
        %s481 = smul.addr %s480, 16
        %s482 = smul.addr %s481, 4
        %s483 = scalar_lea.vmem %s9, %s482
      $region56: #{temporal_modelling.1} parent=15 // pred_fallthru
        _
      // Predicated region
      $region57: #{temporal_modelling.1} parent=15 // pred_check
        %p484 = pneg %p311
      $region58: #{temporal_modelling.1} parent=15 // pred_check_branch
        %486 = sbr.rel (%p484) target = $region60
      $region59: #{temporal_modelling.1} parent=15 // pred_region
        %p487 = scmp.lt.s32.totalorder %s27, 1
        %s488 = scalar_select %p487, %s27, 1
        %s489 = scalar_lea.vmem %s10, %s488
      $region60: #{temporal_modelling.1} parent=15 // pred_fallthru
        _
      // Predicated region
      $region61: #{temporal_modelling.1} parent=15 // pred_check
        %p490 = pneg %p337
      $region62: #{temporal_modelling.1} parent=15 // pred_check_branch
        %492 = sbr.rel (%p490) target = $region64
      $region63: #{temporal_modelling.1} parent=15 // pred_region
        %p493 = scmp.lt.s32.totalorder %s27, 1
        %s494 = scalar_select %p493, %s27, 1
        %s495 = smul.addr %s494, 16
        %s496 = smul.addr %s495, 4
        %s497 = scalar_lea.vmem %s11, %s496
      $region64: #{temporal_modelling.1} parent=15 // pred_fallthru
        _
      // Predicated region
      $region65: #{temporal_modelling.1} parent=15 // pred_check
        %p498 = pneg %p363
      $region66: #{temporal_modelling.1} parent=15 // pred_check_branch
        %500 = sbr.rel (%p498) target = $region68
      $region67: #{temporal_modelling.1} parent=15 // pred_region
        %p501 = scmp.lt.s32.totalorder %s27, 1
        %s502 = scalar_select %p501, %s27, 1
        %s503 = scalar_lea.vmem %s12, %s502
      $region68: #{temporal_modelling.1} parent=15 // pred_fallthru
        _
    $region16: #{temporal_modelling.1} parent=5 // pred_fallthru
      _
    %p504 = scmp.le.s32.totalorder 1, %s19
    %p505 = scmp.lt.s32.totalorder %s19, 5
    %p506 = pnand %p504, %p505
    %p507 = pneg %p506
    // Predicated region
    $region69: #{temporal_modelling.1} parent=5 // pred_check
      _
    $region70: #{temporal_modelling.1} parent=5 // pred_check_branch
      %509 = sbr.rel (%p506) target = $region72
    $region71: #{temporal_modelling.1} parent=5 // pred_region
      %s510 = ssub.s32 %s19, 1
      %s511 = smul.u32 2, %s28
      %p512 = scmp.lt.s32.totalorder %s511, 3
      %s513 = scalar_select %p512, %s511, 3
      %s514 = smul.addr %s513, 8
      %s515 = scalar_lea.vmem %s0, %s514
      %p516 = pneg %p57
      %p517 = pneg %p54
      %p518 = scmp.lt.s32.totalorder %s29, 1
      %s519 = scalar_select %p518, %s29, 1
      %s520 = smul.addr %s519, 48
      %s521 = smul.addr %s520, 4
      %s522 = scalar_lea.vmem %s1, %s521
      %p523 = pneg %p83
      %p524 = pneg %p80
      %p525 = scmp.lt.s32.totalorder %s29, 1
      %s526 = scalar_select %p525, %s29, 1
      %s527 = smul.addr %s526, 3
      %s528 = scalar_lea.vmem %s2, %s527
      %p529 = pneg %p109
      %p530 = pneg %p106
      %p531 = scmp.lt.s32.totalorder %s29, 1
      %s532 = scalar_select %p531, %s29, 1
      %s533 = smul.addr %s532, 16
      %s534 = smul.addr %s533, 4
      %s535 = scalar_lea.vmem %s3, %s534
      %p536 = pneg %p135
      %p537 = pneg %p132
      %p538 = scmp.lt.s32.totalorder %s29, 1
      %s539 = scalar_select %p538, %s29, 1
      %s540 = scalar_lea.vmem %s4, %s539
      %p541 = pneg %p161
      %p542 = pneg %p158
      %p543 = scmp.lt.s32.totalorder %s29, 1
      %s544 = scalar_select %p543, %s29, 1
      %s545 = scalar_lea.vmem %s5, %s544
      %p546 = pneg %p187
      %p547 = pneg %p184
      %p548 = scmp.lt.s32.totalorder %s29, 1
      %s549 = scalar_select %p548, %s29, 1
      %s550 = scalar_lea.vmem %s6, %s549
      %p551 = pneg %p213
      %p552 = pneg %p210
      %p553 = scmp.lt.s32.totalorder %s29, 1
      %s554 = scalar_select %p553, %s29, 1
      %s555 = scalar_lea.vmem %s7, %s554
      %p556 = pneg %p239
      %p557 = pneg %p236
      %p558 = scmp.lt.s32.totalorder %s29, 1
      %s559 = scalar_select %p558, %s29, 1
      %s560 = scalar_lea.vmem %s8, %s559
      %p561 = pneg %p265
      %p562 = pneg %p262
      %p563 = scmp.lt.s32.totalorder %s29, 1
      %s564 = scalar_select %p563, %s29, 1
      %s565 = smul.addr %s564, 16
      %s566 = smul.addr %s565, 4
      %s567 = scalar_lea.vmem %s9, %s566
      %p568 = pneg %p291
      %p569 = pneg %p288
      %p570 = scmp.lt.s32.totalorder %s29, 1
      %s571 = scalar_select %p570, %s29, 1
      %s572 = scalar_lea.vmem %s10, %s571
      %p573 = pneg %p317
      %p574 = pneg %p314
      %p575 = scmp.lt.s32.totalorder %s29, 1
      %s576 = scalar_select %p575, %s29, 1
      %s577 = smul.addr %s576, 16
      %s578 = smul.addr %s577, 4
      %s579 = scalar_lea.vmem %s11, %s578
      %p580 = pneg %p343
      %p581 = pneg %p340
      %p582 = scmp.lt.s32.totalorder %s29, 1
      %s583 = scalar_select %p582, %s29, 1
      %s584 = scalar_lea.vmem %s12, %s583
      %p585 = pneg %p369
      %p586 = pneg %p366
      %p587 = pneg %p395
      %p588 = pneg %p392
      %s589 = smul.u32 2, %s28
      %p590 = scmp.lt.s32.totalorder %s589, 3
      %s591 = scalar_select %p590, %s589, 3
      %s592 = smul.addr %s591, 8
      %s593 = scalar_lea.vmem %s13, %s592
      %s594 = smul.u32 2, %s28
      %p595 = scmp.lt.s32.totalorder %s594, 3
      %s596 = scalar_select %p595, %s594, 3
      %s597 = smul.addr %s596, 8
      %s598 = scalar_lea.vmem %s0, %s597
      %s599 = smul.u32 2, %s28
      %p600 = scmp.lt.s32.totalorder %s29, 1
      %s601 = scalar_select %p600, %s29, 1
      %s602 = smul.addr %s601, 48
      %s603 = smul.addr %s602, 4
      %s604 = scalar_lea.vmem %s1, %s603
      %p605 = scmp.lt.s32.totalorder %s29, 1
      %s606 = scalar_select %p605, %s29, 1
      %s607 = smul.addr %s606, 3
      %s608 = scalar_lea.vmem %s2, %s607
      %p609 = scmp.lt.s32.totalorder %s29, 1
      %s610 = scalar_select %p609, %s29, 1
      %s611 = smul.addr %s610, 16
      %s612 = smul.addr %s611, 4
      %s613 = scalar_lea.vmem %s3, %s612
      %p614 = scmp.lt.s32.totalorder %s29, 1
      %s615 = scalar_select %p614, %s29, 1
      %s616 = scalar_lea.vmem %s4, %s615
      %p617 = scmp.lt.s32.totalorder %s29, 1
      %s618 = scalar_select %p617, %s29, 1
      %s619 = scalar_lea.vmem %s5, %s618
      %p620 = scmp.lt.s32.totalorder %s29, 1
      %s621 = scalar_select %p620, %s29, 1
      %s622 = scalar_lea.vmem %s6, %s621
      %p623 = scmp.lt.s32.totalorder %s29, 1
      %s624 = scalar_select %p623, %s29, 1
      %s625 = scalar_lea.vmem %s7, %s624
      %p626 = scmp.lt.s32.totalorder %s29, 1
      %s627 = scalar_select %p626, %s29, 1
      %s628 = scalar_lea.vmem %s8, %s627
      %p629 = scmp.lt.s32.totalorder %s29, 1
      %s630 = scalar_select %p629, %s29, 1
      %s631 = smul.addr %s630, 16
      %s632 = smul.addr %s631, 4
      %s633 = scalar_lea.vmem %s9, %s632
      %p634 = scmp.lt.s32.totalorder %s29, 1
      %s635 = scalar_select %p634, %s29, 1
      %s636 = scalar_lea.vmem %s10, %s635
      %p637 = scmp.lt.s32.totalorder %s29, 1
      %s638 = scalar_select %p637, %s29, 1
      %s639 = smul.addr %s638, 16
      %s640 = smul.addr %s639, 4
      %s641 = scalar_lea.vmem %s11, %s640
      %p642 = scmp.lt.s32.totalorder %s29, 1
      %s643 = scalar_select %p642, %s29, 1
      %s644 = scalar_lea.vmem %s12, %s643
      %s645 = smul.u32 2, %s28
      %p646 = scmp.lt.s32.totalorder %s645, 3
      %s647 = scalar_select %p646, %s645, 3
      %s648 = smul.addr %s647, 8
      %s649 = scalar_lea.vmem %s13, %s648
      %s650 = smul.u32 2, %s28
      %p652 = scmp.eq.s32.totalorder %s29, 0
      // Predicated region
      $region73: #{temporal_modelling.1} parent=71 // pred_check
        %p653 = pneg %p652
      $region74: #{temporal_modelling.1} parent=71 // pred_check_branch
        %655 = sbr.rel (%p653) target = $region76
      $region75: #{temporal_modelling.1} parent=71 // pred_region
        %v656 = vld [vmem:[%s598] sm:$0xff]
        %v657 = vld [vmem:[%s598 + $0x8] sm:$0xff]
        %658 = vst [vmem:[#allocation2] sm:$0xff] %v656
        %659 = vst [vmem:[#allocation2 + $0x8] sm:$0xff] %v657
      $region76: #{temporal_modelling.1} parent=71 // pred_fallthru
        _
      %v660 = vld [vmem:[#allocation2] sm:$0xff]
      %v661 = vld [vmem:[#allocation2 + $0x8] sm:$0xff]
      %v662 = vld [vmem:[%s619] sm:$0x1]
      %v663 = vld [vmem:[%s622] sm:$0x1]
      %664 = vadd.xlane.f32.xlu0 %v660
      %v665 = vpop.xlane.xlu0 %664
      %666 = vadd.xlane.f32.xlu0 %v661
      %v667 = vpop.xlane.xlu0 %666
      %v668 = vrcp.pop 128.0
      %v669 = vmul.f32 %v665, %v668
      %v670 = vmul.f32 %v667, %v668
      %v671 = vsub.f32 %v660, %v669
      %v672 = vsub.f32 %v661, %v670
      %v673 = vmul.f32 %v671, %v671
      %v674 = vmul.f32 %v672, %v672
      %675 = vadd.xlane.f32.xlu0 %v673
      %v676 = vpop.xlane.xlu0 %675
      %677 = vadd.xlane.f32.xlu0 %v674
      %v678 = vpop.xlane.xlu0 %677
      %v679 = vmul.f32 %v676, %v668
      %v680 = vmul.f32 %v678, %v668
      %v681 = vadd.f32 %v679, 1e-05
      %v682 = vadd.f32 %v680, 1e-05
      %v683 = vrsqrt.pop %v681
      %v684 = vrsqrt.pop %v682
      %v685 = vmul.f32 %v671, %v683
      %v686 = vmul.f32 %v672, %v684
      %v688 = vlaneseq
      %v689 = vshrl.u32 %v688, 7
      %v690 = vsub.s32 0, %v689
      %v691 = vrot.slane %v662, %v690
      %v693 = vmul.f32 %v685, %v691
      %v694 = vmul.f32 %v686, %v691
      %v696 = vlaneseq
      %v697 = vshrl.u32 %v696, 7
      %v698 = vsub.s32 0, %v697
      %v699 = vrot.slane %v663, %v698
      %v701 = vadd.f32 %v693, %v699
      %v702 = vadd.f32 %v694, %v699
      %v703 = vpack.c.bf16 %v702, %v701
      %v704 = vld [vmem:[%s604] sm:$0xff]
      %v705 = vld [vmem:[%s604 + $0x8] sm:$0xf]
      %v706 = vld [vmem:[%s604 + $0xc] sm:$0xff]
      %v707 = vld [vmem:[%s604 + $0x14] sm:$0xf]
      %v708 = vld [vmem:[%s604 + $0x18] sm:$0xff]
      %v709 = vld [vmem:[%s604 + $0x20] sm:$0xf]
      %v710 = vld [vmem:[%s604 + $0x24] sm:$0xff]
      %v711 = vld [vmem:[%s604 + $0x2c] sm:$0xf]
      %v712 = vld [vmem:[%s604 + $0x30] sm:$0xff]
      %v713 = vld [vmem:[%s604 + $0x38] sm:$0xf]
      %v714 = vld [vmem:[%s604 + $0x3c] sm:$0xff]
      %v715 = vld [vmem:[%s604 + $0x44] sm:$0xf]
      %v716 = vld [vmem:[%s604 + $0x48] sm:$0xff]
      %v717 = vld [vmem:[%s604 + $0x50] sm:$0xf]
      %v718 = vld [vmem:[%s604 + $0x54] sm:$0xff]
      %v719 = vld [vmem:[%s604 + $0x5c] sm:$0xf]
      %v720 = vld [vmem:[%s604 + $0x60] sm:$0xff]
      %v721 = vld [vmem:[%s604 + $0x68] sm:$0xf]
      %v722 = vld [vmem:[%s604 + $0x6c] sm:$0xff]
      %v723 = vld [vmem:[%s604 + $0x74] sm:$0xf]
      %v724 = vld [vmem:[%s604 + $0x78] sm:$0xff]
      %v725 = vld [vmem:[%s604 + $0x80] sm:$0xf]
      %v726 = vld [vmem:[%s604 + $0x84] sm:$0xff]
      %v727 = vld [vmem:[%s604 + $0x8c] sm:$0xf]
      %v728 = vld [vmem:[%s604 + $0x90] sm:$0xff]
      %v729 = vld [vmem:[%s604 + $0x98] sm:$0xf]
      %v730 = vld [vmem:[%s604 + $0x9c] sm:$0xff]
      %v731 = vld [vmem:[%s604 + $0xa4] sm:$0xf]
      %v732 = vld [vmem:[%s604 + $0xa8] sm:$0xff]
      %v733 = vld [vmem:[%s604 + $0xb0] sm:$0xf]
      %v734 = vld [vmem:[%s604 + $0xb4] sm:$0xff]
      %v735 = vld [vmem:[%s604 + $0xbc] sm:$0xf]
      %v736 = vld [vmem:[%s608] sm:$0x7]
      %v738 = vlaneseq
      %v739 = vshrl.u32 %v738, 7
      %v740 = vsub.s32 0, %v739
      %v741 = vrot.slane %v736, %v740
      %v742 = vlaneseq
      %v743 = vshrl.u32 %v742, 7
      %v744 = vsub.s32 1, %v743
      %v745 = vrot.slane %v736, %v744
      %v746 = vlaneseq
      %v747 = vshrl.u32 %v746, 7
      %v748 = vsub.s32 2, %v747
      %v749 = vrot.slane %v736, %v748
      %v785 = vunpack.c.l.b16 %v704
      %v786 = vunpack.c.h.b16 %v704
      %v787 = vunpack.c.l.b16 %v705
      %v788 = vunpack.c.l.b16 %v706
      %v789 = vunpack.c.h.b16 %v706
      %v790 = vunpack.c.l.b16 %v707
      %v791 = vunpack.c.l.b16 %v708
      %v792 = vunpack.c.h.b16 %v708
      %v793 = vunpack.c.l.b16 %v709
      %v794 = vunpack.c.l.b16 %v710
      %v795 = vunpack.c.h.b16 %v710
      %v796 = vunpack.c.l.b16 %v711
      %v797 = vunpack.c.l.b16 %v712
      %v798 = vunpack.c.h.b16 %v712
      %v799 = vunpack.c.l.b16 %v713
      %v800 = vunpack.c.l.b16 %v714
      %v801 = vunpack.c.h.b16 %v714
      %v802 = vunpack.c.l.b16 %v715
      %v803 = vunpack.c.l.b16 %v716
      %v804 = vunpack.c.h.b16 %v716
      %v805 = vunpack.c.l.b16 %v717
      %v806 = vunpack.c.l.b16 %v718
      %v807 = vunpack.c.h.b16 %v718
      %v808 = vunpack.c.l.b16 %v719
      %v809 = vunpack.c.l.b16 %v720
      %v810 = vunpack.c.h.b16 %v720
      %v811 = vunpack.c.l.b16 %v721
      %v812 = vunpack.c.l.b16 %v722
      %v813 = vunpack.c.h.b16 %v722
      %v814 = vunpack.c.l.b16 %v723
      %v815 = vunpack.c.l.b16 %v724
      %v816 = vunpack.c.h.b16 %v724
      %v817 = vunpack.c.l.b16 %v725
      %v818 = vunpack.c.l.b16 %v726
      %v819 = vunpack.c.h.b16 %v726
      %v820 = vunpack.c.l.b16 %v727
      %v821 = vunpack.c.l.b16 %v728
      %v822 = vunpack.c.h.b16 %v728
      %v823 = vunpack.c.l.b16 %v729
      %v824 = vunpack.c.l.b16 %v730
      %v825 = vunpack.c.h.b16 %v730
      %v826 = vunpack.c.l.b16 %v731
      %v827 = vunpack.c.l.b16 %v732
      %v828 = vunpack.c.h.b16 %v732
      %v829 = vunpack.c.l.b16 %v733
      %v830 = vunpack.c.l.b16 %v734
      %v831 = vunpack.c.h.b16 %v734
      %v832 = vunpack.c.l.b16 %v735
      %v833 = vpack.c.b16 %v788, %v785
      %v834 = vpack.c.b16 %v789, %v786
      %v835 = vpack.c.b16 %v790, %v787
      %v836 = vpack.c.b16 %v794, %v791
      %v837 = vpack.c.b16 %v795, %v792
      %v838 = vpack.c.b16 %v796, %v793
      %v839 = vpack.c.b16 %v800, %v797
      %v840 = vpack.c.b16 %v801, %v798
      %v841 = vpack.c.b16 %v802, %v799
      %v842 = vpack.c.b16 %v806, %v803
      %v843 = vpack.c.b16 %v807, %v804
      %v844 = vpack.c.b16 %v808, %v805
      %v845 = vpack.c.b16 %v812, %v809
      %v846 = vpack.c.b16 %v813, %v810
      %v847 = vpack.c.b16 %v814, %v811
      %v848 = vpack.c.b16 %v818, %v815
      %v849 = vpack.c.b16 %v819, %v816
      %v850 = vpack.c.b16 %v820, %v817
      %v851 = vpack.c.b16 %v824, %v821
      %v852 = vpack.c.b16 %v825, %v822
      %v853 = vpack.c.b16 %v826, %v823
      %v854 = vpack.c.b16 %v830, %v827
      %v855 = vpack.c.b16 %v831, %v828
      %v856 = vpack.c.b16 %v832, %v829
      %881 = vmatprep.subr.bf16.mxu0 %v855
      %882 = vmatpush1.bf16.msra.mxu0 %v854
      %883 = vmatprep.subr.bf16.mxu0 %v852
      %884 = vmatpush1.bf16.msra.mxu0 %v851
      %885 = vmatprep.subr.bf16.mxu0 %v849
      %886 = vmatpush1.bf16.msra.mxu0 %v848
      %887 = vmatprep.subr.bf16.mxu0 %v846
      %888 = vmatpush1.bf16.msra.mxu0 %v845
      %889 = vmatprep.subr.bf16.mxu0 %v843
      %890 = vmatpush1.bf16.msra.mxu0 %v842
      %891 = vmatprep.subr.bf16.mxu0 %v840
      %892 = vmatpush1.bf16.msra.mxu0 %v839
      %893 = vmatprep.subr.bf16.mxu0 %v837
      %894 = vmatpush1.bf16.msra.mxu0 %v836
      %895 = vmatprep.subr.bf16.mxu0 %v834
      %896 = vmatpush1.bf16.msra.mxu0 %v833
      %897 = vmatprep.subr.bf16.mxu0 0
      %898 = vmatpush2.bf16.msra.mxu0 0
      %899 = vmatprep.subr.bf16.mxu0 0
      %900 = vmatpush2.bf16.msra.mxu0 0
      %901 = vmatprep.subr.bf16.mxu0 0
      %902 = vmatpush2.bf16.msra.mxu0 0
      %903 = vmatprep.subr.bf16.mxu0 0
      %904 = vmatpush2.bf16.msra.mxu0 0
      %905 = vmatprep.subr.bf16.mxu0 0
      %906 = vmatpush2.bf16.msra.mxu0 0
      %907 = vmatprep.subr.bf16.mxu0 0
      %908 = vmatpush2.bf16.msra.mxu0 0
      %909 = vmatprep.subr.bf16.mxu0 0
      %910 = vmatpush2.bf16.msra.mxu0 0
      %911 = vmatprep.subr.bf16.mxu0 0
      %912 = vmatpush2.bf16.msra.mxu0 0
      %913 = vmatprep.mubr.bf16.mxu0 0
      %914 = vmatmul.mubr.bf16.gmra.mxu0 %v703
      %v915 = vpop.f32.mrf.mxu0
      %v916 = vadd.f32 %v741, %v915
      %v917 = vpop.f32.mrf.mxu0
      %v918 = vadd.f32 %v745, %v917
      %v919 = vpop.f32.mrf.mxu0
      %v920 = vadd.f32 %v741, %v919
      %v921 = vpop.f32.mrf.mxu0
      %v922 = vadd.f32 %v745, %v921
      %923 = vdwg.mxu0
      %924 = vmatprep.subr.bf16.mxu0 0
      %925 = vmatpush1.bf16.msra.mxu0 %v856
      %926 = vmatprep.subr.bf16.mxu0 0
      %927 = vmatpush1.bf16.msra.mxu0 %v853
      %928 = vmatprep.subr.bf16.mxu0 0
      %929 = vmatpush1.bf16.msra.mxu0 %v850
      %930 = vmatprep.subr.bf16.mxu0 0
      %931 = vmatpush1.bf16.msra.mxu0 %v847
      %932 = vmatprep.subr.bf16.mxu0 0
      %933 = vmatpush1.bf16.msra.mxu0 %v844
      %934 = vmatprep.subr.bf16.mxu0 0
      %935 = vmatpush1.bf16.msra.mxu0 %v841
      %936 = vmatprep.subr.bf16.mxu0 0
      %937 = vmatpush1.bf16.msra.mxu0 %v838
      %938 = vmatprep.subr.bf16.mxu0 0
      %939 = vmatpush1.bf16.msra.mxu0 %v835
      %940 = vmatprep.subr.bf16.mxu0 0
      %941 = vmatpush2.bf16.msra.mxu0 0
      %942 = vmatprep.subr.bf16.mxu0 0
      %943 = vmatpush2.bf16.msra.mxu0 0
      %944 = vmatprep.subr.bf16.mxu0 0
      %945 = vmatpush2.bf16.msra.mxu0 0
      %946 = vmatprep.subr.bf16.mxu0 0
      %947 = vmatpush2.bf16.msra.mxu0 0
      %948 = vmatprep.subr.bf16.mxu0 0
      %949 = vmatpush2.bf16.msra.mxu0 0
      %950 = vmatprep.subr.bf16.mxu0 0
      %951 = vmatpush2.bf16.msra.mxu0 0
      %952 = vmatprep.subr.bf16.mxu0 0
      %953 = vmatpush2.bf16.msra.mxu0 0
      %954 = vmatprep.subr.bf16.mxu0 0
      %955 = vmatpush2.bf16.msra.mxu0 0
      %956 = vmatprep.mubr.bf16.mxu0 0
      %957 = vmatmul.mubr.bf16.gmra.mxu0 %v703
      %v958 = vpop.f32.mrf.mxu0
      %v959 = vadd.f32 %v749, %v958
      %v960 = vpop.f32.mrf.mxu0
      %v961 = vpop.f32.mrf.mxu0
      %v962 = vadd.f32 %v749, %v961
      %v963 = vpop.f32.mrf.mxu0
      %964 = vdwg.mxu0
      %v965 = vpack.c.bf16 %v920, %v916
      %v966 = vpack.c.bf16 %v922, %v918
      %v967 = vpack.c.bf16 %v962, %v959
      %969 = vrot.lane.b32.xlu0 %v965, 96
      %v970 = vpop.permute.xlu0 %969
      %971 = vrot.lane.b32.xlu0 %v965, 64
      %v972 = vpop.permute.xlu0 %971
      %973 = vrot.lane.b32.xlu0 %v965, 32
      %v974 = vpop.permute.xlu0 %973
      %v977 = vpack.i.b16 %v970, %v965
      %v979 = vshrl.u32 %v965, 16
      %v980 = vshrl.u32 %v970, 16
      %v981 = vpack.i.b16 %v980, %v979
      %v985 = vpack.i.b16 %v974, %v972
      %v987 = vshrl.u32 %v972, 16
      %v988 = vshrl.u32 %v974, 16
      %v989 = vpack.i.b16 %v988, %v987
      %v992 = vpack.i.b16 0, 0
      %v994 = vshrl.u32 0, 16
      %v995 = vpack.i.b16 %v994, %v994
      %v997 = vcombine.high %v977, %v992
      %v999 = vunpack.c.l.s4 1983009808
      %v1000 = vunpack.c.0.s8 %v999
      %v1001 = vlaneseq
      %v1002 = vshrl.u32 %v1001, 7
      %v1003 = vsub.s32 %v1000, %v1002
      %v1004 = vrot.slane %v977, %v1003
      %v1006 = vunpack.c.l.s4 1983009808
      %v1007 = vunpack.c.0.s8 %v1006
      %v1008 = vlaneseq
      %v1009 = vshrl.u32 %v1008, 7
      %v1010 = vsub.s32 %v1007, %v1009
      %v1011 = vrot.slane %v997, %v1010
      %v1012 = vcombine.high %v985, %v992
      %v1014 = vunpack.c.l.s4 1983009808
      %v1015 = vunpack.c.0.s8 %v1014
      %v1016 = vlaneseq
      %v1017 = vshrl.u32 %v1016, 7
      %v1018 = vsub.s32 %v1015, %v1017
      %v1019 = vrot.slane %v985, %v1018
      %v1021 = vunpack.c.l.s4 1983009808
      %v1022 = vunpack.c.0.s8 %v1021
      %v1023 = vlaneseq
      %v1024 = vshrl.u32 %v1023, 7
      %v1025 = vsub.s32 %v1022, %v1024
      %v1026 = vrot.slane %v1012, %v1025
      %v1027 = vcombine.low %v1004, %v1019
      %v1028 = vcombine.high %v1004, %v1019
      %v1030 = vunpack.c.l.s4 1934713408
      %v1031 = vunpack.c.0.s8 %v1030
      %v1032 = vlaneseq
      %v1033 = vshrl.u32 %v1032, 7
      %v1034 = vsub.s32 %v1031, %v1033
      %v1035 = vrot.slane %v1027, %v1034
      %v1037 = vunpack.c.l.s4 1934713408
      %v1038 = vunpack.c.0.s8 %v1037
      %v1039 = vlaneseq
      %v1040 = vshrl.u32 %v1039, 7
      %v1041 = vsub.s32 %v1038, %v1040
      %v1042 = vrot.slane %v1028, %v1041
      %v1043 = vcombine.low %v1011, %v1026
      %v1044 = vcombine.high %v1011, %v1026
      %v1046 = vunpack.c.l.s4 1934713408
      %v1047 = vunpack.c.0.s8 %v1046
      %v1048 = vlaneseq
      %v1049 = vshrl.u32 %v1048, 7
      %v1050 = vsub.s32 %v1047, %v1049
      %v1051 = vrot.slane %v1043, %v1050
      %v1053 = vunpack.c.l.s4 1934713408
      %v1054 = vunpack.c.0.s8 %v1053
      %v1055 = vlaneseq
      %v1056 = vshrl.u32 %v1055, 7
      %v1057 = vsub.s32 %v1054, %v1056
      %v1058 = vrot.slane %v1044, %v1057
      %v1059 = vcombine.high %v1035, 0
      %v1060 = vcombine.high %v1042, 0
      %v1061 = vcombine.high %v1051, 0
      %v1062 = vcombine.high %v1058, 0
      %v1063 = vcombine.high %v981, %v995
      %v1065 = vunpack.c.l.s4 1983009808
      %v1066 = vunpack.c.0.s8 %v1065
      %v1067 = vlaneseq
      %v1068 = vshrl.u32 %v1067, 7
      %v1069 = vsub.s32 %v1066, %v1068
      %v1070 = vrot.slane %v981, %v1069
      %v1072 = vunpack.c.l.s4 1983009808
      %v1073 = vunpack.c.0.s8 %v1072
      %v1074 = vlaneseq
      %v1075 = vshrl.u32 %v1074, 7
      %v1076 = vsub.s32 %v1073, %v1075
      %v1077 = vrot.slane %v1063, %v1076
      %v1078 = vcombine.high %v989, %v995
      %v1080 = vunpack.c.l.s4 1983009808
      %v1081 = vunpack.c.0.s8 %v1080
      %v1082 = vlaneseq
      %v1083 = vshrl.u32 %v1082, 7
      %v1084 = vsub.s32 %v1081, %v1083
      %v1085 = vrot.slane %v989, %v1084
      %v1087 = vunpack.c.l.s4 1983009808
      %v1088 = vunpack.c.0.s8 %v1087
      %v1089 = vlaneseq
      %v1090 = vshrl.u32 %v1089, 7
      %v1091 = vsub.s32 %v1088, %v1090
      %v1092 = vrot.slane %v1078, %v1091
      %v1093 = vcombine.low %v1070, %v1085
      %v1094 = vcombine.high %v1070, %v1085
      %v1096 = vunpack.c.l.s4 1934713408
      %v1097 = vunpack.c.0.s8 %v1096
      %v1098 = vlaneseq
      %v1099 = vshrl.u32 %v1098, 7
      %v1100 = vsub.s32 %v1097, %v1099
      %v1101 = vrot.slane %v1093, %v1100
      %v1103 = vunpack.c.l.s4 1934713408
      %v1104 = vunpack.c.0.s8 %v1103
      %v1105 = vlaneseq
      %v1106 = vshrl.u32 %v1105, 7
      %v1107 = vsub.s32 %v1104, %v1106
      %v1108 = vrot.slane %v1094, %v1107
      %v1109 = vcombine.low %v1077, %v1092
      %v1110 = vcombine.high %v1077, %v1092
      %v1112 = vunpack.c.l.s4 1934713408
      %v1113 = vunpack.c.0.s8 %v1112
      %v1114 = vlaneseq
      %v1115 = vshrl.u32 %v1114, 7
      %v1116 = vsub.s32 %v1113, %v1115
      %v1117 = vrot.slane %v1109, %v1116
      %v1119 = vunpack.c.l.s4 1934713408
      %v1120 = vunpack.c.0.s8 %v1119
      %v1121 = vlaneseq
      %v1122 = vshrl.u32 %v1121, 7
      %v1123 = vsub.s32 %v1120, %v1122
      %v1124 = vrot.slane %v1110, %v1123
      %v1125 = vcombine.high %v1101, 0
      %v1126 = vcombine.high %v1108, 0
      %v1127 = vcombine.high %v1117, 0
      %v1128 = vcombine.high %v1124, 0
      %v1129 = vcombine.low %v1035, %v1042
      %v1131 = vunpack.c.l.s4 1983009808
      %v1132 = vunpack.c.0.s8 %v1131
      %v1133 = vlaneseq
      %v1134 = vshrl.u32 %v1133, 7
      %v1135 = vsub.s32 %v1132, %v1134
      %v1136 = vrot.slane %v1129, %v1135
      %v1137 = vcombine.low %v1059, %v1060
      %v1139 = vunpack.c.l.s4 1983009808
      %v1140 = vunpack.c.0.s8 %v1139
      %v1141 = vlaneseq
      %v1142 = vshrl.u32 %v1141, 7
      %v1143 = vsub.s32 %v1140, %v1142
      %v1144 = vrot.slane %v1137, %v1143
      %v1145 = vcombine.low %v1136, %v1144
      %v1147 = vunpack.c.l.s4 1934713408
      %v1148 = vunpack.c.0.s8 %v1147
      %v1149 = vlaneseq
      %v1150 = vshrl.u32 %v1149, 7
      %v1151 = vsub.s32 %v1148, %v1150
      %v1152 = vrot.slane %v1145, %v1151
      %v1153 = vcombine.high %v1152, 0
      %v1154 = vcombine.low %v1101, %v1108
      %v1156 = vunpack.c.l.s4 1983009808
      %v1157 = vunpack.c.0.s8 %v1156
      %v1158 = vlaneseq
      %v1159 = vshrl.u32 %v1158, 7
      %v1160 = vsub.s32 %v1157, %v1159
      %v1161 = vrot.slane %v1154, %v1160
      %v1162 = vcombine.low %v1125, %v1126
      %v1164 = vunpack.c.l.s4 1983009808
      %v1165 = vunpack.c.0.s8 %v1164
      %v1166 = vlaneseq
      %v1167 = vshrl.u32 %v1166, 7
      %v1168 = vsub.s32 %v1165, %v1167
      %v1169 = vrot.slane %v1162, %v1168
      %v1170 = vcombine.low %v1161, %v1169
      %v1172 = vunpack.c.l.s4 1934713408
      %v1173 = vunpack.c.0.s8 %v1172
      %v1174 = vlaneseq
      %v1175 = vshrl.u32 %v1174, 7
      %v1176 = vsub.s32 %v1173, %v1175
      %v1177 = vrot.slane %v1170, %v1176
      %v1178 = vcombine.high %v1177, 0
      %v1179 = vcombine.low %v1051, %v1058
      %v1181 = vunpack.c.l.s4 1983009808
      %v1182 = vunpack.c.0.s8 %v1181
      %v1183 = vlaneseq
      %v1184 = vshrl.u32 %v1183, 7
      %v1185 = vsub.s32 %v1182, %v1184
      %v1186 = vrot.slane %v1179, %v1185
      %v1187 = vcombine.low %v1061, %v1062
      %v1189 = vunpack.c.l.s4 1983009808
      %v1190 = vunpack.c.0.s8 %v1189
      %v1191 = vlaneseq
      %v1192 = vshrl.u32 %v1191, 7
      %v1193 = vsub.s32 %v1190, %v1192
      %v1194 = vrot.slane %v1187, %v1193
      %v1195 = vcombine.low %v1186, %v1194
      %v1197 = vunpack.c.l.s4 1934713408
      %v1198 = vunpack.c.0.s8 %v1197
      %v1199 = vlaneseq
      %v1200 = vshrl.u32 %v1199, 7
      %v1201 = vsub.s32 %v1198, %v1200
      %v1202 = vrot.slane %v1195, %v1201
      %v1203 = vcombine.high %v1202, 0
      %v1204 = vcombine.low %v1117, %v1124
      %v1206 = vunpack.c.l.s4 1983009808
      %v1207 = vunpack.c.0.s8 %v1206
      %v1208 = vlaneseq
      %v1209 = vshrl.u32 %v1208, 7
      %v1210 = vsub.s32 %v1207, %v1209
      %v1211 = vrot.slane %v1204, %v1210
      %v1212 = vcombine.low %v1127, %v1128
      %v1214 = vunpack.c.l.s4 1983009808
      %v1215 = vunpack.c.0.s8 %v1214
      %v1216 = vlaneseq
      %v1217 = vshrl.u32 %v1216, 7
      %v1218 = vsub.s32 %v1215, %v1217
      %v1219 = vrot.slane %v1212, %v1218
      %v1220 = vcombine.low %v1211, %v1219
      %v1222 = vunpack.c.l.s4 1934713408
      %v1223 = vunpack.c.0.s8 %v1222
      %v1224 = vlaneseq
      %v1225 = vshrl.u32 %v1224, 7
      %v1226 = vsub.s32 %v1223, %v1225
      %v1227 = vrot.slane %v1220, %v1226
      %v1228 = vcombine.high %v1227, 0
      %v1231 = vpack.i.b16 %v1177, %v1152
      %v1232 = vshrl.u32 %v1152, 16
      %v1233 = vshrl.u32 %v1177, 16
      %v1234 = vpack.i.b16 %v1233, %v1232
      %v1237 = vpack.i.b16 %v1178, %v1153
      %v1238 = vshrl.u32 %v1153, 16
      %v1239 = vshrl.u32 %v1178, 16
      %v1240 = vpack.i.b16 %v1239, %v1238
      %v1243 = vpack.i.b16 %v1227, %v1202
      %v1244 = vshrl.u32 %v1202, 16
      %v1245 = vshrl.u32 %v1227, 16
      %v1246 = vpack.i.b16 %v1245, %v1244
      %v1249 = vpack.i.b16 %v1228, %v1203
      %v1250 = vshrl.u32 %v1203, 16
      %v1251 = vshrl.u32 %v1228, 16
      %v1252 = vpack.i.b16 %v1251, %v1250
      %1254 = vrot.lane.b32.xlu0 %v966, 96
      %v1255 = vpop.permute.xlu0 %1254
      %1256 = vrot.lane.b32.xlu0 %v966, 64
      %v1257 = vpop.permute.xlu0 %1256
      %1258 = vrot.lane.b32.xlu0 %v966, 32
      %v1259 = vpop.permute.xlu0 %1258
      %v1262 = vpack.i.b16 %v1255, %v966
      %v1264 = vshrl.u32 %v966, 16
      %v1265 = vshrl.u32 %v1255, 16
      %v1266 = vpack.i.b16 %v1265, %v1264
      %v1270 = vpack.i.b16 %v1259, %v1257
      %v1272 = vshrl.u32 %v1257, 16
      %v1273 = vshrl.u32 %v1259, 16
      %v1274 = vpack.i.b16 %v1273, %v1272
      %v1276 = vcombine.high %v1262, %v992
      %v1278 = vunpack.c.l.s4 1983009808
      %v1279 = vunpack.c.0.s8 %v1278
      %v1280 = vlaneseq
      %v1281 = vshrl.u32 %v1280, 7
      %v1282 = vsub.s32 %v1279, %v1281
      %v1283 = vrot.slane %v1262, %v1282
      %v1285 = vunpack.c.l.s4 1983009808
      %v1286 = vunpack.c.0.s8 %v1285
      %v1287 = vlaneseq
      %v1288 = vshrl.u32 %v1287, 7
      %v1289 = vsub.s32 %v1286, %v1288
      %v1290 = vrot.slane %v1276, %v1289
      %v1291 = vcombine.high %v1270, %v992
      %v1293 = vunpack.c.l.s4 1983009808
      %v1294 = vunpack.c.0.s8 %v1293
      %v1295 = vlaneseq
      %v1296 = vshrl.u32 %v1295, 7
      %v1297 = vsub.s32 %v1294, %v1296
      %v1298 = vrot.slane %v1270, %v1297
      %v1300 = vunpack.c.l.s4 1983009808
      %v1301 = vunpack.c.0.s8 %v1300
      %v1302 = vlaneseq
      %v1303 = vshrl.u32 %v1302, 7
      %v1304 = vsub.s32 %v1301, %v1303
      %v1305 = vrot.slane %v1291, %v1304
      %v1306 = vcombine.low %v1283, %v1298
      %v1307 = vcombine.high %v1283, %v1298
      %v1309 = vunpack.c.l.s4 1934713408
      %v1310 = vunpack.c.0.s8 %v1309
      %v1311 = vlaneseq
      %v1312 = vshrl.u32 %v1311, 7
      %v1313 = vsub.s32 %v1310, %v1312
      %v1314 = vrot.slane %v1306, %v1313
      %v1316 = vunpack.c.l.s4 1934713408
      %v1317 = vunpack.c.0.s8 %v1316
      %v1318 = vlaneseq
      %v1319 = vshrl.u32 %v1318, 7
      %v1320 = vsub.s32 %v1317, %v1319
      %v1321 = vrot.slane %v1307, %v1320
      %v1322 = vcombine.low %v1290, %v1305
      %v1323 = vcombine.high %v1290, %v1305
      %v1325 = vunpack.c.l.s4 1934713408
      %v1326 = vunpack.c.0.s8 %v1325
      %v1327 = vlaneseq
      %v1328 = vshrl.u32 %v1327, 7
      %v1329 = vsub.s32 %v1326, %v1328
      %v1330 = vrot.slane %v1322, %v1329
      %v1332 = vunpack.c.l.s4 1934713408
      %v1333 = vunpack.c.0.s8 %v1332
      %v1334 = vlaneseq
      %v1335 = vshrl.u32 %v1334, 7
      %v1336 = vsub.s32 %v1333, %v1335
      %v1337 = vrot.slane %v1323, %v1336
      %v1338 = vcombine.high %v1314, 0
      %v1339 = vcombine.high %v1321, 0
      %v1340 = vcombine.high %v1330, 0
      %v1341 = vcombine.high %v1337, 0
      %v1342 = vcombine.high %v1266, %v995
      %v1344 = vunpack.c.l.s4 1983009808
      %v1345 = vunpack.c.0.s8 %v1344
      %v1346 = vlaneseq
      %v1347 = vshrl.u32 %v1346, 7
      %v1348 = vsub.s32 %v1345, %v1347
      %v1349 = vrot.slane %v1266, %v1348
      %v1351 = vunpack.c.l.s4 1983009808
      %v1352 = vunpack.c.0.s8 %v1351
      %v1353 = vlaneseq
      %v1354 = vshrl.u32 %v1353, 7
      %v1355 = vsub.s32 %v1352, %v1354
      %v1356 = vrot.slane %v1342, %v1355
      %v1357 = vcombine.high %v1274, %v995
      %v1359 = vunpack.c.l.s4 1983009808
      %v1360 = vunpack.c.0.s8 %v1359
      %v1361 = vlaneseq
      %v1362 = vshrl.u32 %v1361, 7
      %v1363 = vsub.s32 %v1360, %v1362
      %v1364 = vrot.slane %v1274, %v1363
      %v1366 = vunpack.c.l.s4 1983009808
      %v1367 = vunpack.c.0.s8 %v1366
      %v1368 = vlaneseq
      %v1369 = vshrl.u32 %v1368, 7
      %v1370 = vsub.s32 %v1367, %v1369
      %v1371 = vrot.slane %v1357, %v1370
      %v1372 = vcombine.low %v1349, %v1364
      %v1373 = vcombine.high %v1349, %v1364
      %v1375 = vunpack.c.l.s4 1934713408
      %v1376 = vunpack.c.0.s8 %v1375
      %v1377 = vlaneseq
      %v1378 = vshrl.u32 %v1377, 7
      %v1379 = vsub.s32 %v1376, %v1378
      %v1380 = vrot.slane %v1372, %v1379
      %v1382 = vunpack.c.l.s4 1934713408
      %v1383 = vunpack.c.0.s8 %v1382
      %v1384 = vlaneseq
      %v1385 = vshrl.u32 %v1384, 7
      %v1386 = vsub.s32 %v1383, %v1385
      %v1387 = vrot.slane %v1373, %v1386
      %v1388 = vcombine.low %v1356, %v1371
      %v1389 = vcombine.high %v1356, %v1371
      %v1391 = vunpack.c.l.s4 1934713408
      %v1392 = vunpack.c.0.s8 %v1391
      %v1393 = vlaneseq
      %v1394 = vshrl.u32 %v1393, 7
      %v1395 = vsub.s32 %v1392, %v1394
      %v1396 = vrot.slane %v1388, %v1395
      %v1398 = vunpack.c.l.s4 1934713408
      %v1399 = vunpack.c.0.s8 %v1398
      %v1400 = vlaneseq
      %v1401 = vshrl.u32 %v1400, 7
      %v1402 = vsub.s32 %v1399, %v1401
      %v1403 = vrot.slane %v1389, %v1402
      %v1404 = vcombine.high %v1380, 0
      %v1405 = vcombine.high %v1387, 0
      %v1406 = vcombine.high %v1396, 0
      %v1407 = vcombine.high %v1403, 0
      %v1408 = vcombine.low %v1314, %v1321
      %v1410 = vunpack.c.l.s4 1983009808
      %v1411 = vunpack.c.0.s8 %v1410
      %v1412 = vlaneseq
      %v1413 = vshrl.u32 %v1412, 7
      %v1414 = vsub.s32 %v1411, %v1413
      %v1415 = vrot.slane %v1408, %v1414
      %v1416 = vcombine.low %v1338, %v1339
      %v1418 = vunpack.c.l.s4 1983009808
      %v1419 = vunpack.c.0.s8 %v1418
      %v1420 = vlaneseq
      %v1421 = vshrl.u32 %v1420, 7
      %v1422 = vsub.s32 %v1419, %v1421
      %v1423 = vrot.slane %v1416, %v1422
      %v1424 = vcombine.low %v1415, %v1423
      %v1426 = vunpack.c.l.s4 1934713408
      %v1427 = vunpack.c.0.s8 %v1426
      %v1428 = vlaneseq
      %v1429 = vshrl.u32 %v1428, 7
      %v1430 = vsub.s32 %v1427, %v1429
      %v1431 = vrot.slane %v1424, %v1430
      %v1432 = vcombine.high %v1431, 0
      %v1433 = vcombine.low %v1380, %v1387
      %v1435 = vunpack.c.l.s4 1983009808
      %v1436 = vunpack.c.0.s8 %v1435
      %v1437 = vlaneseq
      %v1438 = vshrl.u32 %v1437, 7
      %v1439 = vsub.s32 %v1436, %v1438
      %v1440 = vrot.slane %v1433, %v1439
      %v1441 = vcombine.low %v1404, %v1405
      %v1443 = vunpack.c.l.s4 1983009808
      %v1444 = vunpack.c.0.s8 %v1443
      %v1445 = vlaneseq
      %v1446 = vshrl.u32 %v1445, 7
      %v1447 = vsub.s32 %v1444, %v1446
      %v1448 = vrot.slane %v1441, %v1447
      %v1449 = vcombine.low %v1440, %v1448
      %v1451 = vunpack.c.l.s4 1934713408
      %v1452 = vunpack.c.0.s8 %v1451
      %v1453 = vlaneseq
      %v1454 = vshrl.u32 %v1453, 7
      %v1455 = vsub.s32 %v1452, %v1454
      %v1456 = vrot.slane %v1449, %v1455
      %v1457 = vcombine.high %v1456, 0
      %v1458 = vcombine.low %v1330, %v1337
      %v1460 = vunpack.c.l.s4 1983009808
      %v1461 = vunpack.c.0.s8 %v1460
      %v1462 = vlaneseq
      %v1463 = vshrl.u32 %v1462, 7
      %v1464 = vsub.s32 %v1461, %v1463
      %v1465 = vrot.slane %v1458, %v1464
      %v1466 = vcombine.low %v1340, %v1341
      %v1468 = vunpack.c.l.s4 1983009808
      %v1469 = vunpack.c.0.s8 %v1468
      %v1470 = vlaneseq
      %v1471 = vshrl.u32 %v1470, 7
      %v1472 = vsub.s32 %v1469, %v1471
      %v1473 = vrot.slane %v1466, %v1472
      %v1474 = vcombine.low %v1465, %v1473
      %v1476 = vunpack.c.l.s4 1934713408
      %v1477 = vunpack.c.0.s8 %v1476
      %v1478 = vlaneseq
      %v1479 = vshrl.u32 %v1478, 7
      %v1480 = vsub.s32 %v1477, %v1479
      %v1481 = vrot.slane %v1474, %v1480
      %v1482 = vcombine.high %v1481, 0
      %v1483 = vcombine.low %v1396, %v1403
      %v1485 = vunpack.c.l.s4 1983009808
      %v1486 = vunpack.c.0.s8 %v1485
      %v1487 = vlaneseq
      %v1488 = vshrl.u32 %v1487, 7
      %v1489 = vsub.s32 %v1486, %v1488
      %v1490 = vrot.slane %v1483, %v1489
      %v1491 = vcombine.low %v1406, %v1407
      %v1493 = vunpack.c.l.s4 1983009808
      %v1494 = vunpack.c.0.s8 %v1493
      %v1495 = vlaneseq
      %v1496 = vshrl.u32 %v1495, 7
      %v1497 = vsub.s32 %v1494, %v1496
      %v1498 = vrot.slane %v1491, %v1497
      %v1499 = vcombine.low %v1490, %v1498
      %v1501 = vunpack.c.l.s4 1934713408
      %v1502 = vunpack.c.0.s8 %v1501
      %v1503 = vlaneseq
      %v1504 = vshrl.u32 %v1503, 7
      %v1505 = vsub.s32 %v1502, %v1504
      %v1506 = vrot.slane %v1499, %v1505
      %v1507 = vcombine.high %v1506, 0
      %v1510 = vpack.i.b16 %v1456, %v1431
      %v1511 = vshrl.u32 %v1431, 16
      %v1512 = vshrl.u32 %v1456, 16
      %v1513 = vpack.i.b16 %v1512, %v1511
      %v1516 = vpack.i.b16 %v1457, %v1432
      %v1517 = vshrl.u32 %v1432, 16
      %v1518 = vshrl.u32 %v1457, 16
      %v1519 = vpack.i.b16 %v1518, %v1517
      %v1522 = vpack.i.b16 %v1506, %v1481
      %v1523 = vshrl.u32 %v1481, 16
      %v1524 = vshrl.u32 %v1506, 16
      %v1525 = vpack.i.b16 %v1524, %v1523
      %v1528 = vpack.i.b16 %v1507, %v1482
      %v1529 = vshrl.u32 %v1482, 16
      %v1530 = vshrl.u32 %v1507, 16
      %v1531 = vpack.i.b16 %v1530, %v1529
      %1533 = vrot.lane.b32.xlu0 %v967, 96
      %v1534 = vpop.permute.xlu0 %1533
      %1535 = vrot.lane.b32.xlu0 %v967, 64
      %v1536 = vpop.permute.xlu0 %1535
      %1537 = vrot.lane.b32.xlu0 %v967, 32
      %v1538 = vpop.permute.xlu0 %1537
      %v1541 = vpack.i.b16 %v1534, %v967
      %v1543 = vshrl.u32 %v967, 16
      %v1544 = vshrl.u32 %v1534, 16
      %v1545 = vpack.i.b16 %v1544, %v1543
      %v1549 = vpack.i.b16 %v1538, %v1536
      %v1551 = vshrl.u32 %v1536, 16
      %v1552 = vshrl.u32 %v1538, 16
      %v1553 = vpack.i.b16 %v1552, %v1551
      %v1555 = vcombine.high %v1541, %v992
      %v1557 = vunpack.c.l.s4 1983009808
      %v1558 = vunpack.c.0.s8 %v1557
      %v1559 = vlaneseq
      %v1560 = vshrl.u32 %v1559, 7
      %v1561 = vsub.s32 %v1558, %v1560
      %v1562 = vrot.slane %v1541, %v1561
      %v1564 = vunpack.c.l.s4 1983009808
      %v1565 = vunpack.c.0.s8 %v1564
      %v1566 = vlaneseq
      %v1567 = vshrl.u32 %v1566, 7
      %v1568 = vsub.s32 %v1565, %v1567
      %v1569 = vrot.slane %v1555, %v1568
      %v1570 = vcombine.high %v1549, %v992
      %v1572 = vunpack.c.l.s4 1983009808
      %v1573 = vunpack.c.0.s8 %v1572
      %v1574 = vlaneseq
      %v1575 = vshrl.u32 %v1574, 7
      %v1576 = vsub.s32 %v1573, %v1575
      %v1577 = vrot.slane %v1549, %v1576
      %v1579 = vunpack.c.l.s4 1983009808
      %v1580 = vunpack.c.0.s8 %v1579
      %v1581 = vlaneseq
      %v1582 = vshrl.u32 %v1581, 7
      %v1583 = vsub.s32 %v1580, %v1582
      %v1584 = vrot.slane %v1570, %v1583
      %v1585 = vcombine.low %v1562, %v1577
      %v1586 = vcombine.high %v1562, %v1577
      %v1588 = vunpack.c.l.s4 1934713408
      %v1589 = vunpack.c.0.s8 %v1588
      %v1590 = vlaneseq
      %v1591 = vshrl.u32 %v1590, 7
      %v1592 = vsub.s32 %v1589, %v1591
      %v1593 = vrot.slane %v1585, %v1592
      %v1595 = vunpack.c.l.s4 1934713408
      %v1596 = vunpack.c.0.s8 %v1595
      %v1597 = vlaneseq
      %v1598 = vshrl.u32 %v1597, 7
      %v1599 = vsub.s32 %v1596, %v1598
      %v1600 = vrot.slane %v1586, %v1599
      %v1601 = vcombine.low %v1569, %v1584
      %v1602 = vcombine.high %v1569, %v1584
      %v1604 = vunpack.c.l.s4 1934713408
      %v1605 = vunpack.c.0.s8 %v1604
      %v1606 = vlaneseq
      %v1607 = vshrl.u32 %v1606, 7
      %v1608 = vsub.s32 %v1605, %v1607
      %v1609 = vrot.slane %v1601, %v1608
      %v1611 = vunpack.c.l.s4 1934713408
      %v1612 = vunpack.c.0.s8 %v1611
      %v1613 = vlaneseq
      %v1614 = vshrl.u32 %v1613, 7
      %v1615 = vsub.s32 %v1612, %v1614
      %v1616 = vrot.slane %v1602, %v1615
      %v1617 = vcombine.high %v1593, 0
      %v1618 = vcombine.high %v1600, 0
      %v1619 = vcombine.high %v1609, 0
      %v1620 = vcombine.high %v1616, 0
      %v1621 = vcombine.high %v1545, %v995
      %v1623 = vunpack.c.l.s4 1983009808
      %v1624 = vunpack.c.0.s8 %v1623
      %v1625 = vlaneseq
      %v1626 = vshrl.u32 %v1625, 7
      %v1627 = vsub.s32 %v1624, %v1626
      %v1628 = vrot.slane %v1545, %v1627
      %v1630 = vunpack.c.l.s4 1983009808
      %v1631 = vunpack.c.0.s8 %v1630
      %v1632 = vlaneseq
      %v1633 = vshrl.u32 %v1632, 7
      %v1634 = vsub.s32 %v1631, %v1633
      %v1635 = vrot.slane %v1621, %v1634
      %v1636 = vcombine.high %v1553, %v995
      %v1638 = vunpack.c.l.s4 1983009808
      %v1639 = vunpack.c.0.s8 %v1638
      %v1640 = vlaneseq
      %v1641 = vshrl.u32 %v1640, 7
      %v1642 = vsub.s32 %v1639, %v1641
      %v1643 = vrot.slane %v1553, %v1642
      %v1645 = vunpack.c.l.s4 1983009808
      %v1646 = vunpack.c.0.s8 %v1645
      %v1647 = vlaneseq
      %v1648 = vshrl.u32 %v1647, 7
      %v1649 = vsub.s32 %v1646, %v1648
      %v1650 = vrot.slane %v1636, %v1649
      %v1651 = vcombine.low %v1628, %v1643
      %v1652 = vcombine.high %v1628, %v1643
      %v1654 = vunpack.c.l.s4 1934713408
      %v1655 = vunpack.c.0.s8 %v1654
      %v1656 = vlaneseq
      %v1657 = vshrl.u32 %v1656, 7
      %v1658 = vsub.s32 %v1655, %v1657
      %v1659 = vrot.slane %v1651, %v1658
      %v1661 = vunpack.c.l.s4 1934713408
      %v1662 = vunpack.c.0.s8 %v1661
      %v1663 = vlaneseq
      %v1664 = vshrl.u32 %v1663, 7
      %v1665 = vsub.s32 %v1662, %v1664
      %v1666 = vrot.slane %v1652, %v1665
      %v1667 = vcombine.low %v1635, %v1650
      %v1668 = vcombine.high %v1635, %v1650
      %v1670 = vunpack.c.l.s4 1934713408
      %v1671 = vunpack.c.0.s8 %v1670
      %v1672 = vlaneseq
      %v1673 = vshrl.u32 %v1672, 7
      %v1674 = vsub.s32 %v1671, %v1673
      %v1675 = vrot.slane %v1667, %v1674
      %v1677 = vunpack.c.l.s4 1934713408
      %v1678 = vunpack.c.0.s8 %v1677
      %v1679 = vlaneseq
      %v1680 = vshrl.u32 %v1679, 7
      %v1681 = vsub.s32 %v1678, %v1680
      %v1682 = vrot.slane %v1668, %v1681
      %v1683 = vcombine.high %v1659, 0
      %v1684 = vcombine.high %v1666, 0
      %v1685 = vcombine.high %v1675, 0
      %v1686 = vcombine.high %v1682, 0
      %v1687 = vcombine.low %v1593, %v1600
      %v1689 = vunpack.c.l.s4 1983009808
      %v1690 = vunpack.c.0.s8 %v1689
      %v1691 = vlaneseq
      %v1692 = vshrl.u32 %v1691, 7
      %v1693 = vsub.s32 %v1690, %v1692
      %v1694 = vrot.slane %v1687, %v1693
      %v1695 = vcombine.low %v1617, %v1618
      %v1697 = vunpack.c.l.s4 1983009808
      %v1698 = vunpack.c.0.s8 %v1697
      %v1699 = vlaneseq
      %v1700 = vshrl.u32 %v1699, 7
      %v1701 = vsub.s32 %v1698, %v1700
      %v1702 = vrot.slane %v1695, %v1701
      %v1703 = vcombine.low %v1694, %v1702
      %v1705 = vunpack.c.l.s4 1934713408
      %v1706 = vunpack.c.0.s8 %v1705
      %v1707 = vlaneseq
      %v1708 = vshrl.u32 %v1707, 7
      %v1709 = vsub.s32 %v1706, %v1708
      %v1710 = vrot.slane %v1703, %v1709
      %v1711 = vcombine.high %v1710, 0
      %v1712 = vcombine.low %v1659, %v1666
      %v1714 = vunpack.c.l.s4 1983009808
      %v1715 = vunpack.c.0.s8 %v1714
      %v1716 = vlaneseq
      %v1717 = vshrl.u32 %v1716, 7
      %v1718 = vsub.s32 %v1715, %v1717
      %v1719 = vrot.slane %v1712, %v1718
      %v1720 = vcombine.low %v1683, %v1684
      %v1722 = vunpack.c.l.s4 1983009808
      %v1723 = vunpack.c.0.s8 %v1722
      %v1724 = vlaneseq
      %v1725 = vshrl.u32 %v1724, 7
      %v1726 = vsub.s32 %v1723, %v1725
      %v1727 = vrot.slane %v1720, %v1726
      %v1728 = vcombine.low %v1719, %v1727
      %v1730 = vunpack.c.l.s4 1934713408
      %v1731 = vunpack.c.0.s8 %v1730
      %v1732 = vlaneseq
      %v1733 = vshrl.u32 %v1732, 7
      %v1734 = vsub.s32 %v1731, %v1733
      %v1735 = vrot.slane %v1728, %v1734
      %v1736 = vcombine.high %v1735, 0
      %v1737 = vcombine.low %v1609, %v1616
      %v1739 = vunpack.c.l.s4 1983009808
      %v1740 = vunpack.c.0.s8 %v1739
      %v1741 = vlaneseq
      %v1742 = vshrl.u32 %v1741, 7
      %v1743 = vsub.s32 %v1740, %v1742
      %v1744 = vrot.slane %v1737, %v1743
      %v1745 = vcombine.low %v1619, %v1620
      %v1747 = vunpack.c.l.s4 1983009808
      %v1748 = vunpack.c.0.s8 %v1747
      %v1749 = vlaneseq
      %v1750 = vshrl.u32 %v1749, 7
      %v1751 = vsub.s32 %v1748, %v1750
      %v1752 = vrot.slane %v1745, %v1751
      %v1753 = vcombine.low %v1744, %v1752
      %v1755 = vunpack.c.l.s4 1934713408
      %v1756 = vunpack.c.0.s8 %v1755
      %v1757 = vlaneseq
      %v1758 = vshrl.u32 %v1757, 7
      %v1759 = vsub.s32 %v1756, %v1758
      %v1760 = vrot.slane %v1753, %v1759
      %v1761 = vcombine.high %v1760, 0
      %v1762 = vcombine.low %v1675, %v1682
      %v1764 = vunpack.c.l.s4 1983009808
      %v1765 = vunpack.c.0.s8 %v1764
      %v1766 = vlaneseq
      %v1767 = vshrl.u32 %v1766, 7
      %v1768 = vsub.s32 %v1765, %v1767
      %v1769 = vrot.slane %v1762, %v1768
      %v1770 = vcombine.low %v1685, %v1686
      %v1772 = vunpack.c.l.s4 1983009808
      %v1773 = vunpack.c.0.s8 %v1772
      %v1774 = vlaneseq
      %v1775 = vshrl.u32 %v1774, 7
      %v1776 = vsub.s32 %v1773, %v1775
      %v1777 = vrot.slane %v1770, %v1776
      %v1778 = vcombine.low %v1769, %v1777
      %v1780 = vunpack.c.l.s4 1934713408
      %v1781 = vunpack.c.0.s8 %v1780
      %v1782 = vlaneseq
      %v1783 = vshrl.u32 %v1782, 7
      %v1784 = vsub.s32 %v1781, %v1783
      %v1785 = vrot.slane %v1778, %v1784
      %v1786 = vcombine.high %v1785, 0
      %v1789 = vpack.i.b16 %v1735, %v1710
      %v1790 = vshrl.u32 %v1710, 16
      %v1791 = vshrl.u32 %v1735, 16
      %v1792 = vpack.i.b16 %v1791, %v1790
      %v1795 = vpack.i.b16 %v1736, %v1711
      %v1796 = vshrl.u32 %v1711, 16
      %v1797 = vshrl.u32 %v1736, 16
      %v1798 = vpack.i.b16 %v1797, %v1796
      %v1801 = vpack.i.b16 %v1785, %v1760
      %v1802 = vshrl.u32 %v1760, 16
      %v1803 = vshrl.u32 %v1785, 16
      %v1804 = vpack.i.b16 %v1803, %v1802
      %v1807 = vpack.i.b16 %v1786, %v1761
      %v1808 = vshrl.u32 %v1761, 16
      %v1809 = vshrl.u32 %v1786, 16
      %v1810 = vpack.i.b16 %v1809, %v1808
      %vm1811 = vcmask 261120
      %v1813 = vsel %vm1811, %v1231, 0
      %v1816 = vsel %vm1811, %v1510, 0
      %1818 = vmatprep.subr.bf16.mxu0 0
      %1819 = vmatpush1.bf16.xpose.msra.mxu0 0
      %1820 = vmatprep.subr.bf16.mxu0 0
      %1821 = vmatpush1.bf16.xpose.msra.mxu0 0
      %1822 = vmatprep.subr.bf16.mxu0 0
      %1823 = vmatpush1.bf16.xpose.msra.mxu0 0
      %1824 = vmatprep.subr.bf16.mxu0 0
      %1825 = vmatpush1.bf16.xpose.msra.mxu0 0
      %1826 = vmatprep.subr.bf16.mxu0 0
      %1827 = vmatpush1.bf16.xpose.msra.mxu0 0
      %1828 = vmatprep.subr.bf16.mxu0 0
      %1829 = vmatpush1.bf16.xpose.msra.mxu0 0
      %1830 = vmatprep.subr.bf16.mxu0 0
      %1831 = vmatpush1.bf16.xpose.msra.mxu0 0
      %1832 = vmatprep.subr.bf16.mxu0 0
      %1833 = vmatpush1.bf16.xpose.msra.mxu0 %v1816
      %1834 = vmatprep.subr.bf16.mxu0 0
      %1835 = vmatpush2.bf16.xpose.msra.mxu0 0
      %1836 = vmatprep.subr.bf16.mxu0 0
      %1837 = vmatpush2.bf16.xpose.msra.mxu0 0
      %1838 = vmatprep.subr.bf16.mxu0 0
      %1839 = vmatpush2.bf16.xpose.msra.mxu0 0
      %1840 = vmatprep.subr.bf16.mxu0 0
      %1841 = vmatpush2.bf16.xpose.msra.mxu0 0
      %1842 = vmatprep.subr.bf16.mxu0 0
      %1843 = vmatpush2.bf16.xpose.msra.mxu0 0
      %1844 = vmatprep.subr.bf16.mxu0 0
      %1845 = vmatpush2.bf16.xpose.msra.mxu0 0
      %1846 = vmatprep.subr.bf16.mxu0 0
      %1847 = vmatpush2.bf16.xpose.msra.mxu0 0
      %1848 = vmatprep.subr.bf16.mxu0 0
      %1849 = vmatpush2.bf16.xpose.msra.mxu0 0
      %1850 = vmatprep.mubr.bf16.mxu0 0
      %1851 = vmatmul.mubr.bf16.gmra.mxu0 %v1813
      %v1852 = vpop.f32.mrf.mxu0
      %v1853 = vadd.f32 0.0, %v1852
      %v1854 = vpop.f32.mrf.mxu0
      %v1855 = vpop.f32.mrf.mxu0
      %v1856 = vpop.f32.mrf.mxu0
      %1857 = vdwg.mxu0
      %v1859 = vsel %vm1811, %v1234, 0
      %v1862 = vsel %vm1811, %v1513, 0
      %1864 = vmatprep.subr.bf16.mxu0 0
      %1865 = vmatpush1.bf16.xpose.msra.mxu0 0
      %1866 = vmatprep.subr.bf16.mxu0 0
      %1867 = vmatpush1.bf16.xpose.msra.mxu0 0
      %1868 = vmatprep.subr.bf16.mxu0 0
      %1869 = vmatpush1.bf16.xpose.msra.mxu0 0
      %1870 = vmatprep.subr.bf16.mxu0 0
      %1871 = vmatpush1.bf16.xpose.msra.mxu0 0
      %1872 = vmatprep.subr.bf16.mxu0 0
      %1873 = vmatpush1.bf16.xpose.msra.mxu0 0
      %1874 = vmatprep.subr.bf16.mxu0 0
      %1875 = vmatpush1.bf16.xpose.msra.mxu0 0
      %1876 = vmatprep.subr.bf16.mxu0 0
      %1877 = vmatpush1.bf16.xpose.msra.mxu0 0
      %1878 = vmatprep.subr.bf16.mxu0 0
      %1879 = vmatpush1.bf16.xpose.msra.mxu0 %v1862
      %1880 = vmatprep.subr.bf16.mxu0 0
      %1881 = vmatpush2.bf16.xpose.msra.mxu0 0
      %1882 = vmatprep.subr.bf16.mxu0 0
      %1883 = vmatpush2.bf16.xpose.msra.mxu0 0
      %1884 = vmatprep.subr.bf16.mxu0 0
      %1885 = vmatpush2.bf16.xpose.msra.mxu0 0
      %1886 = vmatprep.subr.bf16.mxu0 0
      %1887 = vmatpush2.bf16.xpose.msra.mxu0 0
      %1888 = vmatprep.subr.bf16.mxu0 0
      %1889 = vmatpush2.bf16.xpose.msra.mxu0 0
      %1890 = vmatprep.subr.bf16.mxu0 0
      %1891 = vmatpush2.bf16.xpose.msra.mxu0 0
      %1892 = vmatprep.subr.bf16.mxu0 0
      %1893 = vmatpush2.bf16.xpose.msra.mxu0 0
      %1894 = vmatprep.subr.bf16.mxu0 0
      %1895 = vmatpush2.bf16.xpose.msra.mxu0 0
      %1896 = vmatprep.mubr.bf16.mxu0 0
      %1897 = vmatmul.mubr.bf16.gmra.mxu0 %v1859
      %v1898 = vpop.f32.mrf.mxu0
      %v1899 = vadd.f32 0.0, %v1898
      %v1900 = vpop.f32.mrf.mxu0
      %v1901 = vpop.f32.mrf.mxu0
      %v1902 = vpop.f32.mrf.mxu0
      %1903 = vdwg.mxu0
      %v1905 = vsel %vm1811, %v1237, 0
      %v1908 = vsel %vm1811, %v1516, 0
      %1910 = vmatprep.subr.bf16.mxu0 0
      %1911 = vmatpush1.bf16.xpose.msra.mxu0 0
      %1912 = vmatprep.subr.bf16.mxu0 0
      %1913 = vmatpush1.bf16.xpose.msra.mxu0 0
      %1914 = vmatprep.subr.bf16.mxu0 0
      %1915 = vmatpush1.bf16.xpose.msra.mxu0 0
      %1916 = vmatprep.subr.bf16.mxu0 0
      %1917 = vmatpush1.bf16.xpose.msra.mxu0 0
      %1918 = vmatprep.subr.bf16.mxu0 0
      %1919 = vmatpush1.bf16.xpose.msra.mxu0 0
      %1920 = vmatprep.subr.bf16.mxu0 0
      %1921 = vmatpush1.bf16.xpose.msra.mxu0 0
      %1922 = vmatprep.subr.bf16.mxu0 0
      %1923 = vmatpush1.bf16.xpose.msra.mxu0 0
      %1924 = vmatprep.subr.bf16.mxu0 0
      %1925 = vmatpush1.bf16.xpose.msra.mxu0 %v1908
      %1926 = vmatprep.subr.bf16.mxu0 0
      %1927 = vmatpush2.bf16.xpose.msra.mxu0 0
      %1928 = vmatprep.subr.bf16.mxu0 0
      %1929 = vmatpush2.bf16.xpose.msra.mxu0 0
      %1930 = vmatprep.subr.bf16.mxu0 0
      %1931 = vmatpush2.bf16.xpose.msra.mxu0 0
      %1932 = vmatprep.subr.bf16.mxu0 0
      %1933 = vmatpush2.bf16.xpose.msra.mxu0 0
      %1934 = vmatprep.subr.bf16.mxu0 0
      %1935 = vmatpush2.bf16.xpose.msra.mxu0 0
      %1936 = vmatprep.subr.bf16.mxu0 0
      %1937 = vmatpush2.bf16.xpose.msra.mxu0 0
      %1938 = vmatprep.subr.bf16.mxu0 0
      %1939 = vmatpush2.bf16.xpose.msra.mxu0 0
      %1940 = vmatprep.subr.bf16.mxu0 0
      %1941 = vmatpush2.bf16.xpose.msra.mxu0 0
      %1942 = vmatprep.mubr.bf16.mxu0 0
      %1943 = vmatmul.mubr.bf16.gmra.mxu0 %v1905
      %v1944 = vpop.f32.mrf.mxu0
      %v1945 = vadd.f32 0.0, %v1944
      %v1946 = vpop.f32.mrf.mxu0
      %v1947 = vpop.f32.mrf.mxu0
      %v1948 = vpop.f32.mrf.mxu0
      %1949 = vdwg.mxu0
      %v1951 = vsel %vm1811, %v1240, 0
      %v1954 = vsel %vm1811, %v1519, 0
      %1956 = vmatprep.subr.bf16.mxu0 0
      %1957 = vmatpush1.bf16.xpose.msra.mxu0 0
      %1958 = vmatprep.subr.bf16.mxu0 0
      %1959 = vmatpush1.bf16.xpose.msra.mxu0 0
      %1960 = vmatprep.subr.bf16.mxu0 0
      %1961 = vmatpush1.bf16.xpose.msra.mxu0 0
      %1962 = vmatprep.subr.bf16.mxu0 0
      %1963 = vmatpush1.bf16.xpose.msra.mxu0 0
      %1964 = vmatprep.subr.bf16.mxu0 0
      %1965 = vmatpush1.bf16.xpose.msra.mxu0 0
      %1966 = vmatprep.subr.bf16.mxu0 0
      %1967 = vmatpush1.bf16.xpose.msra.mxu0 0
      %1968 = vmatprep.subr.bf16.mxu0 0
      %1969 = vmatpush1.bf16.xpose.msra.mxu0 0
      %1970 = vmatprep.subr.bf16.mxu0 0
      %1971 = vmatpush1.bf16.xpose.msra.mxu0 %v1954
      %1972 = vmatprep.subr.bf16.mxu0 0
      %1973 = vmatpush2.bf16.xpose.msra.mxu0 0
      %1974 = vmatprep.subr.bf16.mxu0 0
      %1975 = vmatpush2.bf16.xpose.msra.mxu0 0
      %1976 = vmatprep.subr.bf16.mxu0 0
      %1977 = vmatpush2.bf16.xpose.msra.mxu0 0
      %1978 = vmatprep.subr.bf16.mxu0 0
      %1979 = vmatpush2.bf16.xpose.msra.mxu0 0
      %1980 = vmatprep.subr.bf16.mxu0 0
      %1981 = vmatpush2.bf16.xpose.msra.mxu0 0
      %1982 = vmatprep.subr.bf16.mxu0 0
      %1983 = vmatpush2.bf16.xpose.msra.mxu0 0
      %1984 = vmatprep.subr.bf16.mxu0 0
      %1985 = vmatpush2.bf16.xpose.msra.mxu0 0
      %1986 = vmatprep.subr.bf16.mxu0 0
      %1987 = vmatpush2.bf16.xpose.msra.mxu0 0
      %1988 = vmatprep.mubr.bf16.mxu0 0
      %1989 = vmatmul.mubr.bf16.gmra.mxu0 %v1951
      %v1990 = vpop.f32.mrf.mxu0
      %v1991 = vadd.f32 0.0, %v1990
      %v1992 = vpop.f32.mrf.mxu0
      %v1993 = vpop.f32.mrf.mxu0
      %v1994 = vpop.f32.mrf.mxu0
      %1995 = vdwg.mxu0
      %v1997 = vsel %vm1811, %v1243, 0
      %v2000 = vsel %vm1811, %v1522, 0
      %2002 = vmatprep.subr.bf16.mxu0 0
      %2003 = vmatpush1.bf16.xpose.msra.mxu0 0
      %2004 = vmatprep.subr.bf16.mxu0 0
      %2005 = vmatpush1.bf16.xpose.msra.mxu0 0
      %2006 = vmatprep.subr.bf16.mxu0 0
      %2007 = vmatpush1.bf16.xpose.msra.mxu0 0
      %2008 = vmatprep.subr.bf16.mxu0 0
      %2009 = vmatpush1.bf16.xpose.msra.mxu0 0
      %2010 = vmatprep.subr.bf16.mxu0 0
      %2011 = vmatpush1.bf16.xpose.msra.mxu0 0
      %2012 = vmatprep.subr.bf16.mxu0 0
      %2013 = vmatpush1.bf16.xpose.msra.mxu0 0
      %2014 = vmatprep.subr.bf16.mxu0 0
      %2015 = vmatpush1.bf16.xpose.msra.mxu0 0
      %2016 = vmatprep.subr.bf16.mxu0 0
      %2017 = vmatpush1.bf16.xpose.msra.mxu0 %v2000
      %2018 = vmatprep.subr.bf16.mxu0 0
      %2019 = vmatpush2.bf16.xpose.msra.mxu0 0
      %2020 = vmatprep.subr.bf16.mxu0 0
      %2021 = vmatpush2.bf16.xpose.msra.mxu0 0
      %2022 = vmatprep.subr.bf16.mxu0 0
      %2023 = vmatpush2.bf16.xpose.msra.mxu0 0
      %2024 = vmatprep.subr.bf16.mxu0 0
      %2025 = vmatpush2.bf16.xpose.msra.mxu0 0
      %2026 = vmatprep.subr.bf16.mxu0 0
      %2027 = vmatpush2.bf16.xpose.msra.mxu0 0
      %2028 = vmatprep.subr.bf16.mxu0 0
      %2029 = vmatpush2.bf16.xpose.msra.mxu0 0
      %2030 = vmatprep.subr.bf16.mxu0 0
      %2031 = vmatpush2.bf16.xpose.msra.mxu0 0
      %2032 = vmatprep.subr.bf16.mxu0 0
      %2033 = vmatpush2.bf16.xpose.msra.mxu0 0
      %2034 = vmatprep.mubr.bf16.mxu0 0
      %2035 = vmatmul.mubr.bf16.gmra.mxu0 %v1997
      %v2036 = vpop.f32.mrf.mxu0
      %v2037 = vadd.f32 0.0, %v2036
      %v2038 = vpop.f32.mrf.mxu0
      %v2039 = vpop.f32.mrf.mxu0
      %v2040 = vpop.f32.mrf.mxu0
      %2041 = vdwg.mxu0
      %v2043 = vsel %vm1811, %v1246, 0
      %v2046 = vsel %vm1811, %v1525, 0
      %2048 = vmatprep.subr.bf16.mxu0 0
      %2049 = vmatpush1.bf16.xpose.msra.mxu0 0
      %2050 = vmatprep.subr.bf16.mxu0 0
      %2051 = vmatpush1.bf16.xpose.msra.mxu0 0
      %2052 = vmatprep.subr.bf16.mxu0 0
      %2053 = vmatpush1.bf16.xpose.msra.mxu0 0
      %2054 = vmatprep.subr.bf16.mxu0 0
      %2055 = vmatpush1.bf16.xpose.msra.mxu0 0
      %2056 = vmatprep.subr.bf16.mxu0 0
      %2057 = vmatpush1.bf16.xpose.msra.mxu0 0
      %2058 = vmatprep.subr.bf16.mxu0 0
      %2059 = vmatpush1.bf16.xpose.msra.mxu0 0
      %2060 = vmatprep.subr.bf16.mxu0 0
      %2061 = vmatpush1.bf16.xpose.msra.mxu0 0
      %2062 = vmatprep.subr.bf16.mxu0 0
      %2063 = vmatpush1.bf16.xpose.msra.mxu0 %v2046
      %2064 = vmatprep.subr.bf16.mxu0 0
      %2065 = vmatpush2.bf16.xpose.msra.mxu0 0
      %2066 = vmatprep.subr.bf16.mxu0 0
      %2067 = vmatpush2.bf16.xpose.msra.mxu0 0
      %2068 = vmatprep.subr.bf16.mxu0 0
      %2069 = vmatpush2.bf16.xpose.msra.mxu0 0
      %2070 = vmatprep.subr.bf16.mxu0 0
      %2071 = vmatpush2.bf16.xpose.msra.mxu0 0
      %2072 = vmatprep.subr.bf16.mxu0 0
      %2073 = vmatpush2.bf16.xpose.msra.mxu0 0
      %2074 = vmatprep.subr.bf16.mxu0 0
      %2075 = vmatpush2.bf16.xpose.msra.mxu0 0
      %2076 = vmatprep.subr.bf16.mxu0 0
      %2077 = vmatpush2.bf16.xpose.msra.mxu0 0
      %2078 = vmatprep.subr.bf16.mxu0 0
      %2079 = vmatpush2.bf16.xpose.msra.mxu0 0
      %2080 = vmatprep.mubr.bf16.mxu0 0
      %2081 = vmatmul.mubr.bf16.gmra.mxu0 %v2043
      %v2082 = vpop.f32.mrf.mxu0
      %v2083 = vadd.f32 0.0, %v2082
      %v2084 = vpop.f32.mrf.mxu0
      %v2085 = vpop.f32.mrf.mxu0
      %v2086 = vpop.f32.mrf.mxu0
      %2087 = vdwg.mxu0
      %v2089 = vsel %vm1811, %v1249, 0
      %v2092 = vsel %vm1811, %v1528, 0
      %2094 = vmatprep.subr.bf16.mxu0 0
      %2095 = vmatpush1.bf16.xpose.msra.mxu0 0
      %2096 = vmatprep.subr.bf16.mxu0 0
      %2097 = vmatpush1.bf16.xpose.msra.mxu0 0
      %2098 = vmatprep.subr.bf16.mxu0 0
      %2099 = vmatpush1.bf16.xpose.msra.mxu0 0
      %2100 = vmatprep.subr.bf16.mxu0 0
      %2101 = vmatpush1.bf16.xpose.msra.mxu0 0
      %2102 = vmatprep.subr.bf16.mxu0 0
      %2103 = vmatpush1.bf16.xpose.msra.mxu0 0
      %2104 = vmatprep.subr.bf16.mxu0 0
      %2105 = vmatpush1.bf16.xpose.msra.mxu0 0
      %2106 = vmatprep.subr.bf16.mxu0 0
      %2107 = vmatpush1.bf16.xpose.msra.mxu0 0
      %2108 = vmatprep.subr.bf16.mxu0 0
      %2109 = vmatpush1.bf16.xpose.msra.mxu0 %v2092
      %2110 = vmatprep.subr.bf16.mxu0 0
      %2111 = vmatpush2.bf16.xpose.msra.mxu0 0
      %2112 = vmatprep.subr.bf16.mxu0 0
      %2113 = vmatpush2.bf16.xpose.msra.mxu0 0
      %2114 = vmatprep.subr.bf16.mxu0 0
      %2115 = vmatpush2.bf16.xpose.msra.mxu0 0
      %2116 = vmatprep.subr.bf16.mxu0 0
      %2117 = vmatpush2.bf16.xpose.msra.mxu0 0
      %2118 = vmatprep.subr.bf16.mxu0 0
      %2119 = vmatpush2.bf16.xpose.msra.mxu0 0
      %2120 = vmatprep.subr.bf16.mxu0 0
      %2121 = vmatpush2.bf16.xpose.msra.mxu0 0
      %2122 = vmatprep.subr.bf16.mxu0 0
      %2123 = vmatpush2.bf16.xpose.msra.mxu0 0
      %2124 = vmatprep.subr.bf16.mxu0 0
      %2125 = vmatpush2.bf16.xpose.msra.mxu0 0
      %2126 = vmatprep.mubr.bf16.mxu0 0
      %2127 = vmatmul.mubr.bf16.gmra.mxu0 %v2089
      %v2128 = vpop.f32.mrf.mxu0
      %v2129 = vadd.f32 0.0, %v2128
      %v2130 = vpop.f32.mrf.mxu0
      %v2131 = vpop.f32.mrf.mxu0
      %v2132 = vpop.f32.mrf.mxu0
      %2133 = vdwg.mxu0
      %v2135 = vsel %vm1811, %v1252, 0
      %v2138 = vsel %vm1811, %v1531, 0
      %2140 = vmatprep.subr.bf16.mxu0 0
      %2141 = vmatpush1.bf16.xpose.msra.mxu0 0
      %2142 = vmatprep.subr.bf16.mxu0 0
      %2143 = vmatpush1.bf16.xpose.msra.mxu0 0
      %2144 = vmatprep.subr.bf16.mxu0 0
      %2145 = vmatpush1.bf16.xpose.msra.mxu0 0
      %2146 = vmatprep.subr.bf16.mxu0 0
      %2147 = vmatpush1.bf16.xpose.msra.mxu0 0
      %2148 = vmatprep.subr.bf16.mxu0 0
      %2149 = vmatpush1.bf16.xpose.msra.mxu0 0
      %2150 = vmatprep.subr.bf16.mxu0 0
      %2151 = vmatpush1.bf16.xpose.msra.mxu0 0
      %2152 = vmatprep.subr.bf16.mxu0 0
      %2153 = vmatpush1.bf16.xpose.msra.mxu0 0
      %2154 = vmatprep.subr.bf16.mxu0 0
      %2155 = vmatpush1.bf16.xpose.msra.mxu0 %v2138
      %2156 = vmatprep.subr.bf16.mxu0 0
      %2157 = vmatpush2.bf16.xpose.msra.mxu0 0
      %2158 = vmatprep.subr.bf16.mxu0 0
      %2159 = vmatpush2.bf16.xpose.msra.mxu0 0
      %2160 = vmatprep.subr.bf16.mxu0 0
      %2161 = vmatpush2.bf16.xpose.msra.mxu0 0
      %2162 = vmatprep.subr.bf16.mxu0 0
      %2163 = vmatpush2.bf16.xpose.msra.mxu0 0
      %2164 = vmatprep.subr.bf16.mxu0 0
      %2165 = vmatpush2.bf16.xpose.msra.mxu0 0
      %2166 = vmatprep.subr.bf16.mxu0 0
      %2167 = vmatpush2.bf16.xpose.msra.mxu0 0
      %2168 = vmatprep.subr.bf16.mxu0 0
      %2169 = vmatpush2.bf16.xpose.msra.mxu0 0
      %2170 = vmatprep.subr.bf16.mxu0 0
      %2171 = vmatpush2.bf16.xpose.msra.mxu0 0
      %2172 = vmatprep.mubr.bf16.mxu0 0
      %2173 = vmatmul.mubr.bf16.gmra.mxu0 %v2135
      %v2174 = vpop.f32.mrf.mxu0
      %v2175 = vadd.f32 0.0, %v2174
      %v2176 = vpop.f32.mrf.mxu0
      %v2177 = vpop.f32.mrf.mxu0
      %v2178 = vpop.f32.mrf.mxu0
      %2179 = vdwg.mxu0
      %vm2180 = vcmask 64512
      %v2181 = vsel %vm2180, %v1853, -inf
      %2182 = vmax.xlane.f32.xlu0 %v2181
      %v2183 = vpop.xlane.xlu0 %2182
      %v2184 = vsel %vm2180, %v1899, -inf
      %2185 = vmax.xlane.f32.xlu0 %v2184
      %v2186 = vpop.xlane.xlu0 %2185
      %v2187 = vsel %vm2180, %v1945, -inf
      %2188 = vmax.xlane.f32.xlu0 %v2187
      %v2189 = vpop.xlane.xlu0 %2188
      %v2190 = vsel %vm2180, %v1991, -inf
      %2191 = vmax.xlane.f32.xlu0 %v2190
      %v2192 = vpop.xlane.xlu0 %2191
      %v2193 = vsel %vm2180, %v2037, -inf
      %2194 = vmax.xlane.f32.xlu0 %v2193
      %v2195 = vpop.xlane.xlu0 %2194
      %v2196 = vsel %vm2180, %v2083, -inf
      %2197 = vmax.xlane.f32.xlu0 %v2196
      %v2198 = vpop.xlane.xlu0 %2197
      %v2199 = vsel %vm2180, %v2129, -inf
      %2200 = vmax.xlane.f32.xlu0 %v2199
      %v2201 = vpop.xlane.xlu0 %2200
      %v2202 = vsel %vm2180, %v2175, -inf
      %2203 = vmax.xlane.f32.xlu0 %v2202
      %v2204 = vpop.xlane.xlu0 %2203
      %v2205 = vsub.f32 %v1853, %v2183
      %v2206 = vsub.f32 %v1899, %v2186
      %v2207 = vsub.f32 %v1945, %v2189
      %v2208 = vsub.f32 %v1991, %v2192
      %v2209 = vsub.f32 %v2037, %v2195
      %v2210 = vsub.f32 %v2083, %v2198
      %v2211 = vsub.f32 %v2129, %v2201
      %v2212 = vsub.f32 %v2175, %v2204
      %v2213 = vmul.f32 %v2205, 1.442695
      %v2214 = vpow.pop %v2213
      %v2215 = vmul.f32 %v2206, 1.442695
      %v2216 = vpow.pop %v2215
      %v2217 = vmul.f32 %v2207, 1.442695
      %v2218 = vpow.pop %v2217
      %v2219 = vmul.f32 %v2208, 1.442695
      %v2220 = vpow.pop %v2219
      %v2221 = vmul.f32 %v2209, 1.442695
      %v2222 = vpow.pop %v2221
      %v2223 = vmul.f32 %v2210, 1.442695
      %v2224 = vpow.pop %v2223
      %v2225 = vmul.f32 %v2211, 1.442695
      %v2226 = vpow.pop %v2225
      %v2227 = vmul.f32 %v2212, 1.442695
      %v2228 = vpow.pop %v2227
      %v2229 = vsel %vm2180, %v2214, 0.0
      %2230 = vadd.xlane.f32.xlu0 %v2229
      %v2231 = vpop.xlane.xlu0 %2230
      %v2232 = vsel %vm2180, %v2216, 0.0
      %2233 = vadd.xlane.f32.xlu0 %v2232
      %v2234 = vpop.xlane.xlu0 %2233
      %v2235 = vsel %vm2180, %v2218, 0.0
      %2236 = vadd.xlane.f32.xlu0 %v2235
      %v2237 = vpop.xlane.xlu0 %2236
      %v2238 = vsel %vm2180, %v2220, 0.0
      %2239 = vadd.xlane.f32.xlu0 %v2238
      %v2240 = vpop.xlane.xlu0 %2239
      %v2241 = vsel %vm2180, %v2222, 0.0
      %2242 = vadd.xlane.f32.xlu0 %v2241
      %v2243 = vpop.xlane.xlu0 %2242
      %v2244 = vsel %vm2180, %v2224, 0.0
      %2245 = vadd.xlane.f32.xlu0 %v2244
      %v2246 = vpop.xlane.xlu0 %2245
      %v2247 = vsel %vm2180, %v2226, 0.0
      %2248 = vadd.xlane.f32.xlu0 %v2247
      %v2249 = vpop.xlane.xlu0 %2248
      %v2250 = vsel %vm2180, %v2228, 0.0
      %2251 = vadd.xlane.f32.xlu0 %v2250
      %v2252 = vpop.xlane.xlu0 %2251
      %v2253 = vrcp.pop %v2231
      %v2254 = vrcp.pop %v2234
      %v2255 = vrcp.pop %v2237
      %v2256 = vrcp.pop %v2240
      %v2257 = vrcp.pop %v2243
      %v2258 = vrcp.pop %v2246
      %v2259 = vrcp.pop %v2249
      %v2260 = vrcp.pop %v2252
      %v2261 = vmul.f32 %v2214, %v2253
      %v2262 = vmul.f32 %v2216, %v2254
      %v2263 = vmul.f32 %v2218, %v2255
      %v2264 = vmul.f32 %v2220, %v2256
      %v2265 = vmul.f32 %v2222, %v2257
      %v2266 = vmul.f32 %v2224, %v2258
      %v2267 = vmul.f32 %v2226, %v2259
      %v2268 = vmul.f32 %v2228, %v2260
      %v2269 = vpack.c.bf16 %v2261, %v2261
      %v2270 = vpack.c.bf16 %v2262, %v2262
      %v2271 = vpack.c.bf16 %v2263, %v2263
      %v2272 = vpack.c.bf16 %v2264, %v2264
      %v2273 = vpack.c.bf16 %v2265, %v2265
      %v2274 = vpack.c.bf16 %v2266, %v2266
      %v2275 = vpack.c.bf16 %v2267, %v2267
      %v2276 = vpack.c.bf16 %v2268, %v2268
      %v2278 = vsel %vm2180, %v2269, 0
      %vm2280 = vcmask 1043456
      %v2282 = vsel %vm2280, %v1789, 0
      %2284 = vmatprep.subr.bf16.mxu0 0
      %2285 = vmatpush1.bf16.msra.mxu0 0
      %2286 = vmatprep.subr.bf16.mxu0 0
      %2287 = vmatpush1.bf16.msra.mxu0 0
      %2288 = vmatprep.subr.bf16.mxu0 0
      %2289 = vmatpush1.bf16.msra.mxu0 0
      %2290 = vmatprep.subr.bf16.mxu0 0
      %2291 = vmatpush1.bf16.msra.mxu0 0
      %2292 = vmatprep.subr.bf16.mxu0 0
      %2293 = vmatpush1.bf16.msra.mxu0 0
      %2294 = vmatprep.subr.bf16.mxu0 0
      %2295 = vmatpush1.bf16.msra.mxu0 0
      %2296 = vmatprep.subr.bf16.mxu0 0
      %2297 = vmatpush1.bf16.msra.mxu0 0
      %2298 = vmatprep.subr.bf16.mxu0 0
      %2299 = vmatpush1.bf16.msra.mxu0 %v2282
      %2300 = vmatprep.subr.bf16.mxu0 0
      %2301 = vmatpush2.bf16.msra.mxu0 0
      %2302 = vmatprep.subr.bf16.mxu0 0
      %2303 = vmatpush2.bf16.msra.mxu0 0
      %2304 = vmatprep.subr.bf16.mxu0 0
      %2305 = vmatpush2.bf16.msra.mxu0 0
      %2306 = vmatprep.subr.bf16.mxu0 0
      %2307 = vmatpush2.bf16.msra.mxu0 0
      %2308 = vmatprep.subr.bf16.mxu0 0
      %2309 = vmatpush2.bf16.msra.mxu0 0
      %2310 = vmatprep.subr.bf16.mxu0 0
      %2311 = vmatpush2.bf16.msra.mxu0 0
      %2312 = vmatprep.subr.bf16.mxu0 0
      %2313 = vmatpush2.bf16.msra.mxu0 0
      %2314 = vmatprep.subr.bf16.mxu0 0
      %2315 = vmatpush2.bf16.msra.mxu0 0
      %2316 = vmatprep.mubr.bf16.mxu0 0
      %2317 = vmatmul.mubr.bf16.gmra.mxu0 %v2278
      %v2318 = vpop.f32.mrf.mxu0
      %v2319 = vadd.f32 0.0, %v2318
      %v2320 = vpop.f32.mrf.mxu0
      %v2321 = vpop.f32.mrf.mxu0
      %v2322 = vpop.f32.mrf.mxu0
      %2323 = vdwg.mxu0
      %v2325 = vsel %vm2180, %v2270, 0
      %v2328 = vsel %vm2280, %v1792, 0
      %2330 = vmatprep.subr.bf16.mxu0 0
      %2331 = vmatpush1.bf16.msra.mxu0 0
      %2332 = vmatprep.subr.bf16.mxu0 0
      %2333 = vmatpush1.bf16.msra.mxu0 0
      %2334 = vmatprep.subr.bf16.mxu0 0
      %2335 = vmatpush1.bf16.msra.mxu0 0
      %2336 = vmatprep.subr.bf16.mxu0 0
      %2337 = vmatpush1.bf16.msra.mxu0 0
      %2338 = vmatprep.subr.bf16.mxu0 0
      %2339 = vmatpush1.bf16.msra.mxu0 0
      %2340 = vmatprep.subr.bf16.mxu0 0
      %2341 = vmatpush1.bf16.msra.mxu0 0
      %2342 = vmatprep.subr.bf16.mxu0 0
      %2343 = vmatpush1.bf16.msra.mxu0 0
      %2344 = vmatprep.subr.bf16.mxu0 0
      %2345 = vmatpush1.bf16.msra.mxu0 %v2328
      %2346 = vmatprep.subr.bf16.mxu0 0
      %2347 = vmatpush2.bf16.msra.mxu0 0
      %2348 = vmatprep.subr.bf16.mxu0 0
      %2349 = vmatpush2.bf16.msra.mxu0 0
      %2350 = vmatprep.subr.bf16.mxu0 0
      %2351 = vmatpush2.bf16.msra.mxu0 0
      %2352 = vmatprep.subr.bf16.mxu0 0
      %2353 = vmatpush2.bf16.msra.mxu0 0
      %2354 = vmatprep.subr.bf16.mxu0 0
      %2355 = vmatpush2.bf16.msra.mxu0 0
      %2356 = vmatprep.subr.bf16.mxu0 0
      %2357 = vmatpush2.bf16.msra.mxu0 0
      %2358 = vmatprep.subr.bf16.mxu0 0
      %2359 = vmatpush2.bf16.msra.mxu0 0
      %2360 = vmatprep.subr.bf16.mxu0 0
      %2361 = vmatpush2.bf16.msra.mxu0 0
      %2362 = vmatprep.mubr.bf16.mxu0 0
      %2363 = vmatmul.mubr.bf16.gmra.mxu0 %v2325
      %v2364 = vpop.f32.mrf.mxu0
      %v2365 = vadd.f32 0.0, %v2364
      %v2366 = vpop.f32.mrf.mxu0
      %v2367 = vpop.f32.mrf.mxu0
      %v2368 = vpop.f32.mrf.mxu0
      %2369 = vdwg.mxu0
      %v2371 = vsel %vm2180, %v2271, 0
      %v2374 = vsel %vm2280, %v1795, 0
      %2376 = vmatprep.subr.bf16.mxu0 0
      %2377 = vmatpush1.bf16.msra.mxu0 0
      %2378 = vmatprep.subr.bf16.mxu0 0
      %2379 = vmatpush1.bf16.msra.mxu0 0
      %2380 = vmatprep.subr.bf16.mxu0 0
      %2381 = vmatpush1.bf16.msra.mxu0 0
      %2382 = vmatprep.subr.bf16.mxu0 0
      %2383 = vmatpush1.bf16.msra.mxu0 0
      %2384 = vmatprep.subr.bf16.mxu0 0
      %2385 = vmatpush1.bf16.msra.mxu0 0
      %2386 = vmatprep.subr.bf16.mxu0 0
      %2387 = vmatpush1.bf16.msra.mxu0 0
      %2388 = vmatprep.subr.bf16.mxu0 0
      %2389 = vmatpush1.bf16.msra.mxu0 0
      %2390 = vmatprep.subr.bf16.mxu0 0
      %2391 = vmatpush1.bf16.msra.mxu0 %v2374
      %2392 = vmatprep.subr.bf16.mxu0 0
      %2393 = vmatpush2.bf16.msra.mxu0 0
      %2394 = vmatprep.subr.bf16.mxu0 0
      %2395 = vmatpush2.bf16.msra.mxu0 0
      %2396 = vmatprep.subr.bf16.mxu0 0
      %2397 = vmatpush2.bf16.msra.mxu0 0
      %2398 = vmatprep.subr.bf16.mxu0 0
      %2399 = vmatpush2.bf16.msra.mxu0 0
      %2400 = vmatprep.subr.bf16.mxu0 0
      %2401 = vmatpush2.bf16.msra.mxu0 0
      %2402 = vmatprep.subr.bf16.mxu0 0
      %2403 = vmatpush2.bf16.msra.mxu0 0
      %2404 = vmatprep.subr.bf16.mxu0 0
      %2405 = vmatpush2.bf16.msra.mxu0 0
      %2406 = vmatprep.subr.bf16.mxu0 0
      %2407 = vmatpush2.bf16.msra.mxu0 0
      %2408 = vmatprep.mubr.bf16.mxu0 0
      %2409 = vmatmul.mubr.bf16.gmra.mxu0 %v2371
      %v2410 = vpop.f32.mrf.mxu0
      %v2411 = vadd.f32 0.0, %v2410
      %v2412 = vpop.f32.mrf.mxu0
      %v2413 = vpop.f32.mrf.mxu0
      %v2414 = vpop.f32.mrf.mxu0
      %2415 = vdwg.mxu0
      %v2417 = vsel %vm2180, %v2272, 0
      %v2420 = vsel %vm2280, %v1798, 0
      %2422 = vmatprep.subr.bf16.mxu0 0
      %2423 = vmatpush1.bf16.msra.mxu0 0
      %2424 = vmatprep.subr.bf16.mxu0 0
      %2425 = vmatpush1.bf16.msra.mxu0 0
      %2426 = vmatprep.subr.bf16.mxu0 0
      %2427 = vmatpush1.bf16.msra.mxu0 0
      %2428 = vmatprep.subr.bf16.mxu0 0
      %2429 = vmatpush1.bf16.msra.mxu0 0
      %2430 = vmatprep.subr.bf16.mxu0 0
      %2431 = vmatpush1.bf16.msra.mxu0 0
      %2432 = vmatprep.subr.bf16.mxu0 0
      %2433 = vmatpush1.bf16.msra.mxu0 0
      %2434 = vmatprep.subr.bf16.mxu0 0
      %2435 = vmatpush1.bf16.msra.mxu0 0
      %2436 = vmatprep.subr.bf16.mxu0 0
      %2437 = vmatpush1.bf16.msra.mxu0 %v2420
      %2438 = vmatprep.subr.bf16.mxu0 0
      %2439 = vmatpush2.bf16.msra.mxu0 0
      %2440 = vmatprep.subr.bf16.mxu0 0
      %2441 = vmatpush2.bf16.msra.mxu0 0
      %2442 = vmatprep.subr.bf16.mxu0 0
      %2443 = vmatpush2.bf16.msra.mxu0 0
      %2444 = vmatprep.subr.bf16.mxu0 0
      %2445 = vmatpush2.bf16.msra.mxu0 0
      %2446 = vmatprep.subr.bf16.mxu0 0
      %2447 = vmatpush2.bf16.msra.mxu0 0
      %2448 = vmatprep.subr.bf16.mxu0 0
      %2449 = vmatpush2.bf16.msra.mxu0 0
      %2450 = vmatprep.subr.bf16.mxu0 0
      %2451 = vmatpush2.bf16.msra.mxu0 0
      %2452 = vmatprep.subr.bf16.mxu0 0
      %2453 = vmatpush2.bf16.msra.mxu0 0
      %2454 = vmatprep.mubr.bf16.mxu0 0
      %2455 = vmatmul.mubr.bf16.gmra.mxu0 %v2417
      %v2456 = vpop.f32.mrf.mxu0
      %v2457 = vadd.f32 0.0, %v2456
      %v2458 = vpop.f32.mrf.mxu0
      %v2459 = vpop.f32.mrf.mxu0
      %v2460 = vpop.f32.mrf.mxu0
      %2461 = vdwg.mxu0
      %v2463 = vsel %vm2180, %v2273, 0
      %v2466 = vsel %vm2280, %v1801, 0
      %2468 = vmatprep.subr.bf16.mxu0 0
      %2469 = vmatpush1.bf16.msra.mxu0 0
      %2470 = vmatprep.subr.bf16.mxu0 0
      %2471 = vmatpush1.bf16.msra.mxu0 0
      %2472 = vmatprep.subr.bf16.mxu0 0
      %2473 = vmatpush1.bf16.msra.mxu0 0
      %2474 = vmatprep.subr.bf16.mxu0 0
      %2475 = vmatpush1.bf16.msra.mxu0 0
      %2476 = vmatprep.subr.bf16.mxu0 0
      %2477 = vmatpush1.bf16.msra.mxu0 0
      %2478 = vmatprep.subr.bf16.mxu0 0
      %2479 = vmatpush1.bf16.msra.mxu0 0
      %2480 = vmatprep.subr.bf16.mxu0 0
      %2481 = vmatpush1.bf16.msra.mxu0 0
      %2482 = vmatprep.subr.bf16.mxu0 0
      %2483 = vmatpush1.bf16.msra.mxu0 %v2466
      %2484 = vmatprep.subr.bf16.mxu0 0
      %2485 = vmatpush2.bf16.msra.mxu0 0
      %2486 = vmatprep.subr.bf16.mxu0 0
      %2487 = vmatpush2.bf16.msra.mxu0 0
      %2488 = vmatprep.subr.bf16.mxu0 0
      %2489 = vmatpush2.bf16.msra.mxu0 0
      %2490 = vmatprep.subr.bf16.mxu0 0
      %2491 = vmatpush2.bf16.msra.mxu0 0
      %2492 = vmatprep.subr.bf16.mxu0 0
      %2493 = vmatpush2.bf16.msra.mxu0 0
      %2494 = vmatprep.subr.bf16.mxu0 0
      %2495 = vmatpush2.bf16.msra.mxu0 0
      %2496 = vmatprep.subr.bf16.mxu0 0
      %2497 = vmatpush2.bf16.msra.mxu0 0
      %2498 = vmatprep.subr.bf16.mxu0 0
      %2499 = vmatpush2.bf16.msra.mxu0 0
      %2500 = vmatprep.mubr.bf16.mxu0 0
      %2501 = vmatmul.mubr.bf16.gmra.mxu0 %v2463
      %v2502 = vpop.f32.mrf.mxu0
      %v2503 = vadd.f32 0.0, %v2502
      %v2504 = vpop.f32.mrf.mxu0
      %v2505 = vpop.f32.mrf.mxu0
      %v2506 = vpop.f32.mrf.mxu0
      %2507 = vdwg.mxu0
      %v2509 = vsel %vm2180, %v2274, 0
      %v2512 = vsel %vm2280, %v1804, 0
      %2514 = vmatprep.subr.bf16.mxu0 0
      %2515 = vmatpush1.bf16.msra.mxu0 0
      %2516 = vmatprep.subr.bf16.mxu0 0
      %2517 = vmatpush1.bf16.msra.mxu0 0
      %2518 = vmatprep.subr.bf16.mxu0 0
      %2519 = vmatpush1.bf16.msra.mxu0 0
      %2520 = vmatprep.subr.bf16.mxu0 0
      %2521 = vmatpush1.bf16.msra.mxu0 0
      %2522 = vmatprep.subr.bf16.mxu0 0
      %2523 = vmatpush1.bf16.msra.mxu0 0
      %2524 = vmatprep.subr.bf16.mxu0 0
      %2525 = vmatpush1.bf16.msra.mxu0 0
      %2526 = vmatprep.subr.bf16.mxu0 0
      %2527 = vmatpush1.bf16.msra.mxu0 0
      %2528 = vmatprep.subr.bf16.mxu0 0
      %2529 = vmatpush1.bf16.msra.mxu0 %v2512
      %2530 = vmatprep.subr.bf16.mxu0 0
      %2531 = vmatpush2.bf16.msra.mxu0 0
      %2532 = vmatprep.subr.bf16.mxu0 0
      %2533 = vmatpush2.bf16.msra.mxu0 0
      %2534 = vmatprep.subr.bf16.mxu0 0
      %2535 = vmatpush2.bf16.msra.mxu0 0
      %2536 = vmatprep.subr.bf16.mxu0 0
      %2537 = vmatpush2.bf16.msra.mxu0 0
      %2538 = vmatprep.subr.bf16.mxu0 0
      %2539 = vmatpush2.bf16.msra.mxu0 0
      %2540 = vmatprep.subr.bf16.mxu0 0
      %2541 = vmatpush2.bf16.msra.mxu0 0
      %2542 = vmatprep.subr.bf16.mxu0 0
      %2543 = vmatpush2.bf16.msra.mxu0 0
      %2544 = vmatprep.subr.bf16.mxu0 0
      %2545 = vmatpush2.bf16.msra.mxu0 0
      %2546 = vmatprep.mubr.bf16.mxu0 0
      %2547 = vmatmul.mubr.bf16.gmra.mxu0 %v2509
      %v2548 = vpop.f32.mrf.mxu0
      %v2549 = vadd.f32 0.0, %v2548
      %v2550 = vpop.f32.mrf.mxu0
      %v2551 = vpop.f32.mrf.mxu0
      %v2552 = vpop.f32.mrf.mxu0
      %2553 = vdwg.mxu0
      %v2555 = vsel %vm2180, %v2275, 0
      %v2558 = vsel %vm2280, %v1807, 0
      %2560 = vmatprep.subr.bf16.mxu0 0
      %2561 = vmatpush1.bf16.msra.mxu0 0
      %2562 = vmatprep.subr.bf16.mxu0 0
      %2563 = vmatpush1.bf16.msra.mxu0 0
      %2564 = vmatprep.subr.bf16.mxu0 0
      %2565 = vmatpush1.bf16.msra.mxu0 0
      %2566 = vmatprep.subr.bf16.mxu0 0
      %2567 = vmatpush1.bf16.msra.mxu0 0
      %2568 = vmatprep.subr.bf16.mxu0 0
      %2569 = vmatpush1.bf16.msra.mxu0 0
      %2570 = vmatprep.subr.bf16.mxu0 0
      %2571 = vmatpush1.bf16.msra.mxu0 0
      %2572 = vmatprep.subr.bf16.mxu0 0
      %2573 = vmatpush1.bf16.msra.mxu0 0
      %2574 = vmatprep.subr.bf16.mxu0 0
      %2575 = vmatpush1.bf16.msra.mxu0 %v2558
      %2576 = vmatprep.subr.bf16.mxu0 0
      %2577 = vmatpush2.bf16.msra.mxu0 0
      %2578 = vmatprep.subr.bf16.mxu0 0
      %2579 = vmatpush2.bf16.msra.mxu0 0
      %2580 = vmatprep.subr.bf16.mxu0 0
      %2581 = vmatpush2.bf16.msra.mxu0 0
      %2582 = vmatprep.subr.bf16.mxu0 0
      %2583 = vmatpush2.bf16.msra.mxu0 0
      %2584 = vmatprep.subr.bf16.mxu0 0
      %2585 = vmatpush2.bf16.msra.mxu0 0
      %2586 = vmatprep.subr.bf16.mxu0 0
      %2587 = vmatpush2.bf16.msra.mxu0 0
      %2588 = vmatprep.subr.bf16.mxu0 0
      %2589 = vmatpush2.bf16.msra.mxu0 0
      %2590 = vmatprep.subr.bf16.mxu0 0
      %2591 = vmatpush2.bf16.msra.mxu0 0
      %2592 = vmatprep.mubr.bf16.mxu0 0
      %2593 = vmatmul.mubr.bf16.gmra.mxu0 %v2555
      %v2594 = vpop.f32.mrf.mxu0
      %v2595 = vadd.f32 0.0, %v2594
      %v2596 = vpop.f32.mrf.mxu0
      %v2597 = vpop.f32.mrf.mxu0
      %v2598 = vpop.f32.mrf.mxu0
      %2599 = vdwg.mxu0
      %v2601 = vsel %vm2180, %v2276, 0
      %v2604 = vsel %vm2280, %v1810, 0
      %2606 = vmatprep.subr.bf16.mxu0 0
      %2607 = vmatpush1.bf16.msra.mxu0 0
      %2608 = vmatprep.subr.bf16.mxu0 0
      %2609 = vmatpush1.bf16.msra.mxu0 0
      %2610 = vmatprep.subr.bf16.mxu0 0
      %2611 = vmatpush1.bf16.msra.mxu0 0
      %2612 = vmatprep.subr.bf16.mxu0 0
      %2613 = vmatpush1.bf16.msra.mxu0 0
      %2614 = vmatprep.subr.bf16.mxu0 0
      %2615 = vmatpush1.bf16.msra.mxu0 0
      %2616 = vmatprep.subr.bf16.mxu0 0
      %2617 = vmatpush1.bf16.msra.mxu0 0
      %2618 = vmatprep.subr.bf16.mxu0 0
      %2619 = vmatpush1.bf16.msra.mxu0 0
      %2620 = vmatprep.subr.bf16.mxu0 0
      %2621 = vmatpush1.bf16.msra.mxu0 %v2604
      %2622 = vmatprep.subr.bf16.mxu0 0
      %2623 = vmatpush2.bf16.msra.mxu0 0
      %2624 = vmatprep.subr.bf16.mxu0 0
      %2625 = vmatpush2.bf16.msra.mxu0 0
      %2626 = vmatprep.subr.bf16.mxu0 0
      %2627 = vmatpush2.bf16.msra.mxu0 0
      %2628 = vmatprep.subr.bf16.mxu0 0
      %2629 = vmatpush2.bf16.msra.mxu0 0
      %2630 = vmatprep.subr.bf16.mxu0 0
      %2631 = vmatpush2.bf16.msra.mxu0 0
      %2632 = vmatprep.subr.bf16.mxu0 0
      %2633 = vmatpush2.bf16.msra.mxu0 0
      %2634 = vmatprep.subr.bf16.mxu0 0
      %2635 = vmatpush2.bf16.msra.mxu0 0
      %2636 = vmatprep.subr.bf16.mxu0 0
      %2637 = vmatpush2.bf16.msra.mxu0 0
      %2638 = vmatprep.mubr.bf16.mxu0 0
      %2639 = vmatmul.mubr.bf16.gmra.mxu0 %v2601
      %v2640 = vpop.f32.mrf.mxu0
      %v2641 = vadd.f32 0.0, %v2640
      %v2642 = vpop.f32.mrf.mxu0
      %v2643 = vpop.f32.mrf.mxu0
      %v2644 = vpop.f32.mrf.mxu0
      %2645 = vdwg.mxu0
      %v2646 = vpack.c.bf16 %v2319, %v2319
      %v2648 = vunpack.c.l.s4 1983009808
      %v2649 = vunpack.c.0.s8 %v2648
      %v2650 = vlaneseq
      %v2651 = vshrl.u32 %v2650, 7
      %v2652 = vsub.s32 %v2649, %v2651
      %v2653 = vrot.slane %v2646, %v2652
      %v2654 = vpack.c.bf16 %v2411, %v2411
      %v2656 = vunpack.c.l.s4 1983009808
      %v2657 = vunpack.c.0.s8 %v2656
      %v2658 = vlaneseq
      %v2659 = vshrl.u32 %v2658, 7
      %v2660 = vsub.s32 %v2657, %v2659
      %v2661 = vrot.slane %v2654, %v2660
      %v2662 = vcombine.low %v2653, %v2661
      %v2663 = vcombine.high %v2653, %v2661
      %v2665 = vunpack.c.l.s4 1934713408
      %v2666 = vunpack.c.0.s8 %v2665
      %v2667 = vlaneseq
      %v2668 = vshrl.u32 %v2667, 7
      %v2669 = vsub.s32 %v2666, %v2668
      %v2670 = vrot.slane %v2662, %v2669
      %v2672 = vunpack.c.l.s4 1934713408
      %v2673 = vunpack.c.0.s8 %v2672
      %v2674 = vlaneseq
      %v2675 = vshrl.u32 %v2674, 7
      %v2676 = vsub.s32 %v2673, %v2675
      %v2677 = vrot.slane %v2663, %v2676
      %v2678 = vcombine.high %v2670, 0
      %v2679 = vcombine.high %v2677, 0
      %v2680 = vpack.c.bf16 %v2365, %v2365
      %v2682 = vunpack.c.l.s4 1983009808
      %v2683 = vunpack.c.0.s8 %v2682
      %v2684 = vlaneseq
      %v2685 = vshrl.u32 %v2684, 7
      %v2686 = vsub.s32 %v2683, %v2685
      %v2687 = vrot.slane %v2680, %v2686
      %v2688 = vpack.c.bf16 %v2457, %v2457
      %v2690 = vunpack.c.l.s4 1983009808
      %v2691 = vunpack.c.0.s8 %v2690
      %v2692 = vlaneseq
      %v2693 = vshrl.u32 %v2692, 7
      %v2694 = vsub.s32 %v2691, %v2693
      %v2695 = vrot.slane %v2688, %v2694
      %v2696 = vcombine.low %v2687, %v2695
      %v2697 = vcombine.high %v2687, %v2695
      %v2699 = vunpack.c.l.s4 1934713408
      %v2700 = vunpack.c.0.s8 %v2699
      %v2701 = vlaneseq
      %v2702 = vshrl.u32 %v2701, 7
      %v2703 = vsub.s32 %v2700, %v2702
      %v2704 = vrot.slane %v2696, %v2703
      %v2706 = vunpack.c.l.s4 1934713408
      %v2707 = vunpack.c.0.s8 %v2706
      %v2708 = vlaneseq
      %v2709 = vshrl.u32 %v2708, 7
      %v2710 = vsub.s32 %v2707, %v2709
      %v2711 = vrot.slane %v2697, %v2710
      %v2712 = vcombine.high %v2704, 0
      %v2713 = vcombine.high %v2711, 0
      %v2714 = vpack.c.bf16 %v2503, %v2503
      %v2716 = vunpack.c.l.s4 1983009808
      %v2717 = vunpack.c.0.s8 %v2716
      %v2718 = vlaneseq
      %v2719 = vshrl.u32 %v2718, 7
      %v2720 = vsub.s32 %v2717, %v2719
      %v2721 = vrot.slane %v2714, %v2720
      %v2722 = vpack.c.bf16 %v2595, %v2595
      %v2724 = vunpack.c.l.s4 1983009808
      %v2725 = vunpack.c.0.s8 %v2724
      %v2726 = vlaneseq
      %v2727 = vshrl.u32 %v2726, 7
      %v2728 = vsub.s32 %v2725, %v2727
      %v2729 = vrot.slane %v2722, %v2728
      %v2730 = vcombine.low %v2721, %v2729
      %v2731 = vcombine.high %v2721, %v2729
      %v2733 = vunpack.c.l.s4 1934713408
      %v2734 = vunpack.c.0.s8 %v2733
      %v2735 = vlaneseq
      %v2736 = vshrl.u32 %v2735, 7
      %v2737 = vsub.s32 %v2734, %v2736
      %v2738 = vrot.slane %v2730, %v2737
      %v2740 = vunpack.c.l.s4 1934713408
      %v2741 = vunpack.c.0.s8 %v2740
      %v2742 = vlaneseq
      %v2743 = vshrl.u32 %v2742, 7
      %v2744 = vsub.s32 %v2741, %v2743
      %v2745 = vrot.slane %v2731, %v2744
      %v2746 = vcombine.high %v2738, 0
      %v2747 = vcombine.high %v2745, 0
      %v2748 = vpack.c.bf16 %v2549, %v2549
      %v2750 = vunpack.c.l.s4 1983009808
      %v2751 = vunpack.c.0.s8 %v2750
      %v2752 = vlaneseq
      %v2753 = vshrl.u32 %v2752, 7
      %v2754 = vsub.s32 %v2751, %v2753
      %v2755 = vrot.slane %v2748, %v2754
      %v2756 = vpack.c.bf16 %v2641, %v2641
      %v2758 = vunpack.c.l.s4 1983009808
      %v2759 = vunpack.c.0.s8 %v2758
      %v2760 = vlaneseq
      %v2761 = vshrl.u32 %v2760, 7
      %v2762 = vsub.s32 %v2759, %v2761
      %v2763 = vrot.slane %v2756, %v2762
      %v2764 = vcombine.low %v2755, %v2763
      %v2765 = vcombine.high %v2755, %v2763
      %v2767 = vunpack.c.l.s4 1934713408
      %v2768 = vunpack.c.0.s8 %v2767
      %v2769 = vlaneseq
      %v2770 = vshrl.u32 %v2769, 7
      %v2771 = vsub.s32 %v2768, %v2770
      %v2772 = vrot.slane %v2764, %v2771
      %v2774 = vunpack.c.l.s4 1934713408
      %v2775 = vunpack.c.0.s8 %v2774
      %v2776 = vlaneseq
      %v2777 = vshrl.u32 %v2776, 7
      %v2778 = vsub.s32 %v2775, %v2777
      %v2779 = vrot.slane %v2765, %v2778
      %v2780 = vcombine.high %v2772, 0
      %v2781 = vcombine.high %v2779, 0
      %v2784 = vpack.i.b16 %v2704, %v2670
      %v2786 = vshrl.u32 %v2670, 16
      %v2787 = vshrl.u32 %v2704, 16
      %v2788 = vpack.i.b16 %v2787, %v2786
      %v2792 = vpack.i.b16 %v2712, %v2678
      %v2794 = vshrl.u32 %v2678, 16
      %v2795 = vshrl.u32 %v2712, 16
      %v2796 = vpack.i.b16 %v2795, %v2794
      %v2800 = vpack.i.b16 %v2711, %v2677
      %v2802 = vshrl.u32 %v2677, 16
      %v2803 = vshrl.u32 %v2711, 16
      %v2804 = vpack.i.b16 %v2803, %v2802
      %v2808 = vpack.i.b16 %v2713, %v2679
      %v2810 = vshrl.u32 %v2679, 16
      %v2811 = vshrl.u32 %v2713, 16
      %v2812 = vpack.i.b16 %v2811, %v2810
      %v2816 = vpack.i.b16 %v2772, %v2738
      %v2818 = vshrl.u32 %v2738, 16
      %v2819 = vshrl.u32 %v2772, 16
      %v2820 = vpack.i.b16 %v2819, %v2818
      %v2824 = vpack.i.b16 %v2780, %v2746
      %v2826 = vshrl.u32 %v2746, 16
      %v2827 = vshrl.u32 %v2780, 16
      %v2828 = vpack.i.b16 %v2827, %v2826
      %v2832 = vpack.i.b16 %v2779, %v2745
      %v2834 = vshrl.u32 %v2745, 16
      %v2835 = vshrl.u32 %v2779, 16
      %v2836 = vpack.i.b16 %v2835, %v2834
      %v2840 = vpack.i.b16 %v2781, %v2747
      %v2842 = vshrl.u32 %v2747, 16
      %v2843 = vshrl.u32 %v2781, 16
      %v2844 = vpack.i.b16 %v2843, %v2842
      %v2846 = vcombine.low %v2784, %v2800
      %v2848 = vunpack.c.l.s4 1983009808
      %v2849 = vunpack.c.0.s8 %v2848
      %v2850 = vlaneseq
      %v2851 = vshrl.u32 %v2850, 7
      %v2852 = vsub.s32 %v2849, %v2851
      %v2853 = vrot.slane %v2846, %v2852
      %v2854 = vcombine.low %v2792, %v2808
      %v2856 = vunpack.c.l.s4 1983009808
      %v2857 = vunpack.c.0.s8 %v2856
      %v2858 = vlaneseq
      %v2859 = vshrl.u32 %v2858, 7
      %v2860 = vsub.s32 %v2857, %v2859
      %v2861 = vrot.slane %v2854, %v2860
      %v2862 = vcombine.low %v2816, %v2832
      %v2864 = vunpack.c.l.s4 1983009808
      %v2865 = vunpack.c.0.s8 %v2864
      %v2866 = vlaneseq
      %v2867 = vshrl.u32 %v2866, 7
      %v2868 = vsub.s32 %v2865, %v2867
      %v2869 = vrot.slane %v2862, %v2868
      %v2870 = vcombine.low %v2824, %v2840
      %v2872 = vunpack.c.l.s4 1983009808
      %v2873 = vunpack.c.0.s8 %v2872
      %v2874 = vlaneseq
      %v2875 = vshrl.u32 %v2874, 7
      %v2876 = vsub.s32 %v2873, %v2875
      %v2877 = vrot.slane %v2870, %v2876
      %v2878 = vcombine.low %v2853, %v2861
      %v2880 = vunpack.c.l.s4 1934713408
      %v2881 = vunpack.c.0.s8 %v2880
      %v2882 = vlaneseq
      %v2883 = vshrl.u32 %v2882, 7
      %v2884 = vsub.s32 %v2881, %v2883
      %v2885 = vrot.slane %v2878, %v2884
      %v2886 = vcombine.low %v2869, %v2877
      %v2888 = vunpack.c.l.s4 1934713408
      %v2889 = vunpack.c.0.s8 %v2888
      %v2890 = vlaneseq
      %v2891 = vshrl.u32 %v2890, 7
      %v2892 = vsub.s32 %v2889, %v2891
      %v2893 = vrot.slane %v2886, %v2892
      %v2894 = vcombine.low %v2885, %v2893
      %v2895 = vcombine.high %v2885, %v2893
      %v2896 = vcombine.low %v2788, %v2804
      %v2898 = vunpack.c.l.s4 1983009808
      %v2899 = vunpack.c.0.s8 %v2898
      %v2900 = vlaneseq
      %v2901 = vshrl.u32 %v2900, 7
      %v2902 = vsub.s32 %v2899, %v2901
      %v2903 = vrot.slane %v2896, %v2902
      %v2904 = vcombine.low %v2796, %v2812
      %v2906 = vunpack.c.l.s4 1983009808
      %v2907 = vunpack.c.0.s8 %v2906
      %v2908 = vlaneseq
      %v2909 = vshrl.u32 %v2908, 7
      %v2910 = vsub.s32 %v2907, %v2909
      %v2911 = vrot.slane %v2904, %v2910
      %v2912 = vcombine.low %v2820, %v2836
      %v2914 = vunpack.c.l.s4 1983009808
      %v2915 = vunpack.c.0.s8 %v2914
      %v2916 = vlaneseq
      %v2917 = vshrl.u32 %v2916, 7
      %v2918 = vsub.s32 %v2915, %v2917
      %v2919 = vrot.slane %v2912, %v2918
      %v2920 = vcombine.low %v2828, %v2844
      %v2922 = vunpack.c.l.s4 1983009808
      %v2923 = vunpack.c.0.s8 %v2922
      %v2924 = vlaneseq
      %v2925 = vshrl.u32 %v2924, 7
      %v2926 = vsub.s32 %v2923, %v2925
      %v2927 = vrot.slane %v2920, %v2926
      %v2928 = vcombine.low %v2903, %v2911
      %v2930 = vunpack.c.l.s4 1934713408
      %v2931 = vunpack.c.0.s8 %v2930
      %v2932 = vlaneseq
      %v2933 = vshrl.u32 %v2932, 7
      %v2934 = vsub.s32 %v2931, %v2933
      %v2935 = vrot.slane %v2928, %v2934
      %v2936 = vcombine.low %v2919, %v2927
      %v2938 = vunpack.c.l.s4 1934713408
      %v2939 = vunpack.c.0.s8 %v2938
      %v2940 = vlaneseq
      %v2941 = vshrl.u32 %v2940, 7
      %v2942 = vsub.s32 %v2939, %v2941
      %v2943 = vrot.slane %v2936, %v2942
      %v2944 = vcombine.low %v2935, %v2943
      %v2945 = vcombine.high %v2935, %v2943
      %v2948 = vpack.i.b16 %v2944, %v2894
      %v2949 = vshrl.u32 %v2894, 16
      %v2950 = vshrl.u32 %v2944, 16
      %v2951 = vpack.i.b16 %v2950, %v2949
      %v2954 = vpack.i.b16 %v2945, %v2895
      %v2955 = vshrl.u32 %v2895, 16
      %v2956 = vshrl.u32 %v2945, 16
      %v2957 = vpack.i.b16 %v2956, %v2955
      %2958 = vrot.lane.b32.xlu0 %v2951, 32
      %v2959 = vpop.permute.xlu0 %2958
      %2960 = vrot.lane.b32.xlu0 %v2954, 64
      %v2961 = vpop.permute.xlu0 %2960
      %2962 = vrot.lane.b32.xlu0 %v2957, 96
      %v2963 = vpop.permute.xlu0 %2962
      %v2966 = vsel %vm1811, %v2948, %v2959
      %vm2967 = vcmask 523264
      %v2969 = vsel %vm2967, %v2966, %v2961
      %vm2970 = vcmask 785408
      %v2972 = vsel %vm2970, %v2969, %v2963
      %v2974 = vld [vmem:[%s613] sm:$0xf]
      %v2975 = vld [vmem:[%s613 + $0x4] sm:$0xf]
      %v2976 = vld [vmem:[%s613 + $0x8] sm:$0xf]
      %v2977 = vld [vmem:[%s613 + $0xc] sm:$0xf]
      %v2978 = vld [vmem:[%s613 + $0x10] sm:$0xf]
      %v2979 = vld [vmem:[%s613 + $0x14] sm:$0xf]
      %v2980 = vld [vmem:[%s613 + $0x18] sm:$0xf]
      %v2981 = vld [vmem:[%s613 + $0x1c] sm:$0xf]
      %v2982 = vld [vmem:[%s613 + $0x20] sm:$0xf]
      %v2983 = vld [vmem:[%s613 + $0x24] sm:$0xf]
      %v2984 = vld [vmem:[%s613 + $0x28] sm:$0xf]
      %v2985 = vld [vmem:[%s613 + $0x2c] sm:$0xf]
      %v2986 = vld [vmem:[%s613 + $0x30] sm:$0xf]
      %v2987 = vld [vmem:[%s613 + $0x34] sm:$0xf]
      %v2988 = vld [vmem:[%s613 + $0x38] sm:$0xf]
      %v2989 = vld [vmem:[%s613 + $0x3c] sm:$0xf]
      %v2990 = vld [vmem:[%s616] sm:$0x1]
      %v2992 = vlaneseq
      %v2993 = vshrl.u32 %v2992, 7
      %v2994 = vsub.s32 0, %v2993
      %v2995 = vrot.slane %v2990, %v2994
      %v3013 = vunpack.c.l.b16 %v2974
      %v3014 = vunpack.c.l.b16 %v2975
      %v3015 = vunpack.c.l.b16 %v2976
      %v3016 = vunpack.c.l.b16 %v2977
      %v3017 = vunpack.c.l.b16 %v2978
      %v3018 = vunpack.c.l.b16 %v2979
      %v3019 = vunpack.c.l.b16 %v2980
      %v3020 = vunpack.c.l.b16 %v2981
      %v3021 = vunpack.c.l.b16 %v2982
      %v3022 = vunpack.c.l.b16 %v2983
      %v3023 = vunpack.c.l.b16 %v2984
      %v3024 = vunpack.c.l.b16 %v2985
      %v3025 = vunpack.c.l.b16 %v2986
      %v3026 = vunpack.c.l.b16 %v2987
      %v3027 = vunpack.c.l.b16 %v2988
      %v3028 = vunpack.c.l.b16 %v2989
      %v3029 = vpack.c.b16 %v3014, %v3013
      %v3030 = vpack.c.b16 %v3016, %v3015
      %v3031 = vpack.c.b16 %v3018, %v3017
      %v3032 = vpack.c.b16 %v3020, %v3019
      %v3033 = vpack.c.b16 %v3022, %v3021
      %v3034 = vpack.c.b16 %v3024, %v3023
      %v3035 = vpack.c.b16 %v3026, %v3025
      %v3036 = vpack.c.b16 %v3028, %v3027
      %3045 = vmatprep.subr.bf16.mxu0 0
      %3046 = vmatpush1.bf16.msra.mxu0 %v3036
      %3047 = vmatprep.subr.bf16.mxu0 0
      %3048 = vmatpush1.bf16.msra.mxu0 %v3035
      %3049 = vmatprep.subr.bf16.mxu0 0
      %3050 = vmatpush1.bf16.msra.mxu0 %v3034
      %3051 = vmatprep.subr.bf16.mxu0 0
      %3052 = vmatpush1.bf16.msra.mxu0 %v3033
      %3053 = vmatprep.subr.bf16.mxu0 0
      %3054 = vmatpush1.bf16.msra.mxu0 %v3032
      %3055 = vmatprep.subr.bf16.mxu0 0
      %3056 = vmatpush1.bf16.msra.mxu0 %v3031
      %3057 = vmatprep.subr.bf16.mxu0 0
      %3058 = vmatpush1.bf16.msra.mxu0 %v3030
      %3059 = vmatprep.subr.bf16.mxu0 0
      %3060 = vmatpush1.bf16.msra.mxu0 %v3029
      %3061 = vmatprep.subr.bf16.mxu0 0
      %3062 = vmatpush2.bf16.msra.mxu0 0
      %3063 = vmatprep.subr.bf16.mxu0 0
      %3064 = vmatpush2.bf16.msra.mxu0 0
      %3065 = vmatprep.subr.bf16.mxu0 0
      %3066 = vmatpush2.bf16.msra.mxu0 0
      %3067 = vmatprep.subr.bf16.mxu0 0
      %3068 = vmatpush2.bf16.msra.mxu0 0
      %3069 = vmatprep.subr.bf16.mxu0 0
      %3070 = vmatpush2.bf16.msra.mxu0 0
      %3071 = vmatprep.subr.bf16.mxu0 0
      %3072 = vmatpush2.bf16.msra.mxu0 0
      %3073 = vmatprep.subr.bf16.mxu0 0
      %3074 = vmatpush2.bf16.msra.mxu0 0
      %3075 = vmatprep.subr.bf16.mxu0 0
      %3076 = vmatpush2.bf16.msra.mxu0 0
      %3077 = vmatprep.mubr.bf16.mxu0 0
      %3078 = vmatmul.mubr.bf16.gmra.mxu0 %v2972
      %v3079 = vpop.f32.mrf.mxu0
      %v3080 = vadd.f32 %v2995, %v3079
      %v3081 = vpop.f32.mrf.mxu0
      %v3082 = vpop.f32.mrf.mxu0
      %v3083 = vadd.f32 %v2995, %v3082
      %v3084 = vpop.f32.mrf.mxu0
      %3085 = vdwg.mxu0
      %v3086 = vadd.f32 %v660, %v3080
      %v3087 = vadd.f32 %v661, %v3083
      %v3088 = vld [vmem:[%s625] sm:$0x1]
      %v3089 = vld [vmem:[%s628] sm:$0x1]
      %3090 = vadd.xlane.f32.xlu0 %v3086
      %v3091 = vpop.xlane.xlu0 %3090
      %3092 = vadd.xlane.f32.xlu0 %v3087
      %v3093 = vpop.xlane.xlu0 %3092
      %v3094 = vmul.f32 %v3091, %v668
      %v3095 = vmul.f32 %v3093, %v668
      %v3096 = vsub.f32 %v3086, %v3094
      %v3097 = vsub.f32 %v3087, %v3095
      %v3098 = vmul.f32 %v3096, %v3096
      %v3099 = vmul.f32 %v3097, %v3097
      %3100 = vadd.xlane.f32.xlu0 %v3098
      %v3101 = vpop.xlane.xlu0 %3100
      %3102 = vadd.xlane.f32.xlu0 %v3099
      %v3103 = vpop.xlane.xlu0 %3102
      %v3104 = vmul.f32 %v3101, %v668
      %v3105 = vmul.f32 %v3103, %v668
      %v3106 = vadd.f32 %v3104, 1e-05
      %v3107 = vadd.f32 %v3105, 1e-05
      %v3108 = vrsqrt.pop %v3106
      %v3109 = vrsqrt.pop %v3107
      %v3110 = vmul.f32 %v3096, %v3108
      %v3111 = vmul.f32 %v3097, %v3109
      %v3113 = vlaneseq
      %v3114 = vshrl.u32 %v3113, 7
      %v3115 = vsub.s32 0, %v3114
      %v3116 = vrot.slane %v3088, %v3115
      %v3118 = vmul.f32 %v3110, %v3116
      %v3119 = vmul.f32 %v3111, %v3116
      %v3121 = vlaneseq
      %v3122 = vshrl.u32 %v3121, 7
      %v3123 = vsub.s32 0, %v3122
      %v3124 = vrot.slane %v3089, %v3123
      %v3126 = vadd.f32 %v3118, %v3124
      %v3127 = vadd.f32 %v3119, %v3124
      %v3128 = vpack.c.bf16 %v3127, %v3126
      %v3129 = vld [vmem:[%s633] sm:$0xf]
      %v3130 = vld [vmem:[%s633 + $0x4] sm:$0xf]
      %v3131 = vld [vmem:[%s633 + $0x8] sm:$0xf]
      %v3132 = vld [vmem:[%s633 + $0xc] sm:$0xf]
      %v3133 = vld [vmem:[%s633 + $0x10] sm:$0xf]
      %v3134 = vld [vmem:[%s633 + $0x14] sm:$0xf]
      %v3135 = vld [vmem:[%s633 + $0x18] sm:$0xf]
      %v3136 = vld [vmem:[%s633 + $0x1c] sm:$0xf]
      %v3137 = vld [vmem:[%s633 + $0x20] sm:$0xf]
      %v3138 = vld [vmem:[%s633 + $0x24] sm:$0xf]
      %v3139 = vld [vmem:[%s633 + $0x28] sm:$0xf]
      %v3140 = vld [vmem:[%s633 + $0x2c] sm:$0xf]
      %v3141 = vld [vmem:[%s633 + $0x30] sm:$0xf]
      %v3142 = vld [vmem:[%s633 + $0x34] sm:$0xf]
      %v3143 = vld [vmem:[%s633 + $0x38] sm:$0xf]
      %v3144 = vld [vmem:[%s633 + $0x3c] sm:$0xf]
      %v3145 = vld [vmem:[%s636] sm:$0x1]
      %v3147 = vlaneseq
      %v3148 = vshrl.u32 %v3147, 7
      %v3149 = vsub.s32 0, %v3148
      %v3150 = vrot.slane %v3145, %v3149
      %v3168 = vunpack.c.l.b16 %v3129
      %v3169 = vunpack.c.l.b16 %v3130
      %v3170 = vunpack.c.l.b16 %v3131
      %v3171 = vunpack.c.l.b16 %v3132
      %v3172 = vunpack.c.l.b16 %v3133
      %v3173 = vunpack.c.l.b16 %v3134
      %v3174 = vunpack.c.l.b16 %v3135
      %v3175 = vunpack.c.l.b16 %v3136
      %v3176 = vunpack.c.l.b16 %v3137
      %v3177 = vunpack.c.l.b16 %v3138
      %v3178 = vunpack.c.l.b16 %v3139
      %v3179 = vunpack.c.l.b16 %v3140
      %v3180 = vunpack.c.l.b16 %v3141
      %v3181 = vunpack.c.l.b16 %v3142
      %v3182 = vunpack.c.l.b16 %v3143
      %v3183 = vunpack.c.l.b16 %v3144
      %v3184 = vpack.c.b16 %v3169, %v3168
      %v3185 = vpack.c.b16 %v3171, %v3170
      %v3186 = vpack.c.b16 %v3173, %v3172
      %v3187 = vpack.c.b16 %v3175, %v3174
      %v3188 = vpack.c.b16 %v3177, %v3176
      %v3189 = vpack.c.b16 %v3179, %v3178
      %v3190 = vpack.c.b16 %v3181, %v3180
      %v3191 = vpack.c.b16 %v3183, %v3182
      %3200 = vmatprep.subr.bf16.mxu0 0
      %3201 = vmatpush1.bf16.msra.mxu0 %v3191
      %3202 = vmatprep.subr.bf16.mxu0 0
      %3203 = vmatpush1.bf16.msra.mxu0 %v3190
      %3204 = vmatprep.subr.bf16.mxu0 0
      %3205 = vmatpush1.bf16.msra.mxu0 %v3189
      %3206 = vmatprep.subr.bf16.mxu0 0
      %3207 = vmatpush1.bf16.msra.mxu0 %v3188
      %3208 = vmatprep.subr.bf16.mxu0 0
      %3209 = vmatpush1.bf16.msra.mxu0 %v3187
      %3210 = vmatprep.subr.bf16.mxu0 0
      %3211 = vmatpush1.bf16.msra.mxu0 %v3186
      %3212 = vmatprep.subr.bf16.mxu0 0
      %3213 = vmatpush1.bf16.msra.mxu0 %v3185
      %3214 = vmatprep.subr.bf16.mxu0 0
      %3215 = vmatpush1.bf16.msra.mxu0 %v3184
      %3216 = vmatprep.subr.bf16.mxu0 0
      %3217 = vmatpush2.bf16.msra.mxu0 0
      %3218 = vmatprep.subr.bf16.mxu0 0
      %3219 = vmatpush2.bf16.msra.mxu0 0
      %3220 = vmatprep.subr.bf16.mxu0 0
      %3221 = vmatpush2.bf16.msra.mxu0 0
      %3222 = vmatprep.subr.bf16.mxu0 0
      %3223 = vmatpush2.bf16.msra.mxu0 0
      %3224 = vmatprep.subr.bf16.mxu0 0
      %3225 = vmatpush2.bf16.msra.mxu0 0
      %3226 = vmatprep.subr.bf16.mxu0 0
      %3227 = vmatpush2.bf16.msra.mxu0 0
      %3228 = vmatprep.subr.bf16.mxu0 0
      %3229 = vmatpush2.bf16.msra.mxu0 0
      %3230 = vmatprep.subr.bf16.mxu0 0
      %3231 = vmatpush2.bf16.msra.mxu0 0
      %3232 = vmatprep.mubr.bf16.mxu0 0
      %3233 = vmatmul.mubr.bf16.gmra.mxu0 %v3128
      %v3234 = vpop.f32.mrf.mxu0
      %v3235 = vadd.f32 %v3150, %v3234
      %v3236 = vpop.f32.mrf.mxu0
      %v3237 = vpop.f32.mrf.mxu0
      %v3238 = vadd.f32 %v3150, %v3237
      %v3239 = vpop.f32.mrf.mxu0
      %3240 = vdwg.mxu0
      %v3241 = vmul.f32 %v3235, 1.702
      %v3242 = vmul.f32 %v3238, 1.702
      %v3243 = vxor.u32 %v3241, 2147483648
      %v3244 = vxor.u32 %v3242, 2147483648
      %v3245 = vmul.f32 %v3243, 1.442695
      %v3246 = vpow.pop %v3245
      %v3247 = vmul.f32 %v3244, 1.442695
      %v3248 = vpow.pop %v3247
      %v3249 = vadd.f32 %v3246, 1.0
      %v3250 = vadd.f32 %v3248, 1.0
      %v3251 = vrcp.pop %v3249
      %v3252 = vmul.f32 1.0, %v3251
      %v3253 = vrcp.pop %v3250
      %v3254 = vmul.f32 1.0, %v3253
      %v3255 = vmul.f32 %v3235, %v3252
      %v3256 = vmul.f32 %v3238, %v3254
      %v3257 = vpack.c.bf16 %v3256, %v3255
      %v3258 = vld [vmem:[%s641] sm:$0xf]
      %v3259 = vld [vmem:[%s641 + $0x4] sm:$0xf]
      %v3260 = vld [vmem:[%s641 + $0x8] sm:$0xf]
      %v3261 = vld [vmem:[%s641 + $0xc] sm:$0xf]
      %v3262 = vld [vmem:[%s641 + $0x10] sm:$0xf]
      %v3263 = vld [vmem:[%s641 + $0x14] sm:$0xf]
      %v3264 = vld [vmem:[%s641 + $0x18] sm:$0xf]
      %v3265 = vld [vmem:[%s641 + $0x1c] sm:$0xf]
      %v3266 = vld [vmem:[%s641 + $0x20] sm:$0xf]
      %v3267 = vld [vmem:[%s641 + $0x24] sm:$0xf]
      %v3268 = vld [vmem:[%s641 + $0x28] sm:$0xf]
      %v3269 = vld [vmem:[%s641 + $0x2c] sm:$0xf]
      %v3270 = vld [vmem:[%s641 + $0x30] sm:$0xf]
      %v3271 = vld [vmem:[%s641 + $0x34] sm:$0xf]
      %v3272 = vld [vmem:[%s641 + $0x38] sm:$0xf]
      %v3273 = vld [vmem:[%s641 + $0x3c] sm:$0xf]
      %v3274 = vld [vmem:[%s644] sm:$0x1]
      %v3276 = vlaneseq
      %v3277 = vshrl.u32 %v3276, 7
      %v3278 = vsub.s32 0, %v3277
      %v3279 = vrot.slane %v3274, %v3278
      %v3297 = vunpack.c.l.b16 %v3258
      %v3298 = vunpack.c.l.b16 %v3259
      %v3299 = vunpack.c.l.b16 %v3260
      %v3300 = vunpack.c.l.b16 %v3261
      %v3301 = vunpack.c.l.b16 %v3262
      %v3302 = vunpack.c.l.b16 %v3263
      %v3303 = vunpack.c.l.b16 %v3264
      %v3304 = vunpack.c.l.b16 %v3265
      %v3305 = vunpack.c.l.b16 %v3266
      %v3306 = vunpack.c.l.b16 %v3267
      %v3307 = vunpack.c.l.b16 %v3268
      %v3308 = vunpack.c.l.b16 %v3269
      %v3309 = vunpack.c.l.b16 %v3270
      %v3310 = vunpack.c.l.b16 %v3271
      %v3311 = vunpack.c.l.b16 %v3272
      %v3312 = vunpack.c.l.b16 %v3273
      %v3313 = vpack.c.b16 %v3298, %v3297
      %v3314 = vpack.c.b16 %v3300, %v3299
      %v3315 = vpack.c.b16 %v3302, %v3301
      %v3316 = vpack.c.b16 %v3304, %v3303
      %v3317 = vpack.c.b16 %v3306, %v3305
      %v3318 = vpack.c.b16 %v3308, %v3307
      %v3319 = vpack.c.b16 %v3310, %v3309
      %v3320 = vpack.c.b16 %v3312, %v3311
      %3329 = vmatprep.subr.bf16.mxu0 0
      %3330 = vmatpush1.bf16.msra.mxu0 %v3320
      %3331 = vmatprep.subr.bf16.mxu0 0
      %3332 = vmatpush1.bf16.msra.mxu0 %v3319
      %3333 = vmatprep.subr.bf16.mxu0 0
      %3334 = vmatpush1.bf16.msra.mxu0 %v3318
      %3335 = vmatprep.subr.bf16.mxu0 0
      %3336 = vmatpush1.bf16.msra.mxu0 %v3317
      %3337 = vmatprep.subr.bf16.mxu0 0
      %3338 = vmatpush1.bf16.msra.mxu0 %v3316
      %3339 = vmatprep.subr.bf16.mxu0 0
      %3340 = vmatpush1.bf16.msra.mxu0 %v3315
      %3341 = vmatprep.subr.bf16.mxu0 0
      %3342 = vmatpush1.bf16.msra.mxu0 %v3314
      %3343 = vmatprep.subr.bf16.mxu0 0
      %3344 = vmatpush1.bf16.msra.mxu0 %v3313
      %3345 = vmatprep.subr.bf16.mxu0 0
      %3346 = vmatpush2.bf16.msra.mxu0 0
      %3347 = vmatprep.subr.bf16.mxu0 0
      %3348 = vmatpush2.bf16.msra.mxu0 0
      %3349 = vmatprep.subr.bf16.mxu0 0
      %3350 = vmatpush2.bf16.msra.mxu0 0
      %3351 = vmatprep.subr.bf16.mxu0 0
      %3352 = vmatpush2.bf16.msra.mxu0 0
      %3353 = vmatprep.subr.bf16.mxu0 0
      %3354 = vmatpush2.bf16.msra.mxu0 0
      %3355 = vmatprep.subr.bf16.mxu0 0
      %3356 = vmatpush2.bf16.msra.mxu0 0
      %3357 = vmatprep.subr.bf16.mxu0 0
      %3358 = vmatpush2.bf16.msra.mxu0 0
      %3359 = vmatprep.subr.bf16.mxu0 0
      %3360 = vmatpush2.bf16.msra.mxu0 0
      %3361 = vmatprep.mubr.bf16.mxu0 0
      %3362 = vmatmul.mubr.bf16.gmra.mxu0 %v3257
      %v3363 = vpop.f32.mrf.mxu0
      %v3364 = vadd.f32 %v3279, %v3363
      %v3365 = vpop.f32.mrf.mxu0
      %v3366 = vpop.f32.mrf.mxu0
      %v3367 = vadd.f32 %v3279, %v3366
      %v3368 = vpop.f32.mrf.mxu0
      %3369 = vdwg.mxu0
      %v3370 = vadd.f32 %v3086, %v3364
      %v3371 = vadd.f32 %v3087, %v3367
      %3372 = vst [vmem:[#allocation2] sm:$0xff] %v3370
      %3373 = vst [vmem:[#allocation2 + $0x8] sm:$0xff] %v3371
      %p3374 = scmp.eq.s32.totalorder %s29, 1
      // Predicated region
      $region77: #{temporal_modelling.1} parent=71 // pred_check
        %p3375 = pneg %p3374
      $region78: #{temporal_modelling.1} parent=71 // pred_check_branch
        %3377 = sbr.rel (%p3375) target = $region80
      $region79: #{temporal_modelling.1} parent=71 // pred_region
        %3378 = vst [vmem:[%s649] sm:$0xff] %v3370
        %3379 = vst [vmem:[%s649 + $0x8] sm:$0xff] %v3371
      $region80: #{temporal_modelling.1} parent=71 // pred_fallthru
        _
      %s3380 = smul.u32 2, %s28
      %p3381 = scmp.lt.s32.totalorder %s3380, 3
      %s3382 = scalar_select %p3381, %s3380, 3
      %s3383 = smul.addr %s3382, 8
      %s3384 = scalar_lea.vmem %s13, %s3383
      // Predicated region
      $region81: #{temporal_modelling.1} parent=71 // pred_check
        %p3385 = pneg %p392
      $region82: #{temporal_modelling.1} parent=71 // pred_check_branch
        %3387 = sbr.rel (%p3385) target = $region84
      $region83: #{temporal_modelling.1} parent=71 // pred_region
        %s3388 = smul.u32 2, %s28
      $region84: #{temporal_modelling.1} parent=71 // pred_fallthru
        _
    $region72: #{temporal_modelling.1} parent=5 // pred_fallthru
      _
    %p3389 = scmp.le.s32.totalorder 2, %s19
    // Predicated region
    $region85: #{temporal_modelling.1} parent=5 // pred_check
      %p3390 = pneg %p3389
    $region86: #{temporal_modelling.1} parent=5 // pred_check_branch
      %3392 = sbr.rel (%p3390) target = $region88
    $region87: #{temporal_modelling.1} parent=5 // pred_region
      %s3393 = ssub.s32 %s19, 2
      // Predicated region
      $region89: #{temporal_modelling.1} parent=87 // pred_check
        %p3394 = pneg %p398
      $region90: #{temporal_modelling.1} parent=87 // pred_check_branch
        %3396 = sbr.rel (%p3394) target = $region92
      $region91: #{temporal_modelling.1} parent=87 // pred_region
        %s3397 = smul.u32 2, %s30
        %p3398 = scmp.lt.s32.totalorder %s3397, 3
        %s3399 = scalar_select %p3398, %s3397, 3
        %s3400 = smul.addr %s3399, 8
        %s3401 = scalar_lea.vmem %s13, %s3400
      $region92: #{temporal_modelling.1} parent=87 // pred_fallthru
        _
    $region88: #{temporal_modelling.1} parent=5 // pred_fallthru
      _
  $region6: #{temporal_modelling.1} parent=0 // loop_footer
    %s23 = sadd.s32 1, %s19
  $region7: #{temporal_modelling.1} parent=0 // loop_footer_branch
    %18 = sbr.rel target = $region3
  $region8: #{temporal_modelling.1} parent=0 // loop_exit
    _

</llo_original>
